<compile_context>
chip_gen: v7x
topology: tpu7x:2x2x1
jax: 0.10.0
libtpu: 0.0.40
codegen_flags: <defaults>
</compile_context>

<pallas_src>
import jax
import jax.numpy as jnp
from jax.experimental import pallas as pl
from jax.experimental.pallas import tpu as pltpu

MAX_LEN = 50
_LANE = 128
_SUB = 8


def _round_up(n, m):
    return ((n + m - 1) // m) * m


def _r2ncnn_kernel(x_ref, w1_ref, b1_ref, w2_ref, b2_ref, o_ref):
    """x:(tb,S*I)  w1:(S*I,S*H)  b1:(1,S*H)  w2:(S*H,H)  b2:(1,H)  o:(tb,H)."""
    # conv1 (+ bias + ReLU): one MXU matmul over the whole tile, f32 accumulation.
    h = jnp.dot(x_ref[...], w1_ref[...], preferred_element_type=jnp.float32)
    h = jnp.maximum(h + b1_ref[...], 0.0)
    # conv2 (+ bias + ReLU): single K = S*H matmul, f32 accumulation.
    out = jnp.dot(h.astype(w2_ref.dtype), w2_ref[...], preferred_element_type=jnp.float32)
    o_ref[...] = jnp.maximum(out + b2_ref[...], 0.0).astype(o_ref.dtype)


def prepare_params(conv1_w, conv1_b, conv2_w, conv2_b, compute_dtype=jnp.bfloat16):
    """One-time re-layout of the PyTorch Conv2d parameters (hoisted out of the hot path).

    conv1_w (H,1,1,I) -> block-diagonal W1 (S*I, S*H): block s is w1^T (I,H), so conv1
        over all S positions is a single matmul on the flattened (B, S*I) input.
    conv2_w (H,H,S,1) -> W2 (S*H, H) with rows ordered [s major, h_in minor] to match
        W1's output columns.
    Biases stay f32; weights are cast to compute_dtype (bf16 default: MXU-native,
    one-hot inputs are exact in bf16).
    """
    h_out, _, _, n_in = conv1_w.shape
    seq = conv2_w.shape[2]
    w1 = jnp.asarray(conv1_w, jnp.float32).reshape(h_out, n_in).T                   # (I, H)
    w1_big = jnp.kron(jnp.eye(seq, dtype=jnp.float32), w1).astype(compute_dtype)    # (S*I, S*H)
    b1_big = jnp.tile(jnp.asarray(conv1_b, jnp.float32), seq).reshape(1, seq * h_out)
    w2 = jnp.transpose(jnp.asarray(conv2_w, jnp.float32)[..., 0], (2, 1, 0))        # (S, H_in, H_out)
    w2_flat = w2.reshape(seq * h_out, h_out).astype(compute_dtype)                  # (S*H, H)
    b2 = jnp.asarray(conv2_b, jnp.float32).reshape(1, h_out)
    return w1_big, b1_big, w2_flat, b2


def _vmem_bytes(tb, si, sh, h, cd_bytes):
    """Conservative VMEM estimate: double-buffers every operand, counts the f32 hidden
    activations plus their compute-dtype copy, plus slack for internal scratch."""
    lane = lambda n: _round_up(n, _LANE)
    x_t = tb * lane(si) * cd_bytes
    w1 = _round_up(si, _SUB) * lane(sh) * cd_bytes
    w2 = _round_up(sh, _SUB) * lane(h) * cd_bytes
    b = _SUB * lane(sh) * 4 + _SUB * lane(h) * 4
    out = tb * lane(h) * 4
    h1 = tb * lane(sh) * (4 + cd_bytes)
    return 2 * (x_t + w1 + w2 + b + out) + h1 + (2 << 20)


def r2ncnn_forward(x, params, *, tile_b=256):
    """x: (B, MAX_LEN, n_input) dense (one-hot) input. params: from prepare_params.
    Returns (B, n_hidden) f32."""
    w1_big, b1_big, w2_flat, b2 = params
    B, S, I = x.shape
    H = w2_flat.shape[1]
    assert w1_big.shape == (S * I, S * H) and w2_flat.shape == (S * H, H), \
        "params do not match seq_len / n_input / n_hidden"
    cd = w1_big.dtype
    cd_bytes = jnp.dtype(cd).itemsize

    # --- batch tile: 16-aligned (bf16 sublane packing); if the whole batch would fit in
    # one tile, split into two grid steps so the "parallel" axis can feed both v7x TCs;
    # then shrink until the conservative VMEM estimate fits a v7x-safe budget.
    align = 16
    b_ceil = _round_up(B, align)
    tb = max(align, (min(int(tile_b), b_ceil) // align) * align)
    if tb >= b_ceil and b_ceil >= 2 * align:
        tb = _round_up(b_ceil // 2, align)
    budget = 40 * 1024 * 1024                       # headroom under v7x's 64 MiB physical VMEM
    while _vmem_bytes(tb, S * I, S * H, H, cd_bytes) > budget and tb > align:
        tb = max(align, _round_up(tb // 2, align))
    b_pad = _round_up(B, tb)
    nb = b_pad // tb
    vmem_limit = int(min(max(_vmem_bytes(tb, S * I, S * H, H, cd_bytes), 16 * 2**20),
                         48 * 2**20))

    # --- host-side prep (outside the kernel): lane-dense flatten + compute-dtype cast;
    # zero-pad tail batch rows (sliced off after the call).
    x2 = x.reshape(B, S * I).astype(cd)
    if b_pad != B:
        x2 = jnp.pad(x2, ((0, b_pad - B), (0, 0)))

    out = pl.pallas_call(
        _r2ncnn_kernel,
        out_shape=jax.ShapeDtypeStruct((b_pad, H), jnp.float32),
        grid_spec=pltpu.PrefetchScalarGridSpec(
            num_scalar_prefetch=0,
            grid=(nb,),
            in_specs=[
                # x is the only streamed operand (lane-dense). If its DMA ever becomes
                # exposed (e.g. f32 params on v5e), add pipeline_mode=pl.Buffered(3) here.
                pl.BlockSpec((tb, S * I), lambda i: (i, 0)),
                pl.BlockSpec((S * I, S * H), lambda i: (0, 0)),   # resident conv1 weight
                pl.BlockSpec((1, S * H), lambda i: (0, 0)),       # resident conv1 bias
                pl.BlockSpec((S * H, H), lambda i: (0, 0)),       # resident conv2 weight
                pl.BlockSpec((1, H), lambda i: (0, 0)),           # resident conv2 bias
            ],
            out_specs=pl.BlockSpec((tb, H), lambda i: (i, 0)),
        ),
        compiler_params=pltpu.CompilerParams(
            dimension_semantics=("parallel",),     # batch tiles shard across TCs (v7x megacore)
            vmem_limit_bytes=vmem_limit,
        ),
    )(x2, w1_big, b1_big, w2_flat, b2)
    return out[:B]


def reference_forward(x, conv1_w, conv1_b, conv2_w, conv2_b):
    """Pure-JAX f32 reference matching the PyTorch module."""
    B, S, I = x.shape
    H = conv1_w.shape[0]
    w1 = conv1_w.reshape(H, I)                                          # (H, I)
    h1 = jnp.maximum(jnp.einsum("bsi,hi->bsh", x, w1) + conv1_b, 0.0)   # conv1 + ReLU
    out = jnp.einsum("bsh,ghs->bg", h1, conv2_w[..., 0]) + conv2_b      # conv2
    return jnp.maximum(out, 0.0)


if __name__ == "__main__":
    n_input, n_hidden, batch = 16, 32, 4
    key = jax.random.PRNGKey(0)
    k_idx, k_w1, k_b1, k_w2, k_b2 = jax.random.split(key, 5)

    # One-hot encoded sequences (B, MAX_LEN, n_input), as the module name implies.
    idx = jax.random.randint(k_idx, (batch, MAX_LEN), 0, n_input)
    x = jax.nn.one_hot(idx, n_input, dtype=jnp.float32)

    # PyTorch Conv2d default-style init: U(-1/sqrt(fan_in), +1/sqrt(fan_in)).
    bound1 = 1.0 / jnp.sqrt(1.0 * 1 * 1 * n_input)
    conv1_w = jax.random.uniform(k_w1, (n_hidden, 1, 1, n_input), jnp.float32, -bound1, bound1)
    conv1_b = jax.random.uniform(k_b1, (n_hidden,), jnp.float32, -bound1, bound1)
    bound2 = 1.0 / jnp.sqrt(1.0 * n_hidden * MAX_LEN * 1)
    conv2_w = jax.random.uniform(k_w2, (n_hidden, n_hidden, MAX_LEN, 1), jnp.float32, -bound2, bound2)
    conv2_b = jax.random.uniform(k_b2, (n_hidden,), jnp.float32, -bound2, bound2)

    ref = reference_forward(x, conv1_w, conv1_b, conv2_w, conv2_b)
    fwd = jax.jit(r2ncnn_forward)

    # Exact-math check with f32 parameters.
    params_f32 = prepare_params(conv1_w, conv1_b, conv2_w, conv2_b, compute_dtype=jnp.float32)
    out_f32 = jax.block_until_ready(fwd(x, params_f32))
    assert out_f32.shape == (batch, n_hidden)
    assert jnp.allclose(out_f32, ref, atol=5e-3, rtol=5e-3), "f32 mismatch vs reference"

    # Default bf16 compute path (production config; accumulation stays f32).
    params = prepare_params(conv1_w, conv1_b, conv2_w, conv2_b)
    out = jax.block_until_ready(fwd(x, params))
    assert out.shape == (batch, n_hidden)
    assert jnp.allclose(out, ref, atol=2e-2, rtol=2e-2), "bf16 mismatch vs reference"

    print("KERNEL_OK")
</pallas_src>

<mosaic_0001>
module attributes {stable_mosaic.version = 11 : i64} {
  func.func @_r2ncnn_kernel(%arg0: i32, %arg1: memref<16x800xf32, #tpu.memory_space<vmem>>, %arg2: memref<800x1600xf32, #tpu.memory_space<vmem>>, %arg3: memref<1x1600xf32, #tpu.memory_space<vmem>>, %arg4: memref<1600x32xf32, #tpu.memory_space<vmem>>, %arg5: memref<1x32xf32, #tpu.memory_space<vmem>>, %arg6: memref<16x32xf32, #tpu.memory_space<vmem>>) attributes {dimension_semantics = [#tpu.dimension_semantics<parallel>], iteration_bounds = array<i64: 1>, scalar_prefetch = 0 : i64, scratch_operands = 0 : i64, tpu.core_type = #tpu.core_type<tc>, window_params = [{transform_indices = @transform_0, window_bounds = array<i64: 16, 800>}, {pipeline_mode = #tpu.pipeline_mode<synchronous>, transform_indices = @transform_1, window_bounds = array<i64: 800, 1600>}, {pipeline_mode = #tpu.pipeline_mode<synchronous>, transform_indices = @transform_2, window_bounds = array<i64: 1, 1600>}, {pipeline_mode = #tpu.pipeline_mode<synchronous>, transform_indices = @transform_3, window_bounds = array<i64: 1600, 32>}, {pipeline_mode = #tpu.pipeline_mode<synchronous>, transform_indices = @transform_4, window_bounds = array<i64: 1, 32>}, {transform_indices = @transform_5, window_bounds = array<i64: 16, 32>}]} {
    %c0 = arith.constant 0 : index
    %c0_0 = arith.constant 0 : index
    %0 = vector.load %arg1[%c0, %c0_0] : memref<16x800xf32, #tpu.memory_space<vmem>>, vector<16x800xf32>
    %c0_1 = arith.constant 0 : index
    %c0_2 = arith.constant 0 : index
    %1 = vector.load %arg2[%c0_1, %c0_2] : memref<800x1600xf32, #tpu.memory_space<vmem>>, vector<800x1600xf32>
    %cst = arith.constant dense<0.000000e+00> : vector<16x1600xf32>
    %2 = tpu.matmul %0, %1, %cst {dimension_numbers = #tpu.dot_dimension_numbers<[1], [0], [0], [1], [0, 0, 1, 1], [], []>} : vector<16x800xf32>, vector<800x1600xf32>, vector<16x1600xf32> -> vector<16x1600xf32>
    %c0_3 = arith.constant 0 : index
    %c0_4 = arith.constant 0 : index
    %3 = vector.load %arg3[%c0_3, %c0_4] : memref<1x1600xf32, #tpu.memory_space<vmem>>, vector<1x1600xf32>
    %4 = vector.broadcast %3 : vector<1x1600xf32> to vector<16x1600xf32>
    %5 = arith.addf %2, %4 : vector<16x1600xf32>
    %cst_5 = arith.constant 0.000000e+00 : f32
    %6 = vector.broadcast %cst_5 : f32 to vector<16x1600xf32>
    %7 = arith.maximumf %5, %6 : vector<16x1600xf32>
    %c0_6 = arith.constant 0 : index
    %c0_7 = arith.constant 0 : index
    %8 = vector.load %arg4[%c0_6, %c0_7] : memref<1600x32xf32, #tpu.memory_space<vmem>>, vector<1600x32xf32>
    %cst_8 = arith.constant dense<0.000000e+00> : vector<16x32xf32>
    %9 = tpu.matmul %7, %8, %cst_8 {dimension_numbers = #tpu.dot_dimension_numbers<[1], [0], [0], [1], [0, 0, 1, 1], [], []>} : vector<16x1600xf32>, vector<1600x32xf32>, vector<16x32xf32> -> vector<16x32xf32>
    %c0_9 = arith.constant 0 : index
    %c0_10 = arith.constant 0 : index
    %10 = vector.load %arg5[%c0_9, %c0_10] : memref<1x32xf32, #tpu.memory_space<vmem>>, vector<1x32xf32>
    %11 = vector.broadcast %10 : vector<1x32xf32> to vector<16x32xf32>
    %12 = arith.addf %9, %11 : vector<16x32xf32>
    %cst_11 = arith.constant 0.000000e+00 : f32
    %13 = vector.broadcast %cst_11 : f32 to vector<16x32xf32>
    %14 = arith.maximumf %12, %13 : vector<16x32xf32>
    %c0_12 = arith.constant 0 : index
    %c0_13 = arith.constant 0 : index
    %15 = vector.load %arg6[%c0_12, %c0_13] : memref<16x32xf32, #tpu.memory_space<vmem>>, vector<16x32xf32>
    tpu.vector_store %arg6[%c0_12, %c0_13], %14 {strides = array<i32>} : memref<16x32xf32, #tpu.memory_space<vmem>>, vector<16x32xf32>,
    return
  }
  func.func @transform_0(%arg0: i32) -> (i32, i32) {
    %c0_i32 = arith.constant 0 : i32
    %c0_i32_0 = arith.constant 0 : i32
    return %arg0, %c0_i32 : i32, i32
  }
  func.func @transform_1(%arg0: i32) -> (i32, i32) {
    %c0_i32 = arith.constant 0 : i32
    %c0_i32_0 = arith.constant 0 : i32
    %c0_i32_1 = arith.constant 0 : i32
    return %c0_i32, %c0_i32_0 : i32, i32
  }
  func.func @transform_2(%arg0: i32) -> (i32, i32) {
    %c0_i32 = arith.constant 0 : i32
    %c0_i32_0 = arith.constant 0 : i32
    %c0_i32_1 = arith.constant 0 : i32
    return %c0_i32, %c0_i32_0 : i32, i32
  }
  func.func @transform_3(%arg0: i32) -> (i32, i32) {
    %c0_i32 = arith.constant 0 : i32
    %c0_i32_0 = arith.constant 0 : i32
    %c0_i32_1 = arith.constant 0 : i32
    return %c0_i32, %c0_i32_0 : i32, i32
  }
  func.func @transform_4(%arg0: i32) -> (i32, i32) {
    %c0_i32 = arith.constant 0 : i32
    %c0_i32_0 = arith.constant 0 : i32
    %c0_i32_1 = arith.constant 0 : i32
    return %c0_i32, %c0_i32_0 : i32, i32
  }
  func.func @transform_5(%arg0: i32) -> (i32, i32) {
    %c0_i32 = arith.constant 0 : i32
    %c0_i32_0 = arith.constant 0 : i32
    return %arg0, %c0_i32 : i32, i32
  }
}

</mosaic_0001>

<llo_original>
// kernel: r2ncnn_forward.1
$region0: #{r2ncnn_forward.1}
  #allocation0 [shape = 'u32[]', space=smem, size = 0x4, offset = 0x4, fixed_abs, tag = 'smem constant byte address 0x4 - core index']
  #allocation1 [shape = 'u32[144,128]{1,0:T(1,128)}', space=vmem, size = 0x12000, scoped, tag = 'internal scratch']
  %s0 = inlined_call_operand.vmem [shape: f32[16,800], index: 0, kind: input, shape index: {}]
  %s1 = inlined_call_operand.hbm [shape: f32[800,1600], index: 1, kind: input, shape index: {}]
  %s2 = inlined_call_operand.hbm [shape: f32[1,1600], index: 2, kind: input, shape index: {}]
  %s3 = inlined_call_operand.vmem [shape: f32[1600,32], index: 3, kind: input, shape index: {}]
  %s4 = inlined_call_operand.hbm [shape: f32[1,32], index: 4, kind: input, shape index: {}]
  %s5 = inlined_call_operand.vmem [shape: f32[16,32], index: 5, kind: output, shape index: {}]
  %s6 = sld [smem:[#allocation0]]
  $region42: #{r2ncnn_forward.1} parent=0
    _
  %s8 = ssub.s32 1, %s6
  %s9 = scalar_select 0, %s8, %s6
  $region1: #{r2ncnn_forward.1} parent=0
    #allocation2 [shape = 'u8[5324800]{0}', space=vmem, size = 0x514000, scoped, tag = 'input window, operand 1, single buffered']
    #allocation3 [shape = 's32[1]{0}', space=sflag, size = 0x4, scoped, tag = 'scoped memory for r2ncnn_forward.1']
    #allocation4 [shape = 'u8[6656]{0}', space=vmem, size = 0x1c00, scoped, tag = 'input window, operand 2, single buffered']
    #allocation5 [shape = 's32[1]{0}', space=sflag, size = 0x4, scoped, tag = 'scoped memory for r2ncnn_forward.1']
    #allocation6 [shape = 'u8[512]{0}', space=vmem, size = 0x400, scoped, tag = 'input window, operand 4, single buffered']
    %10 = vsyncpa [#allocation3], 0
    %11 = vsyncpa [#allocation5], 0
    // Predicated region
    $region2: #{r2ncnn_forward.1} parent=1 // pred_check
      _
    $region3: #{r2ncnn_forward.1} parent=1 // pred_check_branch
      %13 = sbr.rel (0) target = $region5
    $region4: #{r2ncnn_forward.1} parent=1 // pred_region
      _
    $region5: #{r2ncnn_forward.1} parent=1 // pred_fallthru
      _
    // Predicated region
    $region6: #{r2ncnn_forward.1} parent=1 // pred_check
      _
    $region7: #{r2ncnn_forward.1} parent=1 // pred_check_branch
      %15 = sbr.rel (0) target = $region9
    $region8: #{r2ncnn_forward.1} parent=1 // pred_region
      %s17 = ssub.s32 166400, 166400
      %18 = vsyncadd [#allocation3], %s17
      %s19 = sshll.u32 [#allocation2], 4
      %s20 = int_to_ptr.vmem [resolvable:$true] %s19
      %25 = dma.hbm_to_vmem [thread:$0]  %s1, 166400, %s20, [#allocation3], 1664, 1664, 104
    $region9: #{r2ncnn_forward.1} parent=1 // pred_fallthru
      _
    // Predicated region
    $region10: #{r2ncnn_forward.1} parent=1 // pred_check
      _
    $region11: #{r2ncnn_forward.1} parent=1 // pred_check_branch
      %27 = sbr.rel (0) target = $region13
    $region12: #{r2ncnn_forward.1} parent=1 // pred_region
      %s29 = ssub.s32 208, 208
      %30 = vsyncadd [#allocation5], %s29
      %s32 = sshll.u32 [#allocation4], 4
      %s33 = int_to_ptr.vmem [resolvable:$true] %s32
      %35 = dma.hbm_to_vmem [thread:$0]  %s2, 208, %s33, [#allocation5]
    $region13: #{r2ncnn_forward.1} parent=1 // pred_fallthru
      _
    // Predicated region
    $region14: #{r2ncnn_forward.1} parent=1 // pred_check
      _
    $region15: #{r2ncnn_forward.1} parent=1 // pred_check_branch
      %37 = sbr.rel (0) target = $region17
    $region16: #{r2ncnn_forward.1} parent=1 // pred_region
      _
    $region17: #{r2ncnn_forward.1} parent=1 // pred_fallthru
      _
    // Predicated region
    $region18: #{r2ncnn_forward.1} parent=1 // pred_check
      _
    $region19: #{r2ncnn_forward.1} parent=1 // pred_check_branch
      %39 = sbr.rel (0) target = $region21
    $region20: #{r2ncnn_forward.1} parent=1 // pred_region
      %s41 = ssub.s32 16, 16
      %42 = vsyncadd [#allocation5], %s41
      %s44 = sshll.u32 [#allocation6], 4
      %s45 = int_to_ptr.vmem [resolvable:$true] %s44
      %47 = dma.hbm_to_vmem [thread:$0]  %s4, 16, %s45, [#allocation5]
    $region21: #{r2ncnn_forward.1} parent=1 // pred_fallthru
      _
    // Predicated region
    $region22: #{r2ncnn_forward.1} parent=1 // pred_check
      _
    $region23: #{r2ncnn_forward.1} parent=1 // pred_check_branch
      %49 = sbr.rel (0) target = $region25
    $region24: #{r2ncnn_forward.1} parent=1 // pred_region
      %50 = dma.done [#allocation3], 166400
    $region25: #{r2ncnn_forward.1} parent=1 // pred_fallthru
      _
    // Predicated region
    $region26: #{r2ncnn_forward.1} parent=1 // pred_check
      _
    $region27: #{r2ncnn_forward.1} parent=1 // pred_check_branch
      %52 = sbr.rel (0) target = $region29
    $region28: #{r2ncnn_forward.1} parent=1 // pred_region
      %53 = dma.done [#allocation5], 208
    $region29: #{r2ncnn_forward.1} parent=1 // pred_fallthru
      _
    // Predicated region
    $region30: #{r2ncnn_forward.1} parent=1 // pred_check
      _
    $region31: #{r2ncnn_forward.1} parent=1 // pred_check_branch
      %55 = sbr.rel (0) target = $region33
    $region32: #{r2ncnn_forward.1} parent=1 // pred_region
      %56 = dma.done [#allocation5], 16
    $region33: #{r2ncnn_forward.1} parent=1 // pred_fallthru
      _
    %v57 = vld [vmem:[%s0] sm:$0xff]
    %v58 = vld [vmem:[%s0 + $0x8] sm:$0xff]
    %v59 = vld [vmem:[%s0 + $0x10] sm:$0xff]
    %v60 = vld [vmem:[%s0 + $0x18] sm:$0xff]
    %v61 = vld [vmem:[%s0 + $0x20] sm:$0xff]
    %v62 = vld [vmem:[%s0 + $0x28] sm:$0xff]
    %v63 = vld [vmem:[%s0 + $0x30] sm:$0xff]
    %v64 = vld [vmem:[%s0 + $0x38] sm:$0xff]
    %v65 = vld [vmem:[%s0 + $0x40] sm:$0xff]
    %v66 = vld [vmem:[%s0 + $0x48] sm:$0xff]
    %v67 = vld [vmem:[%s0 + $0x50] sm:$0xff]
    %v68 = vld [vmem:[%s0 + $0x58] sm:$0xff]
    %v69 = vld [vmem:[%s0 + $0x60] sm:$0xff]
    %v70 = vld [vmem:[%s0 + $0x68] sm:$0xff]
    %v71 = vld [vmem:[#allocation2] sm:$0xff]
    %v72 = vld [vmem:[#allocation2 + $0x8] sm:$0xff]
    %v73 = vld [vmem:[#allocation2 + $0x10] sm:$0xff]
    %v74 = vld [vmem:[#allocation2 + $0x18] sm:$0xff]
    %v75 = vld [vmem:[#allocation2 + $0x20] sm:$0xff]
    %v76 = vld [vmem:[#allocation2 + $0x28] sm:$0xff]
    %v77 = vld [vmem:[#allocation2 + $0x30] sm:$0xff]
    %v78 = vld [vmem:[#allocation2 + $0x38] sm:$0xff]
    %v79 = vld [vmem:[#allocation2 + $0x40] sm:$0xff]
    %v80 = vld [vmem:[#allocation2 + $0x48] sm:$0xff]
    %v81 = vld [vmem:[#allocation2 + $0x50] sm:$0xff]
    %v82 = vld [vmem:[#allocation2 + $0x58] sm:$0xff]
    %v83 = vld [vmem:[#allocation2 + $0x60] sm:$0xff]
    %v84 = vld [vmem:[#allocation2 + $0x68] sm:$0xff]
    %v85 = vld [vmem:[#allocation2 + $0x70] sm:$0xff]
    %v86 = vld [vmem:[#allocation2 + $0x78] sm:$0xff]
    %v87 = vld [vmem:[#allocation2 + $0x80] sm:$0xff]
    %v88 = vld [vmem:[#allocation2 + $0x88] sm:$0xff]
    %v89 = vld [vmem:[#allocation2 + $0x90] sm:$0xff]
    %v90 = vld [vmem:[#allocation2 + $0x98] sm:$0xff]
    %v91 = vld [vmem:[#allocation2 + $0xa0] sm:$0xff]
    %v92 = vld [vmem:[#allocation2 + $0xa8] sm:$0xff]
    %v93 = vld [vmem:[#allocation2 + $0xb0] sm:$0xff]
    %v94 = vld [vmem:[#allocation2 + $0xb8] sm:$0xff]
    %v95 = vld [vmem:[#allocation2 + $0xc0] sm:$0xff]
    %v96 = vld [vmem:[#allocation2 + $0xc8] sm:$0xff]
    %v97 = vld [vmem:[#allocation2 + $0xd0] sm:$0xff]
    %v98 = vld [vmem:[#allocation2 + $0xd8] sm:$0xff]
    %v99 = vld [vmem:[#allocation2 + $0xe0] sm:$0xff]
    %v100 = vld [vmem:[#allocation2 + $0xe8] sm:$0xff]
    %v101 = vld [vmem:[#allocation2 + $0xf0] sm:$0xff]
    %v102 = vld [vmem:[#allocation2 + $0xf8] sm:$0xff]
    %v103 = vld [vmem:[#allocation2 + $0x100] sm:$0xff]
    %v104 = vld [vmem:[#allocation2 + $0x108] sm:$0xff]
    %v105 = vld [vmem:[#allocation2 + $0x110] sm:$0xff]
    %v106 = vld [vmem:[#allocation2 + $0x118] sm:$0xff]
    %v107 = vld [vmem:[#allocation2 + $0x120] sm:$0xff]
    %v108 = vld [vmem:[#allocation2 + $0x128] sm:$0xff]
    %v109 = vld [vmem:[#allocation2 + $0x130] sm:$0xff]
    %v110 = vld [vmem:[#allocation2 + $0x138] sm:$0xff]
    %v111 = vld [vmem:[#allocation2 + $0x140] sm:$0xff]
    %v112 = vld [vmem:[#allocation2 + $0x148] sm:$0xff]
    %v113 = vld [vmem:[#allocation2 + $0x150] sm:$0xff]
    %v114 = vld [vmem:[#allocation2 + $0x158] sm:$0xff]
    %v115 = vld [vmem:[#allocation2 + $0x160] sm:$0xff]
    %v116 = vld [vmem:[#allocation2 + $0x168] sm:$0xff]
    %v117 = vld [vmem:[#allocation2 + $0x170] sm:$0xff]
    %v118 = vld [vmem:[#allocation2 + $0x178] sm:$0xff]
    %v119 = vld [vmem:[#allocation2 + $0x180] sm:$0xff]
    %v120 = vld [vmem:[#allocation2 + $0x188] sm:$0xff]
    %v121 = vld [vmem:[#allocation2 + $0x190] sm:$0xff]
    %v122 = vld [vmem:[#allocation2 + $0x198] sm:$0xff]
    %v123 = vld [vmem:[#allocation2 + $0x1a0] sm:$0xff]
    %v124 = vld [vmem:[#allocation2 + $0x1a8] sm:$0xff]
    %v125 = vld [vmem:[#allocation2 + $0x1b0] sm:$0xff]
    %v126 = vld [vmem:[#allocation2 + $0x1b8] sm:$0xff]
    %v127 = vld [vmem:[#allocation2 + $0x1c0] sm:$0xff]
    %v128 = vld [vmem:[#allocation2 + $0x1c8] sm:$0xff]
    %v129 = vld [vmem:[#allocation2 + $0x1d0] sm:$0xff]
    %v130 = vld [vmem:[#allocation2 + $0x1d8] sm:$0xff]
    %v131 = vld [vmem:[#allocation2 + $0x1e0] sm:$0xff]
    %v132 = vld [vmem:[#allocation2 + $0x1e8] sm:$0xff]
    %v133 = vld [vmem:[#allocation2 + $0x1f0] sm:$0xff]
    %v134 = vld [vmem:[#allocation2 + $0x1f8] sm:$0xff]
    %v135 = vld [vmem:[#allocation2 + $0x200] sm:$0xff]
    %v136 = vld [vmem:[#allocation2 + $0x208] sm:$0xff]
    %v137 = vld [vmem:[#allocation2 + $0x210] sm:$0xff]
    %v138 = vld [vmem:[#allocation2 + $0x218] sm:$0xff]
    %v139 = vld [vmem:[#allocation2 + $0x220] sm:$0xff]
    %v140 = vld [vmem:[#allocation2 + $0x228] sm:$0xff]
    %v141 = vld [vmem:[#allocation2 + $0x230] sm:$0xff]
    %v142 = vld [vmem:[#allocation2 + $0x238] sm:$0xff]
    %v143 = vld [vmem:[#allocation2 + $0x240] sm:$0xff]
    %v144 = vld [vmem:[#allocation2 + $0x248] sm:$0xff]
    %v145 = vld [vmem:[#allocation2 + $0x250] sm:$0xff]
    %v146 = vld [vmem:[#allocation2 + $0x258] sm:$0xff]
    %v147 = vld [vmem:[#allocation2 + $0x260] sm:$0xff]
    %v148 = vld [vmem:[#allocation2 + $0x268] sm:$0xff]
    %v149 = vld [vmem:[#allocation2 + $0x270] sm:$0xff]
    %v150 = vld [vmem:[#allocation2 + $0x278] sm:$0xff]
    %v151 = vld [vmem:[#allocation2 + $0x280] sm:$0xff]
    %v152 = vld [vmem:[#allocation2 + $0x288] sm:$0xff]
    %v153 = vld [vmem:[#allocation2 + $0x290] sm:$0xff]
    %v154 = vld [vmem:[#allocation2 + $0x298] sm:$0xff]
    %v155 = vld [vmem:[#allocation2 + $0x2a0] sm:$0xff]
    %v156 = vld [vmem:[#allocation2 + $0x2a8] sm:$0xff]
    %v157 = vld [vmem:[#allocation2 + $0x2b0] sm:$0xff]
    %v158 = vld [vmem:[#allocation2 + $0x2b8] sm:$0xff]
    %v159 = vld [vmem:[#allocation2 + $0x2c0] sm:$0xff]
    %v160 = vld [vmem:[#allocation2 + $0x2c8] sm:$0xff]
    %v161 = vld [vmem:[#allocation2 + $0x2d0] sm:$0xff]
    %v162 = vld [vmem:[#allocation2 + $0x2d8] sm:$0xff]
    %v163 = vld [vmem:[#allocation2 + $0x2e0] sm:$0xff]
    %v164 = vld [vmem:[#allocation2 + $0x2e8] sm:$0xff]
    %v165 = vld [vmem:[#allocation2 + $0x2f0] sm:$0xff]
    %v166 = vld [vmem:[#allocation2 + $0x2f8] sm:$0xff]
    %v167 = vld [vmem:[#allocation2 + $0x300] sm:$0xff]
    %v168 = vld [vmem:[#allocation2 + $0x308] sm:$0xff]
    %v169 = vld [vmem:[#allocation2 + $0x310] sm:$0xff]
    %v170 = vld [vmem:[#allocation2 + $0x318] sm:$0xff]
    %v171 = vld [vmem:[#allocation2 + $0x320] sm:$0xff]
    %v172 = vld [vmem:[#allocation2 + $0x328] sm:$0xff]
    %v173 = vld [vmem:[#allocation2 + $0x330] sm:$0xff]
    %v174 = vld [vmem:[#allocation2 + $0x338] sm:$0xff]
    %v175 = vld [vmem:[#allocation2 + $0x340] sm:$0xff]
    %v176 = vld [vmem:[#allocation2 + $0x348] sm:$0xff]
    %v177 = vld [vmem:[#allocation2 + $0x350] sm:$0xff]
    %v178 = vld [vmem:[#allocation2 + $0x358] sm:$0xff]
    %v179 = vld [vmem:[#allocation2 + $0x360] sm:$0xff]
    %v180 = vld [vmem:[#allocation2 + $0x368] sm:$0xff]
    %v181 = vld [vmem:[#allocation2 + $0x370] sm:$0xff]
    %v182 = vld [vmem:[#allocation2 + $0x378] sm:$0xff]
    %v183 = vld [vmem:[#allocation2 + $0x380] sm:$0xff]
    %v184 = vld [vmem:[#allocation2 + $0x388] sm:$0xff]
    %v185 = vld [vmem:[#allocation2 + $0x390] sm:$0xff]
    %v186 = vld [vmem:[#allocation2 + $0x398] sm:$0xff]
    %v187 = vld [vmem:[#allocation2 + $0x3a0] sm:$0xff]
    %v188 = vld [vmem:[#allocation2 + $0x3a8] sm:$0xff]
    %v189 = vld [vmem:[#allocation2 + $0x3b0] sm:$0xff]
    %v190 = vld [vmem:[#allocation2 + $0x3b8] sm:$0xff]
    %v191 = vld [vmem:[#allocation2 + $0x3c0] sm:$0xff]
    %v192 = vld [vmem:[#allocation2 + $0x3c8] sm:$0xff]
    %v193 = vld [vmem:[#allocation2 + $0x3d0] sm:$0xff]
    %v194 = vld [vmem:[#allocation2 + $0x3d8] sm:$0xff]
    %v195 = vld [vmem:[#allocation2 + $0x3e0] sm:$0xff]
    %v196 = vld [vmem:[#allocation2 + $0x3e8] sm:$0xff]
    %v197 = vld [vmem:[#allocation2 + $0x3f0] sm:$0xff]
    %v198 = vld [vmem:[#allocation2 + $0x3f8] sm:$0xff]
    %v199 = vld [vmem:[#allocation2 + $0x400] sm:$0xff]
    %v200 = vld [vmem:[#allocation2 + $0x408] sm:$0xff]
    %v201 = vld [vmem:[#allocation2 + $0x410] sm:$0xff]
    %v202 = vld [vmem:[#allocation2 + $0x418] sm:$0xff]
    %v203 = vld [vmem:[#allocation2 + $0x420] sm:$0xff]
    %v204 = vld [vmem:[#allocation2 + $0x428] sm:$0xff]
    %v205 = vld [vmem:[#allocation2 + $0x430] sm:$0xff]
    %v206 = vld [vmem:[#allocation2 + $0x438] sm:$0xff]
    %v207 = vld [vmem:[#allocation2 + $0x440] sm:$0xff]
    %v208 = vld [vmem:[#allocation2 + $0x448] sm:$0xff]
    %v209 = vld [vmem:[#allocation2 + $0x450] sm:$0xff]
    %v210 = vld [vmem:[#allocation2 + $0x458] sm:$0xff]
    %v211 = vld [vmem:[#allocation2 + $0x460] sm:$0xff]
    %v212 = vld [vmem:[#allocation2 + $0x468] sm:$0xff]
    %v213 = vld [vmem:[#allocation2 + $0x470] sm:$0xff]
    %v214 = vld [vmem:[#allocation2 + $0x478] sm:$0xff]
    %v215 = vld [vmem:[#allocation2 + $0x480] sm:$0xff]
    %v216 = vld [vmem:[#allocation2 + $0x488] sm:$0xff]
    %v217 = vld [vmem:[#allocation2 + $0x490] sm:$0xff]
    %v218 = vld [vmem:[#allocation2 + $0x498] sm:$0xff]
    %v219 = vld [vmem:[#allocation2 + $0x4a0] sm:$0xff]
    %v220 = vld [vmem:[#allocation2 + $0x4a8] sm:$0xff]
    %v221 = vld [vmem:[#allocation2 + $0x4b0] sm:$0xff]
    %v222 = vld [vmem:[#allocation2 + $0x4b8] sm:$0xff]
    %v223 = vld [vmem:[#allocation2 + $0x4c0] sm:$0xff]
    %v224 = vld [vmem:[#allocation2 + $0x4c8] sm:$0xff]
    %v225 = vld [vmem:[#allocation2 + $0x4d0] sm:$0xff]
    %v226 = vld [vmem:[#allocation2 + $0x4d8] sm:$0xff]
    %v227 = vld [vmem:[#allocation2 + $0x4e0] sm:$0xff]
    %v228 = vld [vmem:[#allocation2 + $0x4e8] sm:$0xff]
    %v229 = vld [vmem:[#allocation2 + $0x4f0] sm:$0xff]
    %v230 = vld [vmem:[#allocation2 + $0x4f8] sm:$0xff]
    %v231 = vld [vmem:[#allocation2 + $0x500] sm:$0xff]
    %v232 = vld [vmem:[#allocation2 + $0x508] sm:$0xff]
    %v233 = vld [vmem:[#allocation2 + $0x510] sm:$0xff]
    %v234 = vld [vmem:[#allocation2 + $0x518] sm:$0xff]
    %v235 = vld [vmem:[#allocation2 + $0x520] sm:$0xff]
    %v236 = vld [vmem:[#allocation2 + $0x528] sm:$0xff]
    %v237 = vld [vmem:[#allocation2 + $0x530] sm:$0xff]
    %v238 = vld [vmem:[#allocation2 + $0x538] sm:$0xff]
    %v239 = vld [vmem:[#allocation2 + $0x540] sm:$0xff]
    %v240 = vld [vmem:[#allocation2 + $0x548] sm:$0xff]
    %v241 = vld [vmem:[#allocation2 + $0x550] sm:$0xff]
    %v242 = vld [vmem:[#allocation2 + $0x558] sm:$0xff]
    %v243 = vld [vmem:[#allocation2 + $0x560] sm:$0xff]
    %v244 = vld [vmem:[#allocation2 + $0x568] sm:$0xff]
    %v245 = vld [vmem:[#allocation2 + $0x570] sm:$0xff]
    %v246 = vld [vmem:[#allocation2 + $0x578] sm:$0xff]
    %v247 = vld [vmem:[#allocation2 + $0x580] sm:$0xff]
    %v248 = vld [vmem:[#allocation2 + $0x588] sm:$0xff]
    %v249 = vld [vmem:[#allocation2 + $0x590] sm:$0xff]
    %v250 = vld [vmem:[#allocation2 + $0x598] sm:$0xff]
    %v251 = vld [vmem:[#allocation2 + $0x5a0] sm:$0xff]
    %v252 = vld [vmem:[#allocation2 + $0x5a8] sm:$0xff]
    %v253 = vld [vmem:[#allocation2 + $0x5b0] sm:$0xff]
    %v254 = vld [vmem:[#allocation2 + $0x5b8] sm:$0xff]
    %v255 = vld [vmem:[#allocation2 + $0x5c0] sm:$0xff]
    %v256 = vld [vmem:[#allocation2 + $0x5c8] sm:$0xff]
    %v257 = vld [vmem:[#allocation2 + $0x5d0] sm:$0xff]
    %v258 = vld [vmem:[#allocation2 + $0x5d8] sm:$0xff]
    %v259 = vld [vmem:[#allocation2 + $0x5e0] sm:$0xff]
    %v260 = vld [vmem:[#allocation2 + $0x5e8] sm:$0xff]
    %v261 = vld [vmem:[#allocation2 + $0x5f0] sm:$0xff]
    %v262 = vld [vmem:[#allocation2 + $0x5f8] sm:$0xff]
    %v263 = vld [vmem:[#allocation2 + $0x600] sm:$0xff]
    %v264 = vld [vmem:[#allocation2 + $0x608] sm:$0xff]
    %v265 = vld [vmem:[#allocation2 + $0x610] sm:$0xff]
    %v266 = vld [vmem:[#allocation2 + $0x618] sm:$0xff]
    %v267 = vld [vmem:[#allocation2 + $0x620] sm:$0xff]
    %v268 = vld [vmem:[#allocation2 + $0x628] sm:$0xff]
    %v269 = vld [vmem:[#allocation2 + $0x630] sm:$0xff]
    %v270 = vld [vmem:[#allocation2 + $0x638] sm:$0xff]
    %v271 = vld [vmem:[#allocation2 + $0x640] sm:$0xff]
    %v272 = vld [vmem:[#allocation2 + $0x648] sm:$0xff]
    %v273 = vld [vmem:[#allocation2 + $0x650] sm:$0xff]
    %v274 = vld [vmem:[#allocation2 + $0x658] sm:$0xff]
    %v275 = vld [vmem:[#allocation2 + $0x660] sm:$0xff]
    %v276 = vld [vmem:[#allocation2 + $0x668] sm:$0xff]
    %v277 = vld [vmem:[#allocation2 + $0x670] sm:$0xff]
    %v278 = vld [vmem:[#allocation2 + $0x678] sm:$0xff]
    %v279 = vld [vmem:[#allocation2 + $0x680] sm:$0xff]
    %v280 = vld [vmem:[#allocation2 + $0x688] sm:$0xff]
    %v281 = vld [vmem:[#allocation2 + $0x690] sm:$0xff]
    %v282 = vld [vmem:[#allocation2 + $0x698] sm:$0xff]
    %v283 = vld [vmem:[#allocation2 + $0x6a0] sm:$0xff]
    %v284 = vld [vmem:[#allocation2 + $0x6a8] sm:$0xff]
    %v285 = vld [vmem:[#allocation2 + $0x6b0] sm:$0xff]
    %v286 = vld [vmem:[#allocation2 + $0x6b8] sm:$0xff]
    %v287 = vld [vmem:[#allocation2 + $0x6c0] sm:$0xff]
    %v288 = vld [vmem:[#allocation2 + $0x6c8] sm:$0xff]
    %v289 = vld [vmem:[#allocation2 + $0x6d0] sm:$0xff]
    %v290 = vld [vmem:[#allocation2 + $0x6d8] sm:$0xff]
    %v291 = vld [vmem:[#allocation2 + $0x6e0] sm:$0xff]
    %v292 = vld [vmem:[#allocation2 + $0x6e8] sm:$0xff]
    %v293 = vld [vmem:[#allocation2 + $0x6f0] sm:$0xff]
    %v294 = vld [vmem:[#allocation2 + $0x6f8] sm:$0xff]
    %v295 = vld [vmem:[#allocation2 + $0x700] sm:$0xff]
    %v296 = vld [vmem:[#allocation2 + $0x708] sm:$0xff]
    %v297 = vld [vmem:[#allocation2 + $0x710] sm:$0xff]
    %v298 = vld [vmem:[#allocation2 + $0x718] sm:$0xff]
    %v299 = vld [vmem:[#allocation2 + $0x720] sm:$0xff]
    %v300 = vld [vmem:[#allocation2 + $0x728] sm:$0xff]
    %v301 = vld [vmem:[#allocation2 + $0x730] sm:$0xff]
    %v302 = vld [vmem:[#allocation2 + $0x738] sm:$0xff]
    %v303 = vld [vmem:[#allocation2 + $0x740] sm:$0xff]
    %v304 = vld [vmem:[#allocation2 + $0x748] sm:$0xff]
    %v305 = vld [vmem:[#allocation2 + $0x750] sm:$0xff]
    %v306 = vld [vmem:[#allocation2 + $0x758] sm:$0xff]
    %v307 = vld [vmem:[#allocation2 + $0x760] sm:$0xff]
    %v308 = vld [vmem:[#allocation2 + $0x768] sm:$0xff]
    %v309 = vld [vmem:[#allocation2 + $0x770] sm:$0xff]
    %v310 = vld [vmem:[#allocation2 + $0x778] sm:$0xff]
    %v311 = vld [vmem:[#allocation2 + $0x780] sm:$0xff]
    %v312 = vld [vmem:[#allocation2 + $0x788] sm:$0xff]
    %v313 = vld [vmem:[#allocation2 + $0x790] sm:$0xff]
    %v314 = vld [vmem:[#allocation2 + $0x798] sm:$0xff]
    %v315 = vld [vmem:[#allocation2 + $0x7a0] sm:$0xff]
    %v316 = vld [vmem:[#allocation2 + $0x7a8] sm:$0xff]
    %v317 = vld [vmem:[#allocation2 + $0x7b0] sm:$0xff]
    %v318 = vld [vmem:[#allocation2 + $0x7b8] sm:$0xff]
    %v319 = vld [vmem:[#allocation2 + $0x7c0] sm:$0xff]
    %v320 = vld [vmem:[#allocation2 + $0x7c8] sm:$0xff]
    %v321 = vld [vmem:[#allocation2 + $0x7d0] sm:$0xff]
    %v322 = vld [vmem:[#allocation2 + $0x7d8] sm:$0xff]
    %v323 = vld [vmem:[#allocation2 + $0x7e0] sm:$0xff]
    %v324 = vld [vmem:[#allocation2 + $0x7e8] sm:$0xff]
    %v325 = vld [vmem:[#allocation2 + $0x7f0] sm:$0xff]
    %v326 = vld [vmem:[#allocation2 + $0x7f8] sm:$0xff]
    %v327 = vld [vmem:[#allocation2 + $0x800] sm:$0xff]
    %v328 = vld [vmem:[#allocation2 + $0x808] sm:$0xff]
    %v329 = vld [vmem:[#allocation2 + $0x810] sm:$0xff]
    %v330 = vld [vmem:[#allocation2 + $0x818] sm:$0xff]
    %v331 = vld [vmem:[#allocation2 + $0x820] sm:$0xff]
    %v332 = vld [vmem:[#allocation2 + $0x828] sm:$0xff]
    %v333 = vld [vmem:[#allocation2 + $0x830] sm:$0xff]
    %v334 = vld [vmem:[#allocation2 + $0x838] sm:$0xff]
    %v335 = vld [vmem:[#allocation2 + $0x840] sm:$0xff]
    %v336 = vld [vmem:[#allocation2 + $0x848] sm:$0xff]
    %v337 = vld [vmem:[#allocation2 + $0x850] sm:$0xff]
    %v338 = vld [vmem:[#allocation2 + $0x858] sm:$0xff]
    %v339 = vld [vmem:[#allocation2 + $0x860] sm:$0xff]
    %v340 = vld [vmem:[#allocation2 + $0x868] sm:$0xff]
    %v341 = vld [vmem:[#allocation2 + $0x870] sm:$0xff]
    %v342 = vld [vmem:[#allocation2 + $0x878] sm:$0xff]
    %v343 = vld [vmem:[#allocation2 + $0x880] sm:$0xff]
    %v344 = vld [vmem:[#allocation2 + $0x888] sm:$0xff]
    %v345 = vld [vmem:[#allocation2 + $0x890] sm:$0xff]
    %v346 = vld [vmem:[#allocation2 + $0x898] sm:$0xff]
    %v347 = vld [vmem:[#allocation2 + $0x8a0] sm:$0xff]
    %v348 = vld [vmem:[#allocation2 + $0x8a8] sm:$0xff]
    %v349 = vld [vmem:[#allocation2 + $0x8b0] sm:$0xff]
    %v350 = vld [vmem:[#allocation2 + $0x8b8] sm:$0xff]
    %v351 = vld [vmem:[#allocation2 + $0x8c0] sm:$0xff]
    %v352 = vld [vmem:[#allocation2 + $0x8c8] sm:$0xff]
    %v353 = vld [vmem:[#allocation2 + $0x8d0] sm:$0xff]
    %v354 = vld [vmem:[#allocation2 + $0x8d8] sm:$0xff]
    %v355 = vld [vmem:[#allocation2 + $0x8e0] sm:$0xff]
    %v356 = vld [vmem:[#allocation2 + $0x8e8] sm:$0xff]
    %v357 = vld [vmem:[#allocation2 + $0x8f0] sm:$0xff]
    %v358 = vld [vmem:[#allocation2 + $0x8f8] sm:$0xff]
    %v359 = vld [vmem:[#allocation2 + $0x900] sm:$0xff]
    %v360 = vld [vmem:[#allocation2 + $0x908] sm:$0xff]
    %v361 = vld [vmem:[#allocation2 + $0x910] sm:$0xff]
    %v362 = vld [vmem:[#allocation2 + $0x918] sm:$0xff]
    %v363 = vld [vmem:[#allocation2 + $0x920] sm:$0xff]
    %v364 = vld [vmem:[#allocation2 + $0x928] sm:$0xff]
    %v365 = vld [vmem:[#allocation2 + $0x930] sm:$0xff]
    %v366 = vld [vmem:[#allocation2 + $0x938] sm:$0xff]
    %v367 = vld [vmem:[#allocation2 + $0x940] sm:$0xff]
    %v368 = vld [vmem:[#allocation2 + $0x948] sm:$0xff]
    %v369 = vld [vmem:[#allocation2 + $0x950] sm:$0xff]
    %v370 = vld [vmem:[#allocation2 + $0x958] sm:$0xff]
    %v371 = vld [vmem:[#allocation2 + $0x960] sm:$0xff]
    %v372 = vld [vmem:[#allocation2 + $0x968] sm:$0xff]
    %v373 = vld [vmem:[#allocation2 + $0x970] sm:$0xff]
    %v374 = vld [vmem:[#allocation2 + $0x978] sm:$0xff]
    %v375 = vld [vmem:[#allocation2 + $0x980] sm:$0xff]
    %v376 = vld [vmem:[#allocation2 + $0x988] sm:$0xff]
    %v377 = vld [vmem:[#allocation2 + $0x990] sm:$0xff]
    %v378 = vld [vmem:[#allocation2 + $0x998] sm:$0xff]
    %v379 = vld [vmem:[#allocation2 + $0x9a0] sm:$0xff]
    %v380 = vld [vmem:[#allocation2 + $0x9a8] sm:$0xff]
    %v381 = vld [vmem:[#allocation2 + $0x9b0] sm:$0xff]
    %v382 = vld [vmem:[#allocation2 + $0x9b8] sm:$0xff]
    %v383 = vld [vmem:[#allocation2 + $0x9c0] sm:$0xff]
    %v384 = vld [vmem:[#allocation2 + $0x9c8] sm:$0xff]
    %v385 = vld [vmem:[#allocation2 + $0x9d0] sm:$0xff]
    %v386 = vld [vmem:[#allocation2 + $0x9d8] sm:$0xff]
    %v387 = vld [vmem:[#allocation2 + $0x9e0] sm:$0xff]
    %v388 = vld [vmem:[#allocation2 + $0x9e8] sm:$0xff]
    %v389 = vld [vmem:[#allocation2 + $0x9f0] sm:$0xff]
    %v390 = vld [vmem:[#allocation2 + $0x9f8] sm:$0xff]
    %v391 = vld [vmem:[#allocation2 + $0xa00] sm:$0xff]
    %v392 = vld [vmem:[#allocation2 + $0xa08] sm:$0xff]
    %v393 = vld [vmem:[#allocation2 + $0xa10] sm:$0xff]
    %v394 = vld [vmem:[#allocation2 + $0xa18] sm:$0xff]
    %v395 = vld [vmem:[#allocation2 + $0xa20] sm:$0xff]
    %v396 = vld [vmem:[#allocation2 + $0xa28] sm:$0xff]
    %v397 = vld [vmem:[#allocation2 + $0xa30] sm:$0xff]
    %v398 = vld [vmem:[#allocation2 + $0xa38] sm:$0xff]
    %v399 = vld [vmem:[#allocation2 + $0xa40] sm:$0xff]
    %v400 = vld [vmem:[#allocation2 + $0xa48] sm:$0xff]
    %v401 = vld [vmem:[#allocation2 + $0xa50] sm:$0xff]
    %v402 = vld [vmem:[#allocation2 + $0xa58] sm:$0xff]
    %v403 = vld [vmem:[#allocation2 + $0xa60] sm:$0xff]
    %v404 = vld [vmem:[#allocation2 + $0xa68] sm:$0xff]
    %v405 = vld [vmem:[#allocation2 + $0xa70] sm:$0xff]
    %v406 = vld [vmem:[#allocation2 + $0xa78] sm:$0xff]
    %v407 = vld [vmem:[#allocation2 + $0xa80] sm:$0xff]
    %v408 = vld [vmem:[#allocation2 + $0xa88] sm:$0xff]
    %v409 = vld [vmem:[#allocation2 + $0xa90] sm:$0xff]
    %v410 = vld [vmem:[#allocation2 + $0xa98] sm:$0xff]
    %v411 = vld [vmem:[#allocation2 + $0xaa0] sm:$0xff]
    %v412 = vld [vmem:[#allocation2 + $0xaa8] sm:$0xff]
    %v413 = vld [vmem:[#allocation2 + $0xab0] sm:$0xff]
    %v414 = vld [vmem:[#allocation2 + $0xab8] sm:$0xff]
    %v415 = vld [vmem:[#allocation2 + $0xac0] sm:$0xff]
    %v416 = vld [vmem:[#allocation2 + $0xac8] sm:$0xff]
    %v417 = vld [vmem:[#allocation2 + $0xad0] sm:$0xff]
    %v418 = vld [vmem:[#allocation2 + $0xad8] sm:$0xff]
    %v419 = vld [vmem:[#allocation2 + $0xae0] sm:$0xff]
    %v420 = vld [vmem:[#allocation2 + $0xae8] sm:$0xff]
    %v421 = vld [vmem:[#allocation2 + $0xaf0] sm:$0xff]
    %v422 = vld [vmem:[#allocation2 + $0xaf8] sm:$0xff]
    %v423 = vld [vmem:[#allocation2 + $0xb00] sm:$0xff]
    %v424 = vld [vmem:[#allocation2 + $0xb08] sm:$0xff]
    %v425 = vld [vmem:[#allocation2 + $0xb10] sm:$0xff]
    %v426 = vld [vmem:[#allocation2 + $0xb18] sm:$0xff]
    %v427 = vld [vmem:[#allocation2 + $0xb20] sm:$0xff]
    %v428 = vld [vmem:[#allocation2 + $0xb28] sm:$0xff]
    %v429 = vld [vmem:[#allocation2 + $0xb30] sm:$0xff]
    %v430 = vld [vmem:[#allocation2 + $0xb38] sm:$0xff]
    %v431 = vld [vmem:[#allocation2 + $0xb40] sm:$0xff]
    %v432 = vld [vmem:[#allocation2 + $0xb48] sm:$0xff]
    %v433 = vld [vmem:[#allocation2 + $0xb50] sm:$0xff]
    %v434 = vld [vmem:[#allocation2 + $0xb58] sm:$0xff]
    %v435 = vld [vmem:[#allocation2 + $0xb60] sm:$0xff]
    %v436 = vld [vmem:[#allocation2 + $0xb68] sm:$0xff]
    %v437 = vld [vmem:[#allocation2 + $0xb70] sm:$0xff]
    %v438 = vld [vmem:[#allocation2 + $0xb78] sm:$0xff]
    %v439 = vld [vmem:[#allocation2 + $0xb80] sm:$0xff]
    %v440 = vld [vmem:[#allocation2 + $0xb88] sm:$0xff]
    %v441 = vld [vmem:[#allocation2 + $0xb90] sm:$0xff]
    %v442 = vld [vmem:[#allocation2 + $0xb98] sm:$0xff]
    %v443 = vld [vmem:[#allocation2 + $0xba0] sm:$0xff]
    %v444 = vld [vmem:[#allocation2 + $0xba8] sm:$0xff]
    %v445 = vld [vmem:[#allocation2 + $0xbb0] sm:$0xff]
    %v446 = vld [vmem:[#allocation2 + $0xbb8] sm:$0xff]
    %v447 = vld [vmem:[#allocation2 + $0xbc0] sm:$0xff]
    %v448 = vld [vmem:[#allocation2 + $0xbc8] sm:$0xff]
    %v449 = vld [vmem:[#allocation2 + $0xbd0] sm:$0xff]
    %v450 = vld [vmem:[#allocation2 + $0xbd8] sm:$0xff]
    %v451 = vld [vmem:[#allocation2 + $0xbe0] sm:$0xff]
    %v452 = vld [vmem:[#allocation2 + $0xbe8] sm:$0xff]
    %v453 = vld [vmem:[#allocation2 + $0xbf0] sm:$0xff]
    %v454 = vld [vmem:[#allocation2 + $0xbf8] sm:$0xff]
    %v455 = vld [vmem:[#allocation2 + $0xc00] sm:$0xff]
    %v456 = vld [vmem:[#allocation2 + $0xc08] sm:$0xff]
    %v457 = vld [vmem:[#allocation2 + $0xc10] sm:$0xff]
    %v458 = vld [vmem:[#allocation2 + $0xc18] sm:$0xff]
    %v459 = vld [vmem:[#allocation2 + $0xc20] sm:$0xff]
    %v460 = vld [vmem:[#allocation2 + $0xc28] sm:$0xff]
    %v461 = vld [vmem:[#allocation2 + $0xc30] sm:$0xff]
    %v462 = vld [vmem:[#allocation2 + $0xc38] sm:$0xff]
    %v463 = vld [vmem:[#allocation2 + $0xc40] sm:$0xff]
    %v464 = vld [vmem:[#allocation2 + $0xc48] sm:$0xff]
    %v465 = vld [vmem:[#allocation2 + $0xc50] sm:$0xff]
    %v466 = vld [vmem:[#allocation2 + $0xc58] sm:$0xff]
    %v467 = vld [vmem:[#allocation2 + $0xc60] sm:$0xff]
    %v468 = vld [vmem:[#allocation2 + $0xc68] sm:$0xff]
    %v469 = vld [vmem:[#allocation2 + $0xc70] sm:$0xff]
    %v470 = vld [vmem:[#allocation2 + $0xc78] sm:$0xff]
    %v471 = vld [vmem:[#allocation2 + $0xc80] sm:$0xff]
    %v472 = vld [vmem:[#allocation2 + $0xc88] sm:$0xff]
    %v473 = vld [vmem:[#allocation2 + $0xc90] sm:$0xff]
    %v474 = vld [vmem:[#allocation2 + $0xc98] sm:$0xff]
    %v475 = vld [vmem:[#allocation2 + $0xca0] sm:$0xff]
    %v476 = vld [vmem:[#allocation2 + $0xca8] sm:$0xff]
    %v477 = vld [vmem:[#allocation2 + $0xcb0] sm:$0xff]
    %v478 = vld [vmem:[#allocation2 + $0xcb8] sm:$0xff]
    %v479 = vld [vmem:[#allocation2 + $0xcc0] sm:$0xff]
    %v480 = vld [vmem:[#allocation2 + $0xcc8] sm:$0xff]
    %v481 = vld [vmem:[#allocation2 + $0xcd0] sm:$0xff]
    %v482 = vld [vmem:[#allocation2 + $0xcd8] sm:$0xff]
    %v483 = vld [vmem:[#allocation2 + $0xce0] sm:$0xff]
    %v484 = vld [vmem:[#allocation2 + $0xce8] sm:$0xff]
    %v485 = vld [vmem:[#allocation2 + $0xcf0] sm:$0xff]
    %v486 = vld [vmem:[#allocation2 + $0xcf8] sm:$0xff]
    %v487 = vld [vmem:[#allocation2 + $0xd00] sm:$0xff]
    %v488 = vld [vmem:[#allocation2 + $0xd08] sm:$0xff]
    %v489 = vld [vmem:[#allocation2 + $0xd10] sm:$0xff]
    %v490 = vld [vmem:[#allocation2 + $0xd18] sm:$0xff]
    %v491 = vld [vmem:[#allocation2 + $0xd20] sm:$0xff]
    %v492 = vld [vmem:[#allocation2 + $0xd28] sm:$0xff]
    %v493 = vld [vmem:[#allocation2 + $0xd30] sm:$0xff]
    %v494 = vld [vmem:[#allocation2 + $0xd38] sm:$0xff]
    %v495 = vld [vmem:[#allocation2 + $0xd40] sm:$0xff]
    %v496 = vld [vmem:[#allocation2 + $0xd48] sm:$0xff]
    %v497 = vld [vmem:[#allocation2 + $0xd50] sm:$0xff]
    %v498 = vld [vmem:[#allocation2 + $0xd58] sm:$0xff]
    %v499 = vld [vmem:[#allocation2 + $0xd60] sm:$0xff]
    %v500 = vld [vmem:[#allocation2 + $0xd68] sm:$0xff]
    %v501 = vld [vmem:[#allocation2 + $0xd70] sm:$0xff]
    %v502 = vld [vmem:[#allocation2 + $0xd78] sm:$0xff]
    %v503 = vld [vmem:[#allocation2 + $0xd80] sm:$0xff]
    %v504 = vld [vmem:[#allocation2 + $0xd88] sm:$0xff]
    %v505 = vld [vmem:[#allocation2 + $0xd90] sm:$0xff]
    %v506 = vld [vmem:[#allocation2 + $0xd98] sm:$0xff]
    %v507 = vld [vmem:[#allocation2 + $0xda0] sm:$0xff]
    %v508 = vld [vmem:[#allocation2 + $0xda8] sm:$0xff]
    %v509 = vld [vmem:[#allocation2 + $0xdb0] sm:$0xff]
    %v510 = vld [vmem:[#allocation2 + $0xdb8] sm:$0xff]
    %v511 = vld [vmem:[#allocation2 + $0xdc0] sm:$0xff]
    %v512 = vld [vmem:[#allocation2 + $0xdc8] sm:$0xff]
    %v513 = vld [vmem:[#allocation2 + $0xdd0] sm:$0xff]
    %v514 = vld [vmem:[#allocation2 + $0xdd8] sm:$0xff]
    %v515 = vld [vmem:[#allocation2 + $0xde0] sm:$0xff]
    %v516 = vld [vmem:[#allocation2 + $0xde8] sm:$0xff]
    %v517 = vld [vmem:[#allocation2 + $0xdf0] sm:$0xff]
    %v518 = vld [vmem:[#allocation2 + $0xdf8] sm:$0xff]
    %v519 = vld [vmem:[#allocation2 + $0xe00] sm:$0xff]
    %v520 = vld [vmem:[#allocation2 + $0xe08] sm:$0xff]
    %v521 = vld [vmem:[#allocation2 + $0xe10] sm:$0xff]
    %v522 = vld [vmem:[#allocation2 + $0xe18] sm:$0xff]
    %v523 = vld [vmem:[#allocation2 + $0xe20] sm:$0xff]
    %v524 = vld [vmem:[#allocation2 + $0xe28] sm:$0xff]
    %v525 = vld [vmem:[#allocation2 + $0xe30] sm:$0xff]
    %v526 = vld [vmem:[#allocation2 + $0xe38] sm:$0xff]
    %v527 = vld [vmem:[#allocation2 + $0xe40] sm:$0xff]
    %v528 = vld [vmem:[#allocation2 + $0xe48] sm:$0xff]
    %v529 = vld [vmem:[#allocation2 + $0xe50] sm:$0xff]
    %v530 = vld [vmem:[#allocation2 + $0xe58] sm:$0xff]
    %v531 = vld [vmem:[#allocation2 + $0xe60] sm:$0xff]
    %v532 = vld [vmem:[#allocation2 + $0xe68] sm:$0xff]
    %v533 = vld [vmem:[#allocation2 + $0xe70] sm:$0xff]
    %v534 = vld [vmem:[#allocation2 + $0xe78] sm:$0xff]
    %v535 = vld [vmem:[#allocation2 + $0xe80] sm:$0xff]
    %v536 = vld [vmem:[#allocation2 + $0xe88] sm:$0xff]
    %v537 = vld [vmem:[#allocation2 + $0xe90] sm:$0xff]
    %v538 = vld [vmem:[#allocation2 + $0xe98] sm:$0xff]
    %v539 = vld [vmem:[#allocation2 + $0xea0] sm:$0xff]
    %v540 = vld [vmem:[#allocation2 + $0xea8] sm:$0xff]
    %v541 = vld [vmem:[#allocation2 + $0xeb0] sm:$0xff]
    %v542 = vld [vmem:[#allocation2 + $0xeb8] sm:$0xff]
    %v543 = vld [vmem:[#allocation2 + $0xec0] sm:$0xff]
    %v544 = vld [vmem:[#allocation2 + $0xec8] sm:$0xff]
    %v545 = vld [vmem:[#allocation2 + $0xed0] sm:$0xff]
    %v546 = vld [vmem:[#allocation2 + $0xed8] sm:$0xff]
    %v547 = vld [vmem:[#allocation2 + $0xee0] sm:$0xff]
    %v548 = vld [vmem:[#allocation2 + $0xee8] sm:$0xff]
    %v549 = vld [vmem:[#allocation2 + $0xef0] sm:$0xff]
    %v550 = vld [vmem:[#allocation2 + $0xef8] sm:$0xff]
    %v551 = vld [vmem:[#allocation2 + $0xf00] sm:$0xff]
    %v552 = vld [vmem:[#allocation2 + $0xf08] sm:$0xff]
    %v553 = vld [vmem:[#allocation2 + $0xf10] sm:$0xff]
    %v554 = vld [vmem:[#allocation2 + $0xf18] sm:$0xff]
    %v555 = vld [vmem:[#allocation2 + $0xf20] sm:$0xff]
    %v556 = vld [vmem:[#allocation2 + $0xf28] sm:$0xff]
    %v557 = vld [vmem:[#allocation2 + $0xf30] sm:$0xff]
    %v558 = vld [vmem:[#allocation2 + $0xf38] sm:$0xff]
    %v559 = vld [vmem:[#allocation2 + $0xf40] sm:$0xff]
    %v560 = vld [vmem:[#allocation2 + $0xf48] sm:$0xff]
    %v561 = vld [vmem:[#allocation2 + $0xf50] sm:$0xff]
    %v562 = vld [vmem:[#allocation2 + $0xf58] sm:$0xff]
    %v563 = vld [vmem:[#allocation2 + $0xf60] sm:$0xff]
    %v564 = vld [vmem:[#allocation2 + $0xf68] sm:$0xff]
    %v565 = vld [vmem:[#allocation2 + $0xf70] sm:$0xff]
    %v566 = vld [vmem:[#allocation2 + $0xf78] sm:$0xff]
    %v567 = vld [vmem:[#allocation2 + $0xf80] sm:$0xff]
    %v568 = vld [vmem:[#allocation2 + $0xf88] sm:$0xff]
    %v569 = vld [vmem:[#allocation2 + $0xf90] sm:$0xff]
    %v570 = vld [vmem:[#allocation2 + $0xf98] sm:$0xff]
    %v571 = vld [vmem:[#allocation2 + $0xfa0] sm:$0xff]
    %v572 = vld [vmem:[#allocation2 + $0xfa8] sm:$0xff]
    %v573 = vld [vmem:[#allocation2 + $0xfb0] sm:$0xff]
    %v574 = vld [vmem:[#allocation2 + $0xfb8] sm:$0xff]
    %v575 = vld [vmem:[#allocation2 + $0xfc0] sm:$0xff]
    %v576 = vld [vmem:[#allocation2 + $0xfc8] sm:$0xff]
    %v577 = vld [vmem:[#allocation2 + $0xfd0] sm:$0xff]
    %v578 = vld [vmem:[#allocation2 + $0xfd8] sm:$0xff]
    %v579 = vld [vmem:[#allocation2 + $0xfe0] sm:$0xff]
    %v580 = vld [vmem:[#allocation2 + $0xfe8] sm:$0xff]
    %v581 = vld [vmem:[#allocation2 + $0xff0] sm:$0xff]
    %v582 = vld [vmem:[#allocation2 + $0xff8] sm:$0xff]
    %v583 = vld [vmem:[#allocation2 + $0x1000] sm:$0xff]
    %v584 = vld [vmem:[#allocation2 + $0x1008] sm:$0xff]
    %v585 = vld [vmem:[#allocation2 + $0x1010] sm:$0xff]
    %v586 = vld [vmem:[#allocation2 + $0x1018] sm:$0xff]
    %v587 = vld [vmem:[#allocation2 + $0x1020] sm:$0xff]
    %v588 = vld [vmem:[#allocation2 + $0x1028] sm:$0xff]
    %v589 = vld [vmem:[#allocation2 + $0x1030] sm:$0xff]
    %v590 = vld [vmem:[#allocation2 + $0x1038] sm:$0xff]
    %v591 = vld [vmem:[#allocation2 + $0x1040] sm:$0xff]
    %v592 = vld [vmem:[#allocation2 + $0x1048] sm:$0xff]
    %v593 = vld [vmem:[#allocation2 + $0x1050] sm:$0xff]
    %v594 = vld [vmem:[#allocation2 + $0x1058] sm:$0xff]
    %v595 = vld [vmem:[#allocation2 + $0x1060] sm:$0xff]
    %v596 = vld [vmem:[#allocation2 + $0x1068] sm:$0xff]
    %v597 = vld [vmem:[#allocation2 + $0x1070] sm:$0xff]
    %v598 = vld [vmem:[#allocation2 + $0x1078] sm:$0xff]
    %v599 = vld [vmem:[#allocation2 + $0x1080] sm:$0xff]
    %v600 = vld [vmem:[#allocation2 + $0x1088] sm:$0xff]
    %v601 = vld [vmem:[#allocation2 + $0x1090] sm:$0xff]
    %v602 = vld [vmem:[#allocation2 + $0x1098] sm:$0xff]
    %v603 = vld [vmem:[#allocation2 + $0x10a0] sm:$0xff]
    %v604 = vld [vmem:[#allocation2 + $0x10a8] sm:$0xff]
    %v605 = vld [vmem:[#allocation2 + $0x10b0] sm:$0xff]
    %v606 = vld [vmem:[#allocation2 + $0x10b8] sm:$0xff]
    %v607 = vld [vmem:[#allocation2 + $0x10c0] sm:$0xff]
    %v608 = vld [vmem:[#allocation2 + $0x10c8] sm:$0xff]
    %v609 = vld [vmem:[#allocation2 + $0x10d0] sm:$0xff]
    %v610 = vld [vmem:[#allocation2 + $0x10d8] sm:$0xff]
    %v611 = vld [vmem:[#allocation2 + $0x10e0] sm:$0xff]
    %v612 = vld [vmem:[#allocation2 + $0x10e8] sm:$0xff]
    %v613 = vld [vmem:[#allocation2 + $0x10f0] sm:$0xff]
    %v614 = vld [vmem:[#allocation2 + $0x10f8] sm:$0xff]
    %v615 = vld [vmem:[#allocation2 + $0x1100] sm:$0xff]
    %v616 = vld [vmem:[#allocation2 + $0x1108] sm:$0xff]
    %v617 = vld [vmem:[#allocation2 + $0x1110] sm:$0xff]
    %v618 = vld [vmem:[#allocation2 + $0x1118] sm:$0xff]
    %v619 = vld [vmem:[#allocation2 + $0x1120] sm:$0xff]
    %v620 = vld [vmem:[#allocation2 + $0x1128] sm:$0xff]
    %v621 = vld [vmem:[#allocation2 + $0x1130] sm:$0xff]
    %v622 = vld [vmem:[#allocation2 + $0x1138] sm:$0xff]
    %v623 = vld [vmem:[#allocation2 + $0x1140] sm:$0xff]
    %v624 = vld [vmem:[#allocation2 + $0x1148] sm:$0xff]
    %v625 = vld [vmem:[#allocation2 + $0x1150] sm:$0xff]
    %v626 = vld [vmem:[#allocation2 + $0x1158] sm:$0xff]
    %v627 = vld [vmem:[#allocation2 + $0x1160] sm:$0xff]
    %v628 = vld [vmem:[#allocation2 + $0x1168] sm:$0xff]
    %v629 = vld [vmem:[#allocation2 + $0x1170] sm:$0xff]
    %v630 = vld [vmem:[#allocation2 + $0x1178] sm:$0xff]
    %v631 = vld [vmem:[#allocation2 + $0x1180] sm:$0xff]
    %v632 = vld [vmem:[#allocation2 + $0x1188] sm:$0xff]
    %v633 = vld [vmem:[#allocation2 + $0x1190] sm:$0xff]
    %v634 = vld [vmem:[#allocation2 + $0x1198] sm:$0xff]
    %v635 = vld [vmem:[#allocation2 + $0x11a0] sm:$0xff]
    %v636 = vld [vmem:[#allocation2 + $0x11a8] sm:$0xff]
    %v637 = vld [vmem:[#allocation2 + $0x11b0] sm:$0xff]
    %v638 = vld [vmem:[#allocation2 + $0x11b8] sm:$0xff]
    %v639 = vld [vmem:[#allocation2 + $0x11c0] sm:$0xff]
    %v640 = vld [vmem:[#allocation2 + $0x11c8] sm:$0xff]
    %v641 = vld [vmem:[#allocation2 + $0x11d0] sm:$0xff]
    %v642 = vld [vmem:[#allocation2 + $0x11d8] sm:$0xff]
    %v643 = vld [vmem:[#allocation2 + $0x11e0] sm:$0xff]
    %v644 = vld [vmem:[#allocation2 + $0x11e8] sm:$0xff]
    %v645 = vld [vmem:[#allocation2 + $0x11f0] sm:$0xff]
    %v646 = vld [vmem:[#allocation2 + $0x11f8] sm:$0xff]
    %v647 = vld [vmem:[#allocation2 + $0x1200] sm:$0xff]
    %v648 = vld [vmem:[#allocation2 + $0x1208] sm:$0xff]
    %v649 = vld [vmem:[#allocation2 + $0x1210] sm:$0xff]
    %v650 = vld [vmem:[#allocation2 + $0x1218] sm:$0xff]
    %v651 = vld [vmem:[#allocation2 + $0x1220] sm:$0xff]
    %v652 = vld [vmem:[#allocation2 + $0x1228] sm:$0xff]
    %v653 = vld [vmem:[#allocation2 + $0x1230] sm:$0xff]
    %v654 = vld [vmem:[#allocation2 + $0x1238] sm:$0xff]
    %v655 = vld [vmem:[#allocation2 + $0x1240] sm:$0xff]
    %v656 = vld [vmem:[#allocation2 + $0x1248] sm:$0xff]
    %v657 = vld [vmem:[#allocation2 + $0x1250] sm:$0xff]
    %v658 = vld [vmem:[#allocation2 + $0x1258] sm:$0xff]
    %v659 = vld [vmem:[#allocation2 + $0x1260] sm:$0xff]
    %v660 = vld [vmem:[#allocation2 + $0x1268] sm:$0xff]
    %v661 = vld [vmem:[#allocation2 + $0x1270] sm:$0xff]
    %v662 = vld [vmem:[#allocation2 + $0x1278] sm:$0xff]
    %v663 = vld [vmem:[#allocation2 + $0x1280] sm:$0xff]
    %v664 = vld [vmem:[#allocation2 + $0x1288] sm:$0xff]
    %v665 = vld [vmem:[#allocation2 + $0x1290] sm:$0xff]
    %v666 = vld [vmem:[#allocation2 + $0x1298] sm:$0xff]
    %v667 = vld [vmem:[#allocation2 + $0x12a0] sm:$0xff]
    %v668 = vld [vmem:[#allocation2 + $0x12a8] sm:$0xff]
    %v669 = vld [vmem:[#allocation2 + $0x12b0] sm:$0xff]
    %v670 = vld [vmem:[#allocation2 + $0x12b8] sm:$0xff]
    %v671 = vld [vmem:[#allocation2 + $0x12c0] sm:$0xff]
    %v672 = vld [vmem:[#allocation2 + $0x12c8] sm:$0xff]
    %v673 = vld [vmem:[#allocation2 + $0x12d0] sm:$0xff]
    %v674 = vld [vmem:[#allocation2 + $0x12d8] sm:$0xff]
    %v675 = vld [vmem:[#allocation2 + $0x12e0] sm:$0xff]
    %v676 = vld [vmem:[#allocation2 + $0x12e8] sm:$0xff]
    %v677 = vld [vmem:[#allocation2 + $0x12f0] sm:$0xff]
    %v678 = vld [vmem:[#allocation2 + $0x12f8] sm:$0xff]
    %v679 = vld [vmem:[#allocation2 + $0x1300] sm:$0xff]
    %v680 = vld [vmem:[#allocation2 + $0x1308] sm:$0xff]
    %v681 = vld [vmem:[#allocation2 + $0x1310] sm:$0xff]
    %v682 = vld [vmem:[#allocation2 + $0x1318] sm:$0xff]
    %v683 = vld [vmem:[#allocation2 + $0x1320] sm:$0xff]
    %v684 = vld [vmem:[#allocation2 + $0x1328] sm:$0xff]
    %v685 = vld [vmem:[#allocation2 + $0x1330] sm:$0xff]
    %v686 = vld [vmem:[#allocation2 + $0x1338] sm:$0xff]
    %v687 = vld [vmem:[#allocation2 + $0x1340] sm:$0xff]
    %v688 = vld [vmem:[#allocation2 + $0x1348] sm:$0xff]
    %v689 = vld [vmem:[#allocation2 + $0x1350] sm:$0xff]
    %v690 = vld [vmem:[#allocation2 + $0x1358] sm:$0xff]
    %v691 = vld [vmem:[#allocation2 + $0x1360] sm:$0xff]
    %v692 = vld [vmem:[#allocation2 + $0x1368] sm:$0xff]
    %v693 = vld [vmem:[#allocation2 + $0x1370] sm:$0xff]
    %v694 = vld [vmem:[#allocation2 + $0x1378] sm:$0xff]
    %v695 = vld [vmem:[#allocation2 + $0x1380] sm:$0xff]
    %v696 = vld [vmem:[#allocation2 + $0x1388] sm:$0xff]
    %v697 = vld [vmem:[#allocation2 + $0x1390] sm:$0xff]
    %v698 = vld [vmem:[#allocation2 + $0x1398] sm:$0xff]
    %v699 = vld [vmem:[#allocation2 + $0x13a0] sm:$0xff]
    %v700 = vld [vmem:[#allocation2 + $0x13a8] sm:$0xff]
    %v701 = vld [vmem:[#allocation2 + $0x13b0] sm:$0xff]
    %v702 = vld [vmem:[#allocation2 + $0x13b8] sm:$0xff]
    %v703 = vld [vmem:[#allocation2 + $0x13c0] sm:$0xff]
    %v704 = vld [vmem:[#allocation2 + $0x13c8] sm:$0xff]
    %v705 = vld [vmem:[#allocation2 + $0x13d0] sm:$0xff]
    %v706 = vld [vmem:[#allocation2 + $0x13d8] sm:$0xff]
    %v707 = vld [vmem:[#allocation2 + $0x13e0] sm:$0xff]
    %v708 = vld [vmem:[#allocation2 + $0x13e8] sm:$0xff]
    %v709 = vld [vmem:[#allocation2 + $0x13f0] sm:$0xff]
    %v710 = vld [vmem:[#allocation2 + $0x13f8] sm:$0xff]
    %v711 = vld [vmem:[#allocation2 + $0x1400] sm:$0xff]
    %v712 = vld [vmem:[#allocation2 + $0x1408] sm:$0xff]
    %v713 = vld [vmem:[#allocation2 + $0x1410] sm:$0xff]
    %v714 = vld [vmem:[#allocation2 + $0x1418] sm:$0xff]
    %v715 = vld [vmem:[#allocation2 + $0x1420] sm:$0xff]
    %v716 = vld [vmem:[#allocation2 + $0x1428] sm:$0xff]
    %v717 = vld [vmem:[#allocation2 + $0x1430] sm:$0xff]
    %v718 = vld [vmem:[#allocation2 + $0x1438] sm:$0xff]
    %v719 = vld [vmem:[#allocation2 + $0x1440] sm:$0xff]
    %v720 = vld [vmem:[#allocation2 + $0x1448] sm:$0xff]
    %v721 = vld [vmem:[#allocation2 + $0x1450] sm:$0xff]
    %v722 = vld [vmem:[#allocation2 + $0x1458] sm:$0xff]
    %v723 = vld [vmem:[#allocation2 + $0x1460] sm:$0xff]
    %v724 = vld [vmem:[#allocation2 + $0x1468] sm:$0xff]
    %v725 = vld [vmem:[#allocation2 + $0x1470] sm:$0xff]
    %v726 = vld [vmem:[#allocation2 + $0x1478] sm:$0xff]
    %v727 = vld [vmem:[#allocation2 + $0x1480] sm:$0xff]
    %v728 = vld [vmem:[#allocation2 + $0x1488] sm:$0xff]
    %v729 = vld [vmem:[#allocation2 + $0x1490] sm:$0xff]
    %v730 = vld [vmem:[#allocation2 + $0x1498] sm:$0xff]
    %v731 = vld [vmem:[#allocation2 + $0x14a0] sm:$0xff]
    %v732 = vld [vmem:[#allocation2 + $0x14a8] sm:$0xff]
    %v733 = vld [vmem:[#allocation2 + $0x14b0] sm:$0xff]
    %v734 = vld [vmem:[#allocation2 + $0x14b8] sm:$0xff]
    %v735 = vld [vmem:[#allocation2 + $0x14c0] sm:$0xff]
    %v736 = vld [vmem:[#allocation2 + $0x14c8] sm:$0xff]
    %v737 = vld [vmem:[#allocation2 + $0x14d0] sm:$0xff]
    %v738 = vld [vmem:[#allocation2 + $0x14d8] sm:$0xff]
    %v739 = vld [vmem:[#allocation2 + $0x14e0] sm:$0xff]
    %v740 = vld [vmem:[#allocation2 + $0x14e8] sm:$0xff]
    %v741 = vld [vmem:[#allocation2 + $0x14f0] sm:$0xff]
    %v742 = vld [vmem:[#allocation2 + $0x14f8] sm:$0xff]
    %v743 = vld [vmem:[#allocation2 + $0x1500] sm:$0xff]
    %v744 = vld [vmem:[#allocation2 + $0x1508] sm:$0xff]
    %v745 = vld [vmem:[#allocation2 + $0x1510] sm:$0xff]
    %v746 = vld [vmem:[#allocation2 + $0x1518] sm:$0xff]
    %v747 = vld [vmem:[#allocation2 + $0x1520] sm:$0xff]
    %v748 = vld [vmem:[#allocation2 + $0x1528] sm:$0xff]
    %v749 = vld [vmem:[#allocation2 + $0x1530] sm:$0xff]
    %v750 = vld [vmem:[#allocation2 + $0x1538] sm:$0xff]
    %v751 = vld [vmem:[#allocation2 + $0x1540] sm:$0xff]
    %v752 = vld [vmem:[#allocation2 + $0x1548] sm:$0xff]
    %v753 = vld [vmem:[#allocation2 + $0x1550] sm:$0xff]
    %v754 = vld [vmem:[#allocation2 + $0x1558] sm:$0xff]
    %v755 = vld [vmem:[#allocation2 + $0x1560] sm:$0xff]
    %v756 = vld [vmem:[#allocation2 + $0x1568] sm:$0xff]
    %v757 = vld [vmem:[#allocation2 + $0x1570] sm:$0xff]
    %v758 = vld [vmem:[#allocation2 + $0x1578] sm:$0xff]
    %v759 = vld [vmem:[#allocation2 + $0x1580] sm:$0xff]
    %v760 = vld [vmem:[#allocation2 + $0x1588] sm:$0xff]
    %v761 = vld [vmem:[#allocation2 + $0x1590] sm:$0xff]
    %v762 = vld [vmem:[#allocation2 + $0x1598] sm:$0xff]
    %v763 = vld [vmem:[#allocation2 + $0x15a0] sm:$0xff]
    %v764 = vld [vmem:[#allocation2 + $0x15a8] sm:$0xff]
    %v765 = vld [vmem:[#allocation2 + $0x15b0] sm:$0xff]
    %v766 = vld [vmem:[#allocation2 + $0x15b8] sm:$0xff]
    %v767 = vld [vmem:[#allocation2 + $0x15c0] sm:$0xff]
    %v768 = vld [vmem:[#allocation2 + $0x15c8] sm:$0xff]
    %v769 = vld [vmem:[#allocation2 + $0x15d0] sm:$0xff]
    %v770 = vld [vmem:[#allocation2 + $0x15d8] sm:$0xff]
    %v771 = vld [vmem:[#allocation2 + $0x15e0] sm:$0xff]
    %v772 = vld [vmem:[#allocation2 + $0x15e8] sm:$0xff]
    %v773 = vld [vmem:[#allocation2 + $0x15f0] sm:$0xff]
    %v774 = vld [vmem:[#allocation2 + $0x15f8] sm:$0xff]
    %v775 = vld [vmem:[#allocation2 + $0x1600] sm:$0xff]
    %v776 = vld [vmem:[#allocation2 + $0x1608] sm:$0xff]
    %v777 = vld [vmem:[#allocation2 + $0x1610] sm:$0xff]
    %v778 = vld [vmem:[#allocation2 + $0x1618] sm:$0xff]
    %v779 = vld [vmem:[#allocation2 + $0x1620] sm:$0xff]
    %v780 = vld [vmem:[#allocation2 + $0x1628] sm:$0xff]
    %v781 = vld [vmem:[#allocation2 + $0x1630] sm:$0xff]
    %v782 = vld [vmem:[#allocation2 + $0x1638] sm:$0xff]
    %v783 = vld [vmem:[#allocation2 + $0x1640] sm:$0xff]
    %v784 = vld [vmem:[#allocation2 + $0x1648] sm:$0xff]
    %v785 = vld [vmem:[#allocation2 + $0x1650] sm:$0xff]
    %v786 = vld [vmem:[#allocation2 + $0x1658] sm:$0xff]
    %v787 = vld [vmem:[#allocation2 + $0x1660] sm:$0xff]
    %v788 = vld [vmem:[#allocation2 + $0x1668] sm:$0xff]
    %v789 = vld [vmem:[#allocation2 + $0x1670] sm:$0xff]
    %v790 = vld [vmem:[#allocation2 + $0x1678] sm:$0xff]
    %v791 = vld [vmem:[#allocation2 + $0x1680] sm:$0xff]
    %v792 = vld [vmem:[#allocation2 + $0x1688] sm:$0xff]
    %v793 = vld [vmem:[#allocation2 + $0x1690] sm:$0xff]
    %v794 = vld [vmem:[#allocation2 + $0x1698] sm:$0xff]
    %v795 = vld [vmem:[#allocation2 + $0x16a0] sm:$0xff]
    %v796 = vld [vmem:[#allocation2 + $0x16a8] sm:$0xff]
    %v797 = vld [vmem:[#allocation2 + $0x16b0] sm:$0xff]
    %v798 = vld [vmem:[#allocation2 + $0x16b8] sm:$0xff]
    %v799 = vld [vmem:[#allocation2 + $0x16c0] sm:$0xff]
    %v800 = vld [vmem:[#allocation2 + $0x16c8] sm:$0xff]
    %v801 = vld [vmem:[#allocation2 + $0x16d0] sm:$0xff]
    %v802 = vld [vmem:[#allocation2 + $0x16d8] sm:$0xff]
    %v803 = vld [vmem:[#allocation2 + $0x16e0] sm:$0xff]
    %v804 = vld [vmem:[#allocation2 + $0x16e8] sm:$0xff]
    %v805 = vld [vmem:[#allocation2 + $0x16f0] sm:$0xff]
    %v806 = vld [vmem:[#allocation2 + $0x16f8] sm:$0xff]
    %v807 = vld [vmem:[#allocation2 + $0x1700] sm:$0xff]
    %v808 = vld [vmem:[#allocation2 + $0x1708] sm:$0xff]
    %v809 = vld [vmem:[#allocation2 + $0x1710] sm:$0xff]
    %v810 = vld [vmem:[#allocation2 + $0x1718] sm:$0xff]
    %v811 = vld [vmem:[#allocation2 + $0x1720] sm:$0xff]
    %v812 = vld [vmem:[#allocation2 + $0x1728] sm:$0xff]
    %v813 = vld [vmem:[#allocation2 + $0x1730] sm:$0xff]
    %v814 = vld [vmem:[#allocation2 + $0x1738] sm:$0xff]
    %v815 = vld [vmem:[#allocation2 + $0x1740] sm:$0xff]
    %v816 = vld [vmem:[#allocation2 + $0x1748] sm:$0xff]
    %v817 = vld [vmem:[#allocation2 + $0x1750] sm:$0xff]
    %v818 = vld [vmem:[#allocation2 + $0x1758] sm:$0xff]
    %v819 = vld [vmem:[#allocation2 + $0x1760] sm:$0xff]
    %v820 = vld [vmem:[#allocation2 + $0x1768] sm:$0xff]
    %v821 = vld [vmem:[#allocation2 + $0x1770] sm:$0xff]
    %v822 = vld [vmem:[#allocation2 + $0x1778] sm:$0xff]
    %v823 = vld [vmem:[#allocation2 + $0x1780] sm:$0xff]
    %v824 = vld [vmem:[#allocation2 + $0x1788] sm:$0xff]
    %v825 = vld [vmem:[#allocation2 + $0x1790] sm:$0xff]
    %v826 = vld [vmem:[#allocation2 + $0x1798] sm:$0xff]
    %v827 = vld [vmem:[#allocation2 + $0x17a0] sm:$0xff]
    %v828 = vld [vmem:[#allocation2 + $0x17a8] sm:$0xff]
    %v829 = vld [vmem:[#allocation2 + $0x17b0] sm:$0xff]
    %v830 = vld [vmem:[#allocation2 + $0x17b8] sm:$0xff]
    %v831 = vld [vmem:[#allocation2 + $0x17c0] sm:$0xff]
    %v832 = vld [vmem:[#allocation2 + $0x17c8] sm:$0xff]
    %v833 = vld [vmem:[#allocation2 + $0x17d0] sm:$0xff]
    %v834 = vld [vmem:[#allocation2 + $0x17d8] sm:$0xff]
    %v835 = vld [vmem:[#allocation2 + $0x17e0] sm:$0xff]
    %v836 = vld [vmem:[#allocation2 + $0x17e8] sm:$0xff]
    %v837 = vld [vmem:[#allocation2 + $0x17f0] sm:$0xff]
    %v838 = vld [vmem:[#allocation2 + $0x17f8] sm:$0xff]
    %v839 = vld [vmem:[#allocation2 + $0x1800] sm:$0xff]
    %v840 = vld [vmem:[#allocation2 + $0x1808] sm:$0xff]
    %v841 = vld [vmem:[#allocation2 + $0x1810] sm:$0xff]
    %v842 = vld [vmem:[#allocation2 + $0x1818] sm:$0xff]
    %v843 = vld [vmem:[#allocation2 + $0x1820] sm:$0xff]
    %v844 = vld [vmem:[#allocation2 + $0x1828] sm:$0xff]
    %v845 = vld [vmem:[#allocation2 + $0x1830] sm:$0xff]
    %v846 = vld [vmem:[#allocation2 + $0x1838] sm:$0xff]
    %v847 = vld [vmem:[#allocation2 + $0x1840] sm:$0xff]
    %v848 = vld [vmem:[#allocation2 + $0x1848] sm:$0xff]
    %v849 = vld [vmem:[#allocation2 + $0x1850] sm:$0xff]
    %v850 = vld [vmem:[#allocation2 + $0x1858] sm:$0xff]
    %v851 = vld [vmem:[#allocation2 + $0x1860] sm:$0xff]
    %v852 = vld [vmem:[#allocation2 + $0x1868] sm:$0xff]
    %v853 = vld [vmem:[#allocation2 + $0x1870] sm:$0xff]
    %v854 = vld [vmem:[#allocation2 + $0x1878] sm:$0xff]
    %v855 = vld [vmem:[#allocation2 + $0x1880] sm:$0xff]
    %v856 = vld [vmem:[#allocation2 + $0x1888] sm:$0xff]
    %v857 = vld [vmem:[#allocation2 + $0x1890] sm:$0xff]
    %v858 = vld [vmem:[#allocation2 + $0x1898] sm:$0xff]
    %v859 = vld [vmem:[#allocation2 + $0x18a0] sm:$0xff]
    %v860 = vld [vmem:[#allocation2 + $0x18a8] sm:$0xff]
    %v861 = vld [vmem:[#allocation2 + $0x18b0] sm:$0xff]
    %v862 = vld [vmem:[#allocation2 + $0x18b8] sm:$0xff]
    %v863 = vld [vmem:[#allocation2 + $0x18c0] sm:$0xff]
    %v864 = vld [vmem:[#allocation2 + $0x18c8] sm:$0xff]
    %v865 = vld [vmem:[#allocation2 + $0x18d0] sm:$0xff]
    %v866 = vld [vmem:[#allocation2 + $0x18d8] sm:$0xff]
    %v867 = vld [vmem:[#allocation2 + $0x18e0] sm:$0xff]
    %v868 = vld [vmem:[#allocation2 + $0x18e8] sm:$0xff]
    %v869 = vld [vmem:[#allocation2 + $0x18f0] sm:$0xff]
    %v870 = vld [vmem:[#allocation2 + $0x18f8] sm:$0xff]
    %v871 = vld [vmem:[#allocation2 + $0x1900] sm:$0xff]
    %v872 = vld [vmem:[#allocation2 + $0x1908] sm:$0xff]
    %v873 = vld [vmem:[#allocation2 + $0x1910] sm:$0xff]
    %v874 = vld [vmem:[#allocation2 + $0x1918] sm:$0xff]
    %v875 = vld [vmem:[#allocation2 + $0x1920] sm:$0xff]
    %v876 = vld [vmem:[#allocation2 + $0x1928] sm:$0xff]
    %v877 = vld [vmem:[#allocation2 + $0x1930] sm:$0xff]
    %v878 = vld [vmem:[#allocation2 + $0x1938] sm:$0xff]
    %v879 = vld [vmem:[#allocation2 + $0x1940] sm:$0xff]
    %v880 = vld [vmem:[#allocation2 + $0x1948] sm:$0xff]
    %v881 = vld [vmem:[#allocation2 + $0x1950] sm:$0xff]
    %v882 = vld [vmem:[#allocation2 + $0x1958] sm:$0xff]
    %v883 = vld [vmem:[#allocation2 + $0x1960] sm:$0xff]
    %v884 = vld [vmem:[#allocation2 + $0x1968] sm:$0xff]
    %v885 = vld [vmem:[#allocation2 + $0x1970] sm:$0xff]
    %v886 = vld [vmem:[#allocation2 + $0x1978] sm:$0xff]
    %v887 = vld [vmem:[#allocation2 + $0x1980] sm:$0xff]
    %v888 = vld [vmem:[#allocation2 + $0x1988] sm:$0xff]
    %v889 = vld [vmem:[#allocation2 + $0x1990] sm:$0xff]
    %v890 = vld [vmem:[#allocation2 + $0x1998] sm:$0xff]
    %v891 = vld [vmem:[#allocation2 + $0x19a0] sm:$0xff]
    %v892 = vld [vmem:[#allocation2 + $0x19a8] sm:$0xff]
    %v893 = vld [vmem:[#allocation2 + $0x19b0] sm:$0xff]
    %v894 = vld [vmem:[#allocation2 + $0x19b8] sm:$0xff]
    %v895 = vld [vmem:[#allocation2 + $0x19c0] sm:$0xff]
    %v896 = vld [vmem:[#allocation2 + $0x19c8] sm:$0xff]
    %v897 = vld [vmem:[#allocation2 + $0x19d0] sm:$0xff]
    %v898 = vld [vmem:[#allocation2 + $0x19d8] sm:$0xff]
    %v899 = vld [vmem:[#allocation2 + $0x19e0] sm:$0xff]
    %v900 = vld [vmem:[#allocation2 + $0x19e8] sm:$0xff]
    %v901 = vld [vmem:[#allocation2 + $0x19f0] sm:$0xff]
    %v902 = vld [vmem:[#allocation2 + $0x19f8] sm:$0xff]
    %v903 = vld [vmem:[#allocation2 + $0x1a00] sm:$0xff]
    %v904 = vld [vmem:[#allocation2 + $0x1a08] sm:$0xff]
    %v905 = vld [vmem:[#allocation2 + $0x1a10] sm:$0xff]
    %v906 = vld [vmem:[#allocation2 + $0x1a18] sm:$0xff]
    %v907 = vld [vmem:[#allocation2 + $0x1a20] sm:$0xff]
    %v908 = vld [vmem:[#allocation2 + $0x1a28] sm:$0xff]
    %v909 = vld [vmem:[#allocation2 + $0x1a30] sm:$0xff]
    %v910 = vld [vmem:[#allocation2 + $0x1a38] sm:$0xff]
    %v911 = vld [vmem:[#allocation2 + $0x1a40] sm:$0xff]
    %v912 = vld [vmem:[#allocation2 + $0x1a48] sm:$0xff]
    %v913 = vld [vmem:[#allocation2 + $0x1a50] sm:$0xff]
    %v914 = vld [vmem:[#allocation2 + $0x1a58] sm:$0xff]
    %v915 = vld [vmem:[#allocation2 + $0x1a60] sm:$0xff]
    %v916 = vld [vmem:[#allocation2 + $0x1a68] sm:$0xff]
    %v917 = vld [vmem:[#allocation2 + $0x1a70] sm:$0xff]
    %v918 = vld [vmem:[#allocation2 + $0x1a78] sm:$0xff]
    %v919 = vld [vmem:[#allocation2 + $0x1a80] sm:$0xff]
    %v920 = vld [vmem:[#allocation2 + $0x1a88] sm:$0xff]
    %v921 = vld [vmem:[#allocation2 + $0x1a90] sm:$0xff]
    %v922 = vld [vmem:[#allocation2 + $0x1a98] sm:$0xff]
    %v923 = vld [vmem:[#allocation2 + $0x1aa0] sm:$0xff]
    %v924 = vld [vmem:[#allocation2 + $0x1aa8] sm:$0xff]
    %v925 = vld [vmem:[#allocation2 + $0x1ab0] sm:$0xff]
    %v926 = vld [vmem:[#allocation2 + $0x1ab8] sm:$0xff]
    %v927 = vld [vmem:[#allocation2 + $0x1ac0] sm:$0xff]
    %v928 = vld [vmem:[#allocation2 + $0x1ac8] sm:$0xff]
    %v929 = vld [vmem:[#allocation2 + $0x1ad0] sm:$0xff]
    %v930 = vld [vmem:[#allocation2 + $0x1ad8] sm:$0xff]
    %v931 = vld [vmem:[#allocation2 + $0x1ae0] sm:$0xff]
    %v932 = vld [vmem:[#allocation2 + $0x1ae8] sm:$0xff]
    %v933 = vld [vmem:[#allocation2 + $0x1af0] sm:$0xff]
    %v934 = vld [vmem:[#allocation2 + $0x1af8] sm:$0xff]
    %v935 = vld [vmem:[#allocation2 + $0x1b00] sm:$0xff]
    %v936 = vld [vmem:[#allocation2 + $0x1b08] sm:$0xff]
    %v937 = vld [vmem:[#allocation2 + $0x1b10] sm:$0xff]
    %v938 = vld [vmem:[#allocation2 + $0x1b18] sm:$0xff]
    %v939 = vld [vmem:[#allocation2 + $0x1b20] sm:$0xff]
    %v940 = vld [vmem:[#allocation2 + $0x1b28] sm:$0xff]
    %v941 = vld [vmem:[#allocation2 + $0x1b30] sm:$0xff]
    %v942 = vld [vmem:[#allocation2 + $0x1b38] sm:$0xff]
    %v943 = vld [vmem:[#allocation2 + $0x1b40] sm:$0xff]
    %v944 = vld [vmem:[#allocation2 + $0x1b48] sm:$0xff]
    %v945 = vld [vmem:[#allocation2 + $0x1b50] sm:$0xff]
    %v946 = vld [vmem:[#allocation2 + $0x1b58] sm:$0xff]
    %v947 = vld [vmem:[#allocation2 + $0x1b60] sm:$0xff]
    %v948 = vld [vmem:[#allocation2 + $0x1b68] sm:$0xff]
    %v949 = vld [vmem:[#allocation2 + $0x1b70] sm:$0xff]
    %v950 = vld [vmem:[#allocation2 + $0x1b78] sm:$0xff]
    %v951 = vld [vmem:[#allocation2 + $0x1b80] sm:$0xff]
    %v952 = vld [vmem:[#allocation2 + $0x1b88] sm:$0xff]
    %v953 = vld [vmem:[#allocation2 + $0x1b90] sm:$0xff]
    %v954 = vld [vmem:[#allocation2 + $0x1b98] sm:$0xff]
    %v955 = vld [vmem:[#allocation2 + $0x1ba0] sm:$0xff]
    %v956 = vld [vmem:[#allocation2 + $0x1ba8] sm:$0xff]
    %v957 = vld [vmem:[#allocation2 + $0x1bb0] sm:$0xff]
    %v958 = vld [vmem:[#allocation2 + $0x1bb8] sm:$0xff]
    %v959 = vld [vmem:[#allocation2 + $0x1bc0] sm:$0xff]
    %v960 = vld [vmem:[#allocation2 + $0x1bc8] sm:$0xff]
    %v961 = vld [vmem:[#allocation2 + $0x1bd0] sm:$0xff]
    %v962 = vld [vmem:[#allocation2 + $0x1bd8] sm:$0xff]
    %v963 = vld [vmem:[#allocation2 + $0x1be0] sm:$0xff]
    %v964 = vld [vmem:[#allocation2 + $0x1be8] sm:$0xff]
    %v965 = vld [vmem:[#allocation2 + $0x1bf0] sm:$0xff]
    %v966 = vld [vmem:[#allocation2 + $0x1bf8] sm:$0xff]
    %v967 = vld [vmem:[#allocation2 + $0x1c00] sm:$0xff]
    %v968 = vld [vmem:[#allocation2 + $0x1c08] sm:$0xff]
    %v969 = vld [vmem:[#allocation2 + $0x1c10] sm:$0xff]
    %v970 = vld [vmem:[#allocation2 + $0x1c18] sm:$0xff]
    %v971 = vld [vmem:[#allocation2 + $0x1c20] sm:$0xff]
    %v972 = vld [vmem:[#allocation2 + $0x1c28] sm:$0xff]
    %v973 = vld [vmem:[#allocation2 + $0x1c30] sm:$0xff]
    %v974 = vld [vmem:[#allocation2 + $0x1c38] sm:$0xff]
    %v975 = vld [vmem:[#allocation2 + $0x1c40] sm:$0xff]
    %v976 = vld [vmem:[#allocation2 + $0x1c48] sm:$0xff]
    %v977 = vld [vmem:[#allocation2 + $0x1c50] sm:$0xff]
    %v978 = vld [vmem:[#allocation2 + $0x1c58] sm:$0xff]
    %v979 = vld [vmem:[#allocation2 + $0x1c60] sm:$0xff]
    %v980 = vld [vmem:[#allocation2 + $0x1c68] sm:$0xff]
    %v981 = vld [vmem:[#allocation2 + $0x1c70] sm:$0xff]
    %v982 = vld [vmem:[#allocation2 + $0x1c78] sm:$0xff]
    %v983 = vld [vmem:[#allocation2 + $0x1c80] sm:$0xff]
    %v984 = vld [vmem:[#allocation2 + $0x1c88] sm:$0xff]
    %v985 = vld [vmem:[#allocation2 + $0x1c90] sm:$0xff]
    %v986 = vld [vmem:[#allocation2 + $0x1c98] sm:$0xff]
    %v987 = vld [vmem:[#allocation2 + $0x1ca0] sm:$0xff]
    %v988 = vld [vmem:[#allocation2 + $0x1ca8] sm:$0xff]
    %v989 = vld [vmem:[#allocation2 + $0x1cb0] sm:$0xff]
    %v990 = vld [vmem:[#allocation2 + $0x1cb8] sm:$0xff]
    %v991 = vld [vmem:[#allocation2 + $0x1cc0] sm:$0xff]
    %v992 = vld [vmem:[#allocation2 + $0x1cc8] sm:$0xff]
    %v993 = vld [vmem:[#allocation2 + $0x1cd0] sm:$0xff]
    %v994 = vld [vmem:[#allocation2 + $0x1cd8] sm:$0xff]
    %v995 = vld [vmem:[#allocation2 + $0x1ce0] sm:$0xff]
    %v996 = vld [vmem:[#allocation2 + $0x1ce8] sm:$0xff]
    %v997 = vld [vmem:[#allocation2 + $0x1cf0] sm:$0xff]
    %v998 = vld [vmem:[#allocation2 + $0x1cf8] sm:$0xff]
    %v999 = vld [vmem:[#allocation2 + $0x1d00] sm:$0xff]
    %v1000 = vld [vmem:[#allocation2 + $0x1d08] sm:$0xff]
    %v1001 = vld [vmem:[#allocation2 + $0x1d10] sm:$0xff]
    %v1002 = vld [vmem:[#allocation2 + $0x1d18] sm:$0xff]
    %v1003 = vld [vmem:[#allocation2 + $0x1d20] sm:$0xff]
    %v1004 = vld [vmem:[#allocation2 + $0x1d28] sm:$0xff]
    %v1005 = vld [vmem:[#allocation2 + $0x1d30] sm:$0xff]
    %v1006 = vld [vmem:[#allocation2 + $0x1d38] sm:$0xff]
    %v1007 = vld [vmem:[#allocation2 + $0x1d40] sm:$0xff]
    %v1008 = vld [vmem:[#allocation2 + $0x1d48] sm:$0xff]
    %v1009 = vld [vmem:[#allocation2 + $0x1d50] sm:$0xff]
    %v1010 = vld [vmem:[#allocation2 + $0x1d58] sm:$0xff]
    %v1011 = vld [vmem:[#allocation2 + $0x1d60] sm:$0xff]
    %v1012 = vld [vmem:[#allocation2 + $0x1d68] sm:$0xff]
    %v1013 = vld [vmem:[#allocation2 + $0x1d70] sm:$0xff]
    %v1014 = vld [vmem:[#allocation2 + $0x1d78] sm:$0xff]
    %v1015 = vld [vmem:[#allocation2 + $0x1d80] sm:$0xff]
    %v1016 = vld [vmem:[#allocation2 + $0x1d88] sm:$0xff]
    %v1017 = vld [vmem:[#allocation2 + $0x1d90] sm:$0xff]
    %v1018 = vld [vmem:[#allocation2 + $0x1d98] sm:$0xff]
    %v1019 = vld [vmem:[#allocation2 + $0x1da0] sm:$0xff]
    %v1020 = vld [vmem:[#allocation2 + $0x1da8] sm:$0xff]
    %v1021 = vld [vmem:[#allocation2 + $0x1db0] sm:$0xff]
    %v1022 = vld [vmem:[#allocation2 + $0x1db8] sm:$0xff]
    %v1023 = vld [vmem:[#allocation2 + $0x1dc0] sm:$0xff]
    %v1024 = vld [vmem:[#allocation2 + $0x1dc8] sm:$0xff]
    %v1025 = vld [vmem:[#allocation2 + $0x1dd0] sm:$0xff]
    %v1026 = vld [vmem:[#allocation2 + $0x1dd8] sm:$0xff]
    %v1027 = vld [vmem:[#allocation2 + $0x1de0] sm:$0xff]
    %v1028 = vld [vmem:[#allocation2 + $0x1de8] sm:$0xff]
    %v1029 = vld [vmem:[#allocation2 + $0x1df0] sm:$0xff]
    %v1030 = vld [vmem:[#allocation2 + $0x1df8] sm:$0xff]
    %v1031 = vld [vmem:[#allocation2 + $0x1e00] sm:$0xff]
    %v1032 = vld [vmem:[#allocation2 + $0x1e08] sm:$0xff]
    %v1033 = vld [vmem:[#allocation2 + $0x1e10] sm:$0xff]
    %v1034 = vld [vmem:[#allocation2 + $0x1e18] sm:$0xff]
    %v1035 = vld [vmem:[#allocation2 + $0x1e20] sm:$0xff]
    %v1036 = vld [vmem:[#allocation2 + $0x1e28] sm:$0xff]
    %v1037 = vld [vmem:[#allocation2 + $0x1e30] sm:$0xff]
    %v1038 = vld [vmem:[#allocation2 + $0x1e38] sm:$0xff]
    %v1039 = vld [vmem:[#allocation2 + $0x1e40] sm:$0xff]
    %v1040 = vld [vmem:[#allocation2 + $0x1e48] sm:$0xff]
    %v1041 = vld [vmem:[#allocation2 + $0x1e50] sm:$0xff]
    %v1042 = vld [vmem:[#allocation2 + $0x1e58] sm:$0xff]
    %v1043 = vld [vmem:[#allocation2 + $0x1e60] sm:$0xff]
    %v1044 = vld [vmem:[#allocation2 + $0x1e68] sm:$0xff]
    %v1045 = vld [vmem:[#allocation2 + $0x1e70] sm:$0xff]
    %v1046 = vld [vmem:[#allocation2 + $0x1e78] sm:$0xff]
    %v1047 = vld [vmem:[#allocation2 + $0x1e80] sm:$0xff]
    %v1048 = vld [vmem:[#allocation2 + $0x1e88] sm:$0xff]
    %v1049 = vld [vmem:[#allocation2 + $0x1e90] sm:$0xff]
    %v1050 = vld [vmem:[#allocation2 + $0x1e98] sm:$0xff]
    %v1051 = vld [vmem:[#allocation2 + $0x1ea0] sm:$0xff]
    %v1052 = vld [vmem:[#allocation2 + $0x1ea8] sm:$0xff]
    %v1053 = vld [vmem:[#allocation2 + $0x1eb0] sm:$0xff]
    %v1054 = vld [vmem:[#allocation2 + $0x1eb8] sm:$0xff]
    %v1055 = vld [vmem:[#allocation2 + $0x1ec0] sm:$0xff]
    %v1056 = vld [vmem:[#allocation2 + $0x1ec8] sm:$0xff]
    %v1057 = vld [vmem:[#allocation2 + $0x1ed0] sm:$0xff]
    %v1058 = vld [vmem:[#allocation2 + $0x1ed8] sm:$0xff]
    %v1059 = vld [vmem:[#allocation2 + $0x1ee0] sm:$0xff]
    %v1060 = vld [vmem:[#allocation2 + $0x1ee8] sm:$0xff]
    %v1061 = vld [vmem:[#allocation2 + $0x1ef0] sm:$0xff]
    %v1062 = vld [vmem:[#allocation2 + $0x1ef8] sm:$0xff]
    %v1063 = vld [vmem:[#allocation2 + $0x1f00] sm:$0xff]
    %v1064 = vld [vmem:[#allocation2 + $0x1f08] sm:$0xff]
    %v1065 = vld [vmem:[#allocation2 + $0x1f10] sm:$0xff]
    %v1066 = vld [vmem:[#allocation2 + $0x1f18] sm:$0xff]
    %v1067 = vld [vmem:[#allocation2 + $0x1f20] sm:$0xff]
    %v1068 = vld [vmem:[#allocation2 + $0x1f28] sm:$0xff]
    %v1069 = vld [vmem:[#allocation2 + $0x1f30] sm:$0xff]
    %v1070 = vld [vmem:[#allocation2 + $0x1f38] sm:$0xff]
    %v1071 = vld [vmem:[#allocation2 + $0x1f40] sm:$0xff]
    %v1072 = vld [vmem:[#allocation2 + $0x1f48] sm:$0xff]
    %v1073 = vld [vmem:[#allocation2 + $0x1f50] sm:$0xff]
    %v1074 = vld [vmem:[#allocation2 + $0x1f58] sm:$0xff]
    %v1075 = vld [vmem:[#allocation2 + $0x1f60] sm:$0xff]
    %v1076 = vld [vmem:[#allocation2 + $0x1f68] sm:$0xff]
    %v1077 = vld [vmem:[#allocation2 + $0x1f70] sm:$0xff]
    %v1078 = vld [vmem:[#allocation2 + $0x1f78] sm:$0xff]
    %v1079 = vld [vmem:[#allocation2 + $0x1f80] sm:$0xff]
    %v1080 = vld [vmem:[#allocation2 + $0x1f88] sm:$0xff]
    %v1081 = vld [vmem:[#allocation2 + $0x1f90] sm:$0xff]
    %v1082 = vld [vmem:[#allocation2 + $0x1f98] sm:$0xff]
    %v1083 = vld [vmem:[#allocation2 + $0x1fa0] sm:$0xff]
    %v1084 = vld [vmem:[#allocation2 + $0x1fa8] sm:$0xff]
    %v1085 = vld [vmem:[#allocation2 + $0x1fb0] sm:$0xff]
    %v1086 = vld [vmem:[#allocation2 + $0x1fb8] sm:$0xff]
    %v1087 = vld [vmem:[#allocation2 + $0x1fc0] sm:$0xff]
    %v1088 = vld [vmem:[#allocation2 + $0x1fc8] sm:$0xff]
    %v1089 = vld [vmem:[#allocation2 + $0x1fd0] sm:$0xff]
    %v1090 = vld [vmem:[#allocation2 + $0x1fd8] sm:$0xff]
    %v1091 = vld [vmem:[#allocation2 + $0x1fe0] sm:$0xff]
    %v1092 = vld [vmem:[#allocation2 + $0x1fe8] sm:$0xff]
    %v1093 = vld [vmem:[#allocation2 + $0x1ff0] sm:$0xff]
    %v1094 = vld [vmem:[#allocation2 + $0x1ff8] sm:$0xff]
    %v1095 = vld [vmem:[#allocation2 + $0x2000] sm:$0xff]
    %v1096 = vld [vmem:[#allocation2 + $0x2008] sm:$0xff]
    %v1097 = vld [vmem:[#allocation2 + $0x2010] sm:$0xff]
    %v1098 = vld [vmem:[#allocation2 + $0x2018] sm:$0xff]
    %v1099 = vld [vmem:[#allocation2 + $0x2020] sm:$0xff]
    %v1100 = vld [vmem:[#allocation2 + $0x2028] sm:$0xff]
    %v1101 = vld [vmem:[#allocation2 + $0x2030] sm:$0xff]
    %v1102 = vld [vmem:[#allocation2 + $0x2038] sm:$0xff]
    %v1103 = vld [vmem:[#allocation2 + $0x2040] sm:$0xff]
    %v1104 = vld [vmem:[#allocation2 + $0x2048] sm:$0xff]
    %v1105 = vld [vmem:[#allocation2 + $0x2050] sm:$0xff]
    %v1106 = vld [vmem:[#allocation2 + $0x2058] sm:$0xff]
    %v1107 = vld [vmem:[#allocation2 + $0x2060] sm:$0xff]
    %v1108 = vld [vmem:[#allocation2 + $0x2068] sm:$0xff]
    %v1109 = vld [vmem:[#allocation2 + $0x2070] sm:$0xff]
    %v1110 = vld [vmem:[#allocation2 + $0x2078] sm:$0xff]
    %v1111 = vld [vmem:[#allocation2 + $0x2080] sm:$0xff]
    %v1112 = vld [vmem:[#allocation2 + $0x2088] sm:$0xff]
    %v1113 = vld [vmem:[#allocation2 + $0x2090] sm:$0xff]
    %v1114 = vld [vmem:[#allocation2 + $0x2098] sm:$0xff]
    %v1115 = vld [vmem:[#allocation2 + $0x20a0] sm:$0xff]
    %v1116 = vld [vmem:[#allocation2 + $0x20a8] sm:$0xff]
    %v1117 = vld [vmem:[#allocation2 + $0x20b0] sm:$0xff]
    %v1118 = vld [vmem:[#allocation2 + $0x20b8] sm:$0xff]
    %v1119 = vld [vmem:[#allocation2 + $0x20c0] sm:$0xff]
    %v1120 = vld [vmem:[#allocation2 + $0x20c8] sm:$0xff]
    %v1121 = vld [vmem:[#allocation2 + $0x20d0] sm:$0xff]
    %v1122 = vld [vmem:[#allocation2 + $0x20d8] sm:$0xff]
    %v1123 = vld [vmem:[#allocation2 + $0x20e0] sm:$0xff]
    %v1124 = vld [vmem:[#allocation2 + $0x20e8] sm:$0xff]
    %v1125 = vld [vmem:[#allocation2 + $0x20f0] sm:$0xff]
    %v1126 = vld [vmem:[#allocation2 + $0x20f8] sm:$0xff]
    %v1127 = vld [vmem:[#allocation2 + $0x2100] sm:$0xff]
    %v1128 = vld [vmem:[#allocation2 + $0x2108] sm:$0xff]
    %v1129 = vld [vmem:[#allocation2 + $0x2110] sm:$0xff]
    %v1130 = vld [vmem:[#allocation2 + $0x2118] sm:$0xff]
    %v1131 = vld [vmem:[#allocation2 + $0x2120] sm:$0xff]
    %v1132 = vld [vmem:[#allocation2 + $0x2128] sm:$0xff]
    %v1133 = vld [vmem:[#allocation2 + $0x2130] sm:$0xff]
    %v1134 = vld [vmem:[#allocation2 + $0x2138] sm:$0xff]
    %v1135 = vld [vmem:[#allocation2 + $0x2140] sm:$0xff]
    %v1136 = vld [vmem:[#allocation2 + $0x2148] sm:$0xff]
    %v1137 = vld [vmem:[#allocation2 + $0x2150] sm:$0xff]
    %v1138 = vld [vmem:[#allocation2 + $0x2158] sm:$0xff]
    %v1139 = vld [vmem:[#allocation2 + $0x2160] sm:$0xff]
    %v1140 = vld [vmem:[#allocation2 + $0x2168] sm:$0xff]
    %v1141 = vld [vmem:[#allocation2 + $0x2170] sm:$0xff]
    %v1142 = vld [vmem:[#allocation2 + $0x2178] sm:$0xff]
    %v1143 = vld [vmem:[#allocation2 + $0x2180] sm:$0xff]
    %v1144 = vld [vmem:[#allocation2 + $0x2188] sm:$0xff]
    %v1145 = vld [vmem:[#allocation2 + $0x2190] sm:$0xff]
    %v1146 = vld [vmem:[#allocation2 + $0x2198] sm:$0xff]
    %v1147 = vld [vmem:[#allocation2 + $0x21a0] sm:$0xff]
    %v1148 = vld [vmem:[#allocation2 + $0x21a8] sm:$0xff]
    %v1149 = vld [vmem:[#allocation2 + $0x21b0] sm:$0xff]
    %v1150 = vld [vmem:[#allocation2 + $0x21b8] sm:$0xff]
    %v1151 = vld [vmem:[#allocation2 + $0x21c0] sm:$0xff]
    %v1152 = vld [vmem:[#allocation2 + $0x21c8] sm:$0xff]
    %v1153 = vld [vmem:[#allocation2 + $0x21d0] sm:$0xff]
    %v1154 = vld [vmem:[#allocation2 + $0x21d8] sm:$0xff]
    %v1155 = vld [vmem:[#allocation2 + $0x21e0] sm:$0xff]
    %v1156 = vld [vmem:[#allocation2 + $0x21e8] sm:$0xff]
    %v1157 = vld [vmem:[#allocation2 + $0x21f0] sm:$0xff]
    %v1158 = vld [vmem:[#allocation2 + $0x21f8] sm:$0xff]
    %v1159 = vld [vmem:[#allocation2 + $0x2200] sm:$0xff]
    %v1160 = vld [vmem:[#allocation2 + $0x2208] sm:$0xff]
    %v1161 = vld [vmem:[#allocation2 + $0x2210] sm:$0xff]
    %v1162 = vld [vmem:[#allocation2 + $0x2218] sm:$0xff]
    %v1163 = vld [vmem:[#allocation2 + $0x2220] sm:$0xff]
    %v1164 = vld [vmem:[#allocation2 + $0x2228] sm:$0xff]
    %v1165 = vld [vmem:[#allocation2 + $0x2230] sm:$0xff]
    %v1166 = vld [vmem:[#allocation2 + $0x2238] sm:$0xff]
    %v1167 = vld [vmem:[#allocation2 + $0x2240] sm:$0xff]
    %v1168 = vld [vmem:[#allocation2 + $0x2248] sm:$0xff]
    %v1169 = vld [vmem:[#allocation2 + $0x2250] sm:$0xff]
    %v1170 = vld [vmem:[#allocation2 + $0x2258] sm:$0xff]
    %v1171 = vld [vmem:[#allocation2 + $0x2260] sm:$0xff]
    %v1172 = vld [vmem:[#allocation2 + $0x2268] sm:$0xff]
    %v1173 = vld [vmem:[#allocation2 + $0x2270] sm:$0xff]
    %v1174 = vld [vmem:[#allocation2 + $0x2278] sm:$0xff]
    %v1175 = vld [vmem:[#allocation2 + $0x2280] sm:$0xff]
    %v1176 = vld [vmem:[#allocation2 + $0x2288] sm:$0xff]
    %v1177 = vld [vmem:[#allocation2 + $0x2290] sm:$0xff]
    %v1178 = vld [vmem:[#allocation2 + $0x2298] sm:$0xff]
    %v1179 = vld [vmem:[#allocation2 + $0x22a0] sm:$0xff]
    %v1180 = vld [vmem:[#allocation2 + $0x22a8] sm:$0xff]
    %v1181 = vld [vmem:[#allocation2 + $0x22b0] sm:$0xff]
    %v1182 = vld [vmem:[#allocation2 + $0x22b8] sm:$0xff]
    %v1183 = vld [vmem:[#allocation2 + $0x22c0] sm:$0xff]
    %v1184 = vld [vmem:[#allocation2 + $0x22c8] sm:$0xff]
    %v1185 = vld [vmem:[#allocation2 + $0x22d0] sm:$0xff]
    %v1186 = vld [vmem:[#allocation2 + $0x22d8] sm:$0xff]
    %v1187 = vld [vmem:[#allocation2 + $0x22e0] sm:$0xff]
    %v1188 = vld [vmem:[#allocation2 + $0x22e8] sm:$0xff]
    %v1189 = vld [vmem:[#allocation2 + $0x22f0] sm:$0xff]
    %v1190 = vld [vmem:[#allocation2 + $0x22f8] sm:$0xff]
    %v1191 = vld [vmem:[#allocation2 + $0x2300] sm:$0xff]
    %v1192 = vld [vmem:[#allocation2 + $0x2308] sm:$0xff]
    %v1193 = vld [vmem:[#allocation2 + $0x2310] sm:$0xff]
    %v1194 = vld [vmem:[#allocation2 + $0x2318] sm:$0xff]
    %v1195 = vld [vmem:[#allocation2 + $0x2320] sm:$0xff]
    %v1196 = vld [vmem:[#allocation2 + $0x2328] sm:$0xff]
    %v1197 = vld [vmem:[#allocation2 + $0x2330] sm:$0xff]
    %v1198 = vld [vmem:[#allocation2 + $0x2338] sm:$0xff]
    %v1199 = vld [vmem:[#allocation2 + $0x2340] sm:$0xff]
    %v1200 = vld [vmem:[#allocation2 + $0x2348] sm:$0xff]
    %v1201 = vld [vmem:[#allocation2 + $0x2350] sm:$0xff]
    %v1202 = vld [vmem:[#allocation2 + $0x2358] sm:$0xff]
    %v1203 = vld [vmem:[#allocation2 + $0x2360] sm:$0xff]
    %v1204 = vld [vmem:[#allocation2 + $0x2368] sm:$0xff]
    %v1205 = vld [vmem:[#allocation2 + $0x2370] sm:$0xff]
    %v1206 = vld [vmem:[#allocation2 + $0x2378] sm:$0xff]
    %v1207 = vld [vmem:[#allocation2 + $0x2380] sm:$0xff]
    %v1208 = vld [vmem:[#allocation2 + $0x2388] sm:$0xff]
    %v1209 = vld [vmem:[#allocation2 + $0x2390] sm:$0xff]
    %v1210 = vld [vmem:[#allocation2 + $0x2398] sm:$0xff]
    %v1211 = vld [vmem:[#allocation2 + $0x23a0] sm:$0xff]
    %v1212 = vld [vmem:[#allocation2 + $0x23a8] sm:$0xff]
    %v1213 = vld [vmem:[#allocation2 + $0x23b0] sm:$0xff]
    %v1214 = vld [vmem:[#allocation2 + $0x23b8] sm:$0xff]
    %v1215 = vld [vmem:[#allocation2 + $0x23c0] sm:$0xff]
    %v1216 = vld [vmem:[#allocation2 + $0x23c8] sm:$0xff]
    %v1217 = vld [vmem:[#allocation2 + $0x23d0] sm:$0xff]
    %v1218 = vld [vmem:[#allocation2 + $0x23d8] sm:$0xff]
    %v1219 = vld [vmem:[#allocation2 + $0x23e0] sm:$0xff]
    %v1220 = vld [vmem:[#allocation2 + $0x23e8] sm:$0xff]
    %v1221 = vld [vmem:[#allocation2 + $0x23f0] sm:$0xff]
    %v1222 = vld [vmem:[#allocation2 + $0x23f8] sm:$0xff]
    %v1223 = vld [vmem:[#allocation2 + $0x2400] sm:$0xff]
    %v1224 = vld [vmem:[#allocation2 + $0x2408] sm:$0xff]
    %v1225 = vld [vmem:[#allocation2 + $0x2410] sm:$0xff]
    %v1226 = vld [vmem:[#allocation2 + $0x2418] sm:$0xff]
    %v1227 = vld [vmem:[#allocation2 + $0x2420] sm:$0xff]
    %v1228 = vld [vmem:[#allocation2 + $0x2428] sm:$0xff]
    %v1229 = vld [vmem:[#allocation2 + $0x2430] sm:$0xff]
    %v1230 = vld [vmem:[#allocation2 + $0x2438] sm:$0xff]
    %v1231 = vld [vmem:[#allocation2 + $0x2440] sm:$0xff]
    %v1232 = vld [vmem:[#allocation2 + $0x2448] sm:$0xff]
    %v1233 = vld [vmem:[#allocation2 + $0x2450] sm:$0xff]
    %v1234 = vld [vmem:[#allocation2 + $0x2458] sm:$0xff]
    %v1235 = vld [vmem:[#allocation2 + $0x2460] sm:$0xff]
    %v1236 = vld [vmem:[#allocation2 + $0x2468] sm:$0xff]
    %v1237 = vld [vmem:[#allocation2 + $0x2470] sm:$0xff]
    %v1238 = vld [vmem:[#allocation2 + $0x2478] sm:$0xff]
    %v1239 = vld [vmem:[#allocation2 + $0x2480] sm:$0xff]
    %v1240 = vld [vmem:[#allocation2 + $0x2488] sm:$0xff]
    %v1241 = vld [vmem:[#allocation2 + $0x2490] sm:$0xff]
    %v1242 = vld [vmem:[#allocation2 + $0x2498] sm:$0xff]
    %v1243 = vld [vmem:[#allocation2 + $0x24a0] sm:$0xff]
    %v1244 = vld [vmem:[#allocation2 + $0x24a8] sm:$0xff]
    %v1245 = vld [vmem:[#allocation2 + $0x24b0] sm:$0xff]
    %v1246 = vld [vmem:[#allocation2 + $0x24b8] sm:$0xff]
    %v1247 = vld [vmem:[#allocation2 + $0x24c0] sm:$0xff]
    %v1248 = vld [vmem:[#allocation2 + $0x24c8] sm:$0xff]
    %v1249 = vld [vmem:[#allocation2 + $0x24d0] sm:$0xff]
    %v1250 = vld [vmem:[#allocation2 + $0x24d8] sm:$0xff]
    %v1251 = vld [vmem:[#allocation2 + $0x24e0] sm:$0xff]
    %v1252 = vld [vmem:[#allocation2 + $0x24e8] sm:$0xff]
    %v1253 = vld [vmem:[#allocation2 + $0x24f0] sm:$0xff]
    %v1254 = vld [vmem:[#allocation2 + $0x24f8] sm:$0xff]
    %v1255 = vld [vmem:[#allocation2 + $0x2500] sm:$0xff]
    %v1256 = vld [vmem:[#allocation2 + $0x2508] sm:$0xff]
    %v1257 = vld [vmem:[#allocation2 + $0x2510] sm:$0xff]
    %v1258 = vld [vmem:[#allocation2 + $0x2518] sm:$0xff]
    %v1259 = vld [vmem:[#allocation2 + $0x2520] sm:$0xff]
    %v1260 = vld [vmem:[#allocation2 + $0x2528] sm:$0xff]
    %v1261 = vld [vmem:[#allocation2 + $0x2530] sm:$0xff]
    %v1262 = vld [vmem:[#allocation2 + $0x2538] sm:$0xff]
    %v1263 = vld [vmem:[#allocation2 + $0x2540] sm:$0xff]
    %v1264 = vld [vmem:[#allocation2 + $0x2548] sm:$0xff]
    %v1265 = vld [vmem:[#allocation2 + $0x2550] sm:$0xff]
    %v1266 = vld [vmem:[#allocation2 + $0x2558] sm:$0xff]
    %v1267 = vld [vmem:[#allocation2 + $0x2560] sm:$0xff]
    %v1268 = vld [vmem:[#allocation2 + $0x2568] sm:$0xff]
    %v1269 = vld [vmem:[#allocation2 + $0x2570] sm:$0xff]
    %v1270 = vld [vmem:[#allocation2 + $0x2578] sm:$0xff]
    %v1271 = vld [vmem:[#allocation2 + $0x2580] sm:$0xff]
    %v1272 = vld [vmem:[#allocation2 + $0x2588] sm:$0xff]
    %v1273 = vld [vmem:[#allocation2 + $0x2590] sm:$0xff]
    %v1274 = vld [vmem:[#allocation2 + $0x2598] sm:$0xff]
    %v1275 = vld [vmem:[#allocation2 + $0x25a0] sm:$0xff]
    %v1276 = vld [vmem:[#allocation2 + $0x25a8] sm:$0xff]
    %v1277 = vld [vmem:[#allocation2 + $0x25b0] sm:$0xff]
    %v1278 = vld [vmem:[#allocation2 + $0x25b8] sm:$0xff]
    %v1279 = vld [vmem:[#allocation2 + $0x25c0] sm:$0xff]
    %v1280 = vld [vmem:[#allocation2 + $0x25c8] sm:$0xff]
    %v1281 = vld [vmem:[#allocation2 + $0x25d0] sm:$0xff]
    %v1282 = vld [vmem:[#allocation2 + $0x25d8] sm:$0xff]
    %v1283 = vld [vmem:[#allocation2 + $0x25e0] sm:$0xff]
    %v1284 = vld [vmem:[#allocation2 + $0x25e8] sm:$0xff]
    %v1285 = vld [vmem:[#allocation2 + $0x25f0] sm:$0xff]
    %v1286 = vld [vmem:[#allocation2 + $0x25f8] sm:$0xff]
    %v1287 = vld [vmem:[#allocation2 + $0x2600] sm:$0xff]
    %v1288 = vld [vmem:[#allocation2 + $0x2608] sm:$0xff]
    %v1289 = vld [vmem:[#allocation2 + $0x2610] sm:$0xff]
    %v1290 = vld [vmem:[#allocation2 + $0x2618] sm:$0xff]
    %v1291 = vld [vmem:[#allocation2 + $0x2620] sm:$0xff]
    %v1292 = vld [vmem:[#allocation2 + $0x2628] sm:$0xff]
    %v1293 = vld [vmem:[#allocation2 + $0x2630] sm:$0xff]
    %v1294 = vld [vmem:[#allocation2 + $0x2638] sm:$0xff]
    %v1295 = vld [vmem:[#allocation2 + $0x2640] sm:$0xff]
    %v1296 = vld [vmem:[#allocation2 + $0x2648] sm:$0xff]
    %v1297 = vld [vmem:[#allocation2 + $0x2650] sm:$0xff]
    %v1298 = vld [vmem:[#allocation2 + $0x2658] sm:$0xff]
    %v1299 = vld [vmem:[#allocation2 + $0x2660] sm:$0xff]
    %v1300 = vld [vmem:[#allocation2 + $0x2668] sm:$0xff]
    %v1301 = vld [vmem:[#allocation2 + $0x2670] sm:$0xff]
    %v1302 = vld [vmem:[#allocation2 + $0x2678] sm:$0xff]
    %v1303 = vld [vmem:[#allocation2 + $0x2680] sm:$0xff]
    %v1304 = vld [vmem:[#allocation2 + $0x2688] sm:$0xff]
    %v1305 = vld [vmem:[#allocation2 + $0x2690] sm:$0xff]
    %v1306 = vld [vmem:[#allocation2 + $0x2698] sm:$0xff]
    %v1307 = vld [vmem:[#allocation2 + $0x26a0] sm:$0xff]
    %v1308 = vld [vmem:[#allocation2 + $0x26a8] sm:$0xff]
    %v1309 = vld [vmem:[#allocation2 + $0x26b0] sm:$0xff]
    %v1310 = vld [vmem:[#allocation2 + $0x26b8] sm:$0xff]
    %v1311 = vld [vmem:[#allocation2 + $0x26c0] sm:$0xff]
    %v1312 = vld [vmem:[#allocation2 + $0x26c8] sm:$0xff]
    %v1313 = vld [vmem:[#allocation2 + $0x26d0] sm:$0xff]
    %v1314 = vld [vmem:[#allocation2 + $0x26d8] sm:$0xff]
    %v1315 = vld [vmem:[#allocation2 + $0x26e0] sm:$0xff]
    %v1316 = vld [vmem:[#allocation2 + $0x26e8] sm:$0xff]
    %v1317 = vld [vmem:[#allocation2 + $0x26f0] sm:$0xff]
    %v1318 = vld [vmem:[#allocation2 + $0x26f8] sm:$0xff]
    %v1319 = vld [vmem:[#allocation2 + $0x2700] sm:$0xff]
    %v1320 = vld [vmem:[#allocation2 + $0x2708] sm:$0xff]
    %v1321 = vld [vmem:[#allocation2 + $0x2710] sm:$0xff]
    %v1322 = vld [vmem:[#allocation2 + $0x2718] sm:$0xff]
    %v1323 = vld [vmem:[#allocation2 + $0x2720] sm:$0xff]
    %v1324 = vld [vmem:[#allocation2 + $0x2728] sm:$0xff]
    %v1325 = vld [vmem:[#allocation2 + $0x2730] sm:$0xff]
    %v1326 = vld [vmem:[#allocation2 + $0x2738] sm:$0xff]
    %v1327 = vld [vmem:[#allocation2 + $0x2740] sm:$0xff]
    %v1328 = vld [vmem:[#allocation2 + $0x2748] sm:$0xff]
    %v1329 = vld [vmem:[#allocation2 + $0x2750] sm:$0xff]
    %v1330 = vld [vmem:[#allocation2 + $0x2758] sm:$0xff]
    %v1331 = vld [vmem:[#allocation2 + $0x2760] sm:$0xff]
    %v1332 = vld [vmem:[#allocation2 + $0x2768] sm:$0xff]
    %v1333 = vld [vmem:[#allocation2 + $0x2770] sm:$0xff]
    %v1334 = vld [vmem:[#allocation2 + $0x2778] sm:$0xff]
    %v1335 = vld [vmem:[#allocation2 + $0x2780] sm:$0xff]
    %v1336 = vld [vmem:[#allocation2 + $0x2788] sm:$0xff]
    %v1337 = vld [vmem:[#allocation2 + $0x2790] sm:$0xff]
    %v1338 = vld [vmem:[#allocation2 + $0x2798] sm:$0xff]
    %v1339 = vld [vmem:[#allocation2 + $0x27a0] sm:$0xff]
    %v1340 = vld [vmem:[#allocation2 + $0x27a8] sm:$0xff]
    %v1341 = vld [vmem:[#allocation2 + $0x27b0] sm:$0xff]
    %v1342 = vld [vmem:[#allocation2 + $0x27b8] sm:$0xff]
    %v1343 = vld [vmem:[#allocation2 + $0x27c0] sm:$0xff]
    %v1344 = vld [vmem:[#allocation2 + $0x27c8] sm:$0xff]
    %v1345 = vld [vmem:[#allocation2 + $0x27d0] sm:$0xff]
    %v1346 = vld [vmem:[#allocation2 + $0x27d8] sm:$0xff]
    %v1347 = vld [vmem:[#allocation2 + $0x27e0] sm:$0xff]
    %v1348 = vld [vmem:[#allocation2 + $0x27e8] sm:$0xff]
    %v1349 = vld [vmem:[#allocation2 + $0x27f0] sm:$0xff]
    %v1350 = vld [vmem:[#allocation2 + $0x27f8] sm:$0xff]
    %v1351 = vld [vmem:[#allocation2 + $0x2800] sm:$0xff]
    %v1352 = vld [vmem:[#allocation2 + $0x2808] sm:$0xff]
    %v1353 = vld [vmem:[#allocation2 + $0x2810] sm:$0xff]
    %v1354 = vld [vmem:[#allocation2 + $0x2818] sm:$0xff]
    %v1355 = vld [vmem:[#allocation2 + $0x2820] sm:$0xff]
    %v1356 = vld [vmem:[#allocation2 + $0x2828] sm:$0xff]
    %v1357 = vld [vmem:[#allocation2 + $0x2830] sm:$0xff]
    %v1358 = vld [vmem:[#allocation2 + $0x2838] sm:$0xff]
    %v1359 = vld [vmem:[#allocation2 + $0x2840] sm:$0xff]
    %v1360 = vld [vmem:[#allocation2 + $0x2848] sm:$0xff]
    %v1361 = vld [vmem:[#allocation2 + $0x2850] sm:$0xff]
    %v1362 = vld [vmem:[#allocation2 + $0x2858] sm:$0xff]
    %v1363 = vld [vmem:[#allocation2 + $0x2860] sm:$0xff]
    %v1364 = vld [vmem:[#allocation2 + $0x2868] sm:$0xff]
    %v1365 = vld [vmem:[#allocation2 + $0x2870] sm:$0xff]
    %v1366 = vld [vmem:[#allocation2 + $0x2878] sm:$0xff]
    %v1367 = vld [vmem:[#allocation2 + $0x2880] sm:$0xff]
    %v1368 = vld [vmem:[#allocation2 + $0x2888] sm:$0xff]
    %v1369 = vld [vmem:[#allocation2 + $0x2890] sm:$0xff]
    %v1370 = vld [vmem:[#allocation2 + $0x2898] sm:$0xff]
    %v1371 = vld [vmem:[#allocation4] sm:$0xff]
    %v1372 = vld [vmem:[#allocation4 + $0x8] sm:$0x1f]
    %v1375 = vlaneseq
    %v1376 = vshrl.u32 %v1375, 7
    %v1377 = vsub.s32 0, %v1376
    %v1378 = vrot.slane %v1371, %v1377
    %v1379 = vlaneseq
    %v1380 = vshrl.u32 %v1379, 7
    %v1381 = vsub.s32 1, %v1380
    %v1382 = vrot.slane %v1371, %v1381
    %v1383 = vlaneseq
    %v1384 = vshrl.u32 %v1383, 7
    %v1385 = vsub.s32 2, %v1384
    %v1386 = vrot.slane %v1371, %v1385
    %v1387 = vlaneseq
    %v1388 = vshrl.u32 %v1387, 7
    %v1389 = vsub.s32 3, %v1388
    %v1390 = vrot.slane %v1371, %v1389
    %v1391 = vlaneseq
    %v1392 = vshrl.u32 %v1391, 7
    %v1393 = vsub.s32 4, %v1392
    %v1394 = vrot.slane %v1371, %v1393
    %v1395 = vlaneseq
    %v1396 = vshrl.u32 %v1395, 7
    %v1397 = vsub.s32 5, %v1396
    %v1398 = vrot.slane %v1371, %v1397
    %v1399 = vlaneseq
    %v1400 = vshrl.u32 %v1399, 7
    %v1401 = vsub.s32 6, %v1400
    %v1402 = vrot.slane %v1371, %v1401
    %v1403 = vlaneseq
    %v1404 = vshrl.u32 %v1403, 7
    %v1405 = vsub.s32 7, %v1404
    %v1406 = vrot.slane %v1371, %v1405
    %v1407 = vlaneseq
    %v1408 = vshrl.u32 %v1407, 7
    %v1409 = vsub.s32 0, %v1408
    %v1410 = vrot.slane %v1372, %v1409
    %v1411 = vlaneseq
    %v1412 = vshrl.u32 %v1411, 7
    %v1413 = vsub.s32 1, %v1412
    %v1414 = vrot.slane %v1372, %v1413
    %v1415 = vlaneseq
    %v1416 = vshrl.u32 %v1415, 7
    %v1417 = vsub.s32 2, %v1416
    %v1418 = vrot.slane %v1372, %v1417
    %v1419 = vlaneseq
    %v1420 = vshrl.u32 %v1419, 7
    %v1421 = vsub.s32 3, %v1420
    %v1422 = vrot.slane %v1372, %v1421
    %v1423 = vlaneseq
    %v1424 = vshrl.u32 %v1423, 7
    %v1425 = vsub.s32 4, %v1424
    %v1426 = vrot.slane %v1372, %v1425
    %vm1440 = vcmask 261120
    %v1442 = vsel %vm1440, %v63, 0
    %v1445 = vsel %vm1440, %v70, 0
    %1447 = vmatprep.subr.mxu0 %v72
    %1448 = vmatpush1.msra.mxu0 %v71
    %1449 = vmatprep.subr.mxu0 %v85
    %1450 = vmatpush1.msra.mxu0 %v84
    %1451 = vmatprep.subr.mxu0 %v98
    %1452 = vmatpush1.msra.mxu0 %v97
    %1453 = vmatprep.subr.mxu0 %v111
    %1454 = vmatpush1.msra.mxu0 %v110
    %1455 = vmatprep.subr.mxu0 %v124
    %1456 = vmatpush1.msra.mxu0 %v123
    %1457 = vmatprep.subr.mxu0 %v137
    %1458 = vmatpush1.msra.mxu0 %v136
    %1459 = vmatprep.subr.mxu0 %v150
    %1460 = vmatpush1.msra.mxu0 %v149
    %1461 = vmatprep.subr.mxu0 %v163
    %1462 = vmatpush1.msra.mxu0 %v162
    %1463 = vmatprep.subr.mxu0 %v176
    %1464 = vmatpush1.msra.mxu0 %v175
    %1465 = vmatprep.subr.mxu0 %v189
    %1466 = vmatpush1.msra.mxu0 %v188
    %1467 = vmatprep.subr.mxu0 %v202
    %1468 = vmatpush1.msra.mxu0 %v201
    %1469 = vmatprep.subr.mxu0 %v215
    %1470 = vmatpush1.msra.mxu0 %v214
    %1471 = vmatprep.subr.mxu0 %v228
    %1472 = vmatpush1.msra.mxu0 %v227
    %1473 = vmatprep.subr.mxu0 %v241
    %1474 = vmatpush1.msra.mxu0 %v240
    %1475 = vmatprep.subr.mxu0 %v254
    %1476 = vmatpush1.msra.mxu0 %v253
    %1477 = vmatprep.subr.mxu0 %v267
    %1478 = vmatpush1.msra.mxu0 %v266
    %1479 = vmatprep.subr.mxu0 %v280
    %1480 = vmatpush1.msra.mxu0 %v279
    %1481 = vmatprep.subr.mxu0 %v293
    %1482 = vmatpush1.msra.mxu0 %v292
    %1483 = vmatprep.subr.mxu0 %v306
    %1484 = vmatpush1.msra.mxu0 %v305
    %1485 = vmatprep.subr.mxu0 %v319
    %1486 = vmatpush1.msra.mxu0 %v318
    %1487 = vmatprep.subr.mxu0 %v332
    %1488 = vmatpush1.msra.mxu0 %v331
    %1489 = vmatprep.subr.mxu0 %v345
    %1490 = vmatpush1.msra.mxu0 %v344
    %1491 = vmatprep.subr.mxu0 %v358
    %1492 = vmatpush1.msra.mxu0 %v357
    %1493 = vmatprep.subr.mxu0 %v371
    %1494 = vmatpush1.msra.mxu0 %v370
    %1495 = vmatprep.subr.mxu0 %v384
    %1496 = vmatpush1.msra.mxu0 %v383
    %1497 = vmatprep.subr.mxu0 %v397
    %1498 = vmatpush1.msra.mxu0 %v396
    %1499 = vmatprep.subr.mxu0 %v410
    %1500 = vmatpush1.msra.mxu0 %v409
    %1501 = vmatprep.subr.mxu0 %v423
    %1502 = vmatpush1.msra.mxu0 %v422
    %1503 = vmatprep.subr.mxu0 %v436
    %1504 = vmatpush1.msra.mxu0 %v435
    %1505 = vmatprep.subr.mxu0 %v449
    %1506 = vmatpush1.msra.mxu0 %v448
    %1507 = vmatprep.subr.mxu0 %v462
    %1508 = vmatpush1.msra.mxu0 %v461
    %1509 = vmatprep.subr.mxu0 %v475
    %1510 = vmatpush1.msra.mxu0 %v474
    %1511 = vmatprep.mubr.f32.mxu0 %v58
    %1512 = vmatmul.mubr.f32.gmra.mrb[0].mxu0 %v57
    %v1513 = vpop.f32.mrb[0].mxu0
    %v1514 = vadd.f32 %v1378, %v1513
    %v1515 = vpop.f32.mrb[0].mxu0
    %v1516 = vadd.f32 %v1382, %v1515
    %1517 = vmatprep.mubr.f32.mxu0 %v65
    %1518 = vmatmul.mubr.f32.gmra.mrb[0].mxu0 %v64
    %v1519 = vpop.f32.mrb[0].mxu0
    %v1520 = vadd.f32 %v1378, %v1519
    %v1521 = vpop.f32.mrb[0].mxu0
    %v1522 = vadd.f32 %v1382, %v1521
    %1523 = vdwg.mxu0
    %1524 = vmatprep.subr.mxu0 %v488
    %1525 = vmatpush1.msra.mxu0 %v487
    %1526 = vmatprep.subr.mxu0 %v501
    %1527 = vmatpush1.msra.mxu0 %v500
    %1528 = vmatprep.subr.mxu0 %v514
    %1529 = vmatpush1.msra.mxu0 %v513
    %1530 = vmatprep.subr.mxu0 %v527
    %1531 = vmatpush1.msra.mxu0 %v526
    %1532 = vmatprep.subr.mxu0 %v540
    %1533 = vmatpush1.msra.mxu0 %v539
    %1534 = vmatprep.subr.mxu0 %v553
    %1535 = vmatpush1.msra.mxu0 %v552
    %1536 = vmatprep.subr.mxu0 %v566
    %1537 = vmatpush1.msra.mxu0 %v565
    %1538 = vmatprep.subr.mxu0 %v579
    %1539 = vmatpush1.msra.mxu0 %v578
    %1540 = vmatprep.subr.mxu0 %v592
    %1541 = vmatpush1.msra.mxu0 %v591
    %1542 = vmatprep.subr.mxu0 %v605
    %1543 = vmatpush1.msra.mxu0 %v604
    %1544 = vmatprep.subr.mxu0 %v618
    %1545 = vmatpush1.msra.mxu0 %v617
    %1546 = vmatprep.subr.mxu0 %v631
    %1547 = vmatpush1.msra.mxu0 %v630
    %1548 = vmatprep.subr.mxu0 %v644
    %1549 = vmatpush1.msra.mxu0 %v643
    %1550 = vmatprep.subr.mxu0 %v657
    %1551 = vmatpush1.msra.mxu0 %v656
    %1552 = vmatprep.subr.mxu0 %v670
    %1553 = vmatpush1.msra.mxu0 %v669
    %1554 = vmatprep.subr.mxu0 %v683
    %1555 = vmatpush1.msra.mxu0 %v682
    %1556 = vmatprep.subr.mxu0 %v696
    %1557 = vmatpush1.msra.mxu0 %v695
    %1558 = vmatprep.subr.mxu0 %v709
    %1559 = vmatpush1.msra.mxu0 %v708
    %1560 = vmatprep.subr.mxu0 %v722
    %1561 = vmatpush1.msra.mxu0 %v721
    %1562 = vmatprep.subr.mxu0 %v735
    %1563 = vmatpush1.msra.mxu0 %v734
    %1564 = vmatprep.subr.mxu0 %v748
    %1565 = vmatpush1.msra.mxu0 %v747
    %1566 = vmatprep.subr.mxu0 %v761
    %1567 = vmatpush1.msra.mxu0 %v760
    %1568 = vmatprep.subr.mxu0 %v774
    %1569 = vmatpush1.msra.mxu0 %v773
    %1570 = vmatprep.subr.mxu0 %v787
    %1571 = vmatpush1.msra.mxu0 %v786
    %1572 = vmatprep.subr.mxu0 %v800
    %1573 = vmatpush1.msra.mxu0 %v799
    %1574 = vmatprep.subr.mxu0 %v813
    %1575 = vmatpush1.msra.mxu0 %v812
    %1576 = vmatprep.subr.mxu0 %v826
    %1577 = vmatpush1.msra.mxu0 %v825
    %1578 = vmatprep.subr.mxu0 %v839
    %1579 = vmatpush1.msra.mxu0 %v838
    %1580 = vmatprep.subr.mxu0 %v852
    %1581 = vmatpush1.msra.mxu0 %v851
    %1582 = vmatprep.subr.mxu0 %v865
    %1583 = vmatpush1.msra.mxu0 %v864
    %1584 = vmatprep.subr.mxu0 %v878
    %1585 = vmatpush1.msra.mxu0 %v877
    %1586 = vmatprep.subr.mxu0 %v891
    %1587 = vmatpush1.msra.mxu0 %v890
    %1588 = vmatprep.mubr.f32.mxu0 %v60
    %1589 = vmatmul.mubr.f32.gmra.mrb[0].mxu0 %v59
    %v1590 = vpop.f32.mrb[0].mxu0
    %v1591 = vadd.f32 %v1514, %v1590
    %v1592 = vpop.f32.mrb[0].mxu0
    %v1593 = vadd.f32 %v1516, %v1592
    %1594 = vmatprep.mubr.f32.mxu0 %v67
    %1595 = vmatmul.mubr.f32.gmra.mrb[0].mxu0 %v66
    %v1596 = vpop.f32.mrb[0].mxu0
    %v1597 = vadd.f32 %v1520, %v1596
    %v1598 = vpop.f32.mrb[0].mxu0
    %v1599 = vadd.f32 %v1522, %v1598
    %1600 = vdwg.mxu0
    %1601 = vmatprep.subr.mxu0 %v904
    %1602 = vmatpush1.msra.mxu0 %v903
    %1603 = vmatprep.subr.mxu0 %v917
    %1604 = vmatpush1.msra.mxu0 %v916
    %1605 = vmatprep.subr.mxu0 %v930
    %1606 = vmatpush1.msra.mxu0 %v929
    %1607 = vmatprep.subr.mxu0 %v943
    %1608 = vmatpush1.msra.mxu0 %v942
    %1609 = vmatprep.subr.mxu0 %v956
    %1610 = vmatpush1.msra.mxu0 %v955
    %1611 = vmatprep.subr.mxu0 %v969
    %1612 = vmatpush1.msra.mxu0 %v968
    %1613 = vmatprep.subr.mxu0 %v982
    %1614 = vmatpush1.msra.mxu0 %v981
    %1615 = vmatprep.subr.mxu0 %v995
    %1616 = vmatpush1.msra.mxu0 %v994
    %1617 = vmatprep.subr.mxu0 %v1008
    %1618 = vmatpush1.msra.mxu0 %v1007
    %1619 = vmatprep.subr.mxu0 %v1021
    %1620 = vmatpush1.msra.mxu0 %v1020
    %1621 = vmatprep.subr.mxu0 %v1034
    %1622 = vmatpush1.msra.mxu0 %v1033
    %1623 = vmatprep.subr.mxu0 %v1047
    %1624 = vmatpush1.msra.mxu0 %v1046
    %1625 = vmatprep.subr.mxu0 %v1060
    %1626 = vmatpush1.msra.mxu0 %v1059
    %1627 = vmatprep.subr.mxu0 %v1073
    %1628 = vmatpush1.msra.mxu0 %v1072
    %1629 = vmatprep.subr.mxu0 %v1086
    %1630 = vmatpush1.msra.mxu0 %v1085
    %1631 = vmatprep.subr.mxu0 %v1099
    %1632 = vmatpush1.msra.mxu0 %v1098
    %1633 = vmatprep.subr.mxu0 %v1112
    %1634 = vmatpush1.msra.mxu0 %v1111
    %1635 = vmatprep.subr.mxu0 %v1125
    %1636 = vmatpush1.msra.mxu0 %v1124
    %1637 = vmatprep.subr.mxu0 %v1138
    %1638 = vmatpush1.msra.mxu0 %v1137
    %1639 = vmatprep.subr.mxu0 %v1151
    %1640 = vmatpush1.msra.mxu0 %v1150
    %1641 = vmatprep.subr.mxu0 %v1164
    %1642 = vmatpush1.msra.mxu0 %v1163
    %1643 = vmatprep.subr.mxu0 %v1177
    %1644 = vmatpush1.msra.mxu0 %v1176
    %1645 = vmatprep.subr.mxu0 %v1190
    %1646 = vmatpush1.msra.mxu0 %v1189
    %1647 = vmatprep.subr.mxu0 %v1203
    %1648 = vmatpush1.msra.mxu0 %v1202
    %1649 = vmatprep.subr.mxu0 %v1216
    %1650 = vmatpush1.msra.mxu0 %v1215
    %1651 = vmatprep.subr.mxu0 %v1229
    %1652 = vmatpush1.msra.mxu0 %v1228
    %1653 = vmatprep.subr.mxu0 %v1242
    %1654 = vmatpush1.msra.mxu0 %v1241
    %1655 = vmatprep.subr.mxu0 %v1255
    %1656 = vmatpush1.msra.mxu0 %v1254
    %1657 = vmatprep.subr.mxu0 %v1268
    %1658 = vmatpush1.msra.mxu0 %v1267
    %1659 = vmatprep.subr.mxu0 %v1281
    %1660 = vmatpush1.msra.mxu0 %v1280
    %1661 = vmatprep.subr.mxu0 %v1294
    %1662 = vmatpush1.msra.mxu0 %v1293
    %1663 = vmatprep.subr.mxu0 %v1307
    %1664 = vmatpush1.msra.mxu0 %v1306
    %1665 = vmatprep.mubr.f32.mxu0 %v62
    %1666 = vmatmul.mubr.f32.gmra.mrb[0].mxu0 %v61
    %v1667 = vpop.f32.mrb[0].mxu0
    %v1668 = vadd.f32 %v1591, %v1667
    %v1669 = vpop.f32.mrb[0].mxu0
    %v1670 = vadd.f32 %v1593, %v1669
    %1671 = vmatprep.mubr.f32.mxu0 %v69
    %1672 = vmatmul.mubr.f32.gmra.mrb[0].mxu0 %v68
    %v1673 = vpop.f32.mrb[0].mxu0
    %v1674 = vadd.f32 %v1597, %v1673
    %v1675 = vpop.f32.mrb[0].mxu0
    %v1676 = vadd.f32 %v1599, %v1675
    %1677 = vdwg.mxu0
    %1678 = vmatprep.subr.mxu0 %v1320
    %1679 = vmatpush1.msra.mxu0 %v1319
    %1680 = vmatprep.subr.mxu0 %v1333
    %1681 = vmatpush1.msra.mxu0 %v1332
    %1682 = vmatprep.subr.mxu0 %v1346
    %1683 = vmatpush1.msra.mxu0 %v1345
    %1684 = vmatprep.subr.mxu0 %v1359
    %1685 = vmatpush1.msra.mxu0 %v1358
    %1686 = vmatprep.subr.mxu0 0.0
    %1687 = vmatpush1.msra.mxu0 0.0
    %1688 = vmatprep.subr.mxu0 0.0
    %1689 = vmatpush1.msra.mxu0 0.0
    %1690 = vmatprep.subr.mxu0 0.0
    %1691 = vmatpush1.msra.mxu0 0.0
    %1692 = vmatprep.subr.mxu0 0.0
    %1693 = vmatpush1.msra.mxu0 0.0
    %1694 = vmatprep.subr.mxu0 0.0
    %1695 = vmatpush1.msra.mxu0 0.0
    %1696 = vmatprep.subr.mxu0 0.0
    %1697 = vmatpush1.msra.mxu0 0.0
    %1698 = vmatprep.subr.mxu0 0.0
    %1699 = vmatpush1.msra.mxu0 0.0
    %1700 = vmatprep.subr.mxu0 0.0
    %1701 = vmatpush1.msra.mxu0 0.0
    %1702 = vmatprep.subr.mxu0 0.0
    %1703 = vmatpush1.msra.mxu0 0.0
    %1704 = vmatprep.subr.mxu0 0.0
    %1705 = vmatpush1.msra.mxu0 0.0
    %1706 = vmatprep.subr.mxu0 0.0
    %1707 = vmatpush1.msra.mxu0 0.0
    %1708 = vmatprep.subr.mxu0 0.0
    %1709 = vmatpush1.msra.mxu0 0.0
    %1710 = vmatprep.subr.mxu0 0.0
    %1711 = vmatpush1.msra.mxu0 0.0
    %1712 = vmatprep.subr.mxu0 0.0
    %1713 = vmatpush1.msra.mxu0 0.0
    %1714 = vmatprep.subr.mxu0 0.0
    %1715 = vmatpush1.msra.mxu0 0.0
    %1716 = vmatprep.subr.mxu0 0.0
    %1717 = vmatpush1.msra.mxu0 0.0
    %1718 = vmatprep.subr.mxu0 0.0
    %1719 = vmatpush1.msra.mxu0 0.0
    %1720 = vmatprep.subr.mxu0 0.0
    %1721 = vmatpush1.msra.mxu0 0.0
    %1722 = vmatprep.subr.mxu0 0.0
    %1723 = vmatpush1.msra.mxu0 0.0
    %1724 = vmatprep.subr.mxu0 0.0
    %1725 = vmatpush1.msra.mxu0 0.0
    %1726 = vmatprep.subr.mxu0 0.0
    %1727 = vmatpush1.msra.mxu0 0.0
    %1728 = vmatprep.subr.mxu0 0.0
    %1729 = vmatpush1.msra.mxu0 0.0
    %1730 = vmatprep.subr.mxu0 0.0
    %1731 = vmatpush1.msra.mxu0 0.0
    %1732 = vmatprep.subr.mxu0 0.0
    %1733 = vmatpush1.msra.mxu0 0.0
    %1734 = vmatprep.subr.mxu0 0.0
    %1735 = vmatpush1.msra.mxu0 0.0
    %1736 = vmatprep.subr.mxu0 0.0
    %1737 = vmatpush1.msra.mxu0 0.0
    %1738 = vmatprep.subr.mxu0 0.0
    %1739 = vmatpush1.msra.mxu0 0.0
    %1740 = vmatprep.subr.mxu0 0.0
    %1741 = vmatpush1.msra.mxu0 0.0
    %1742 = vmatprep.mubr.f32.mxu0 0.0
    %1743 = vmatmul.mubr.f32.gmra.mrb[0].mxu0 %v1442
    %v1744 = vpop.f32.mrb[0].mxu0
    %v1745 = vadd.f32 %v1668, %v1744
    %v1746 = vpop.f32.mrb[0].mxu0
    %v1747 = vadd.f32 %v1670, %v1746
    %1748 = vmatprep.mubr.f32.mxu0 0.0
    %1749 = vmatmul.mubr.f32.gmra.mrb[0].mxu0 %v1445
    %v1750 = vpop.f32.mrb[0].mxu0
    %v1751 = vadd.f32 %v1674, %v1750
    %v1752 = vpop.f32.mrb[0].mxu0
    %v1753 = vadd.f32 %v1676, %v1752
    %1754 = vdwg.mxu0
    %1755 = vmatprep.subr.mxu0 %v74
    %1756 = vmatpush1.msra.mxu0 %v73
    %1757 = vmatprep.subr.mxu0 %v87
    %1758 = vmatpush1.msra.mxu0 %v86
    %1759 = vmatprep.subr.mxu0 %v100
    %1760 = vmatpush1.msra.mxu0 %v99
    %1761 = vmatprep.subr.mxu0 %v113
    %1762 = vmatpush1.msra.mxu0 %v112
    %1763 = vmatprep.subr.mxu0 %v126
    %1764 = vmatpush1.msra.mxu0 %v125
    %1765 = vmatprep.subr.mxu0 %v139
    %1766 = vmatpush1.msra.mxu0 %v138
    %1767 = vmatprep.subr.mxu0 %v152
    %1768 = vmatpush1.msra.mxu0 %v151
    %1769 = vmatprep.subr.mxu0 %v165
    %1770 = vmatpush1.msra.mxu0 %v164
    %1771 = vmatprep.subr.mxu0 %v178
    %1772 = vmatpush1.msra.mxu0 %v177
    %1773 = vmatprep.subr.mxu0 %v191
    %1774 = vmatpush1.msra.mxu0 %v190
    %1775 = vmatprep.subr.mxu0 %v204
    %1776 = vmatpush1.msra.mxu0 %v203
    %1777 = vmatprep.subr.mxu0 %v217
    %1778 = vmatpush1.msra.mxu0 %v216
    %1779 = vmatprep.subr.mxu0 %v230
    %1780 = vmatpush1.msra.mxu0 %v229
    %1781 = vmatprep.subr.mxu0 %v243
    %1782 = vmatpush1.msra.mxu0 %v242
    %1783 = vmatprep.subr.mxu0 %v256
    %1784 = vmatpush1.msra.mxu0 %v255
    %1785 = vmatprep.subr.mxu0 %v269
    %1786 = vmatpush1.msra.mxu0 %v268
    %1787 = vmatprep.subr.mxu0 %v282
    %1788 = vmatpush1.msra.mxu0 %v281
    %1789 = vmatprep.subr.mxu0 %v295
    %1790 = vmatpush1.msra.mxu0 %v294
    %1791 = vmatprep.subr.mxu0 %v308
    %1792 = vmatpush1.msra.mxu0 %v307
    %1793 = vmatprep.subr.mxu0 %v321
    %1794 = vmatpush1.msra.mxu0 %v320
    %1795 = vmatprep.subr.mxu0 %v334
    %1796 = vmatpush1.msra.mxu0 %v333
    %1797 = vmatprep.subr.mxu0 %v347
    %1798 = vmatpush1.msra.mxu0 %v346
    %1799 = vmatprep.subr.mxu0 %v360
    %1800 = vmatpush1.msra.mxu0 %v359
    %1801 = vmatprep.subr.mxu0 %v373
    %1802 = vmatpush1.msra.mxu0 %v372
    %1803 = vmatprep.subr.mxu0 %v386
    %1804 = vmatpush1.msra.mxu0 %v385
    %1805 = vmatprep.subr.mxu0 %v399
    %1806 = vmatpush1.msra.mxu0 %v398
    %1807 = vmatprep.subr.mxu0 %v412
    %1808 = vmatpush1.msra.mxu0 %v411
    %1809 = vmatprep.subr.mxu0 %v425
    %1810 = vmatpush1.msra.mxu0 %v424
    %1811 = vmatprep.subr.mxu0 %v438
    %1812 = vmatpush1.msra.mxu0 %v437
    %1813 = vmatprep.subr.mxu0 %v451
    %1814 = vmatpush1.msra.mxu0 %v450
    %1815 = vmatprep.subr.mxu0 %v464
    %1816 = vmatpush1.msra.mxu0 %v463
    %1817 = vmatprep.subr.mxu0 %v477
    %1818 = vmatpush1.msra.mxu0 %v476
    %1819 = vmatprep.mubr.f32.mxu0 %v58
    %1820 = vmatmul.mubr.f32.gmra.mrb[0].mxu0 %v57
    %v1821 = vpop.f32.mrb[0].mxu0
    %v1822 = vadd.f32 %v1386, %v1821
    %v1823 = vpop.f32.mrb[0].mxu0
    %v1824 = vadd.f32 %v1390, %v1823
    %1825 = vmatprep.mubr.f32.mxu0 %v65
    %1826 = vmatmul.mubr.f32.gmra.mrb[0].mxu0 %v64
    %v1827 = vpop.f32.mrb[0].mxu0
    %v1828 = vadd.f32 %v1386, %v1827
    %v1829 = vpop.f32.mrb[0].mxu0
    %v1830 = vadd.f32 %v1390, %v1829
    %1831 = vdwg.mxu0
    %1832 = vmatprep.subr.mxu0 %v490
    %1833 = vmatpush1.msra.mxu0 %v489
    %1834 = vmatprep.subr.mxu0 %v503
    %1835 = vmatpush1.msra.mxu0 %v502
    %1836 = vmatprep.subr.mxu0 %v516
    %1837 = vmatpush1.msra.mxu0 %v515
    %1838 = vmatprep.subr.mxu0 %v529
    %1839 = vmatpush1.msra.mxu0 %v528
    %1840 = vmatprep.subr.mxu0 %v542
    %1841 = vmatpush1.msra.mxu0 %v541
    %1842 = vmatprep.subr.mxu0 %v555
    %1843 = vmatpush1.msra.mxu0 %v554
    %1844 = vmatprep.subr.mxu0 %v568
    %1845 = vmatpush1.msra.mxu0 %v567
    %1846 = vmatprep.subr.mxu0 %v581
    %1847 = vmatpush1.msra.mxu0 %v580
    %1848 = vmatprep.subr.mxu0 %v594
    %1849 = vmatpush1.msra.mxu0 %v593
    %1850 = vmatprep.subr.mxu0 %v607
    %1851 = vmatpush1.msra.mxu0 %v606
    %1852 = vmatprep.subr.mxu0 %v620
    %1853 = vmatpush1.msra.mxu0 %v619
    %1854 = vmatprep.subr.mxu0 %v633
    %1855 = vmatpush1.msra.mxu0 %v632
    %1856 = vmatprep.subr.mxu0 %v646
    %1857 = vmatpush1.msra.mxu0 %v645
    %1858 = vmatprep.subr.mxu0 %v659
    %1859 = vmatpush1.msra.mxu0 %v658
    %1860 = vmatprep.subr.mxu0 %v672
    %1861 = vmatpush1.msra.mxu0 %v671
    %1862 = vmatprep.subr.mxu0 %v685
    %1863 = vmatpush1.msra.mxu0 %v684
    %1864 = vmatprep.subr.mxu0 %v698
    %1865 = vmatpush1.msra.mxu0 %v697
    %1866 = vmatprep.subr.mxu0 %v711
    %1867 = vmatpush1.msra.mxu0 %v710
    %1868 = vmatprep.subr.mxu0 %v724
    %1869 = vmatpush1.msra.mxu0 %v723
    %1870 = vmatprep.subr.mxu0 %v737
    %1871 = vmatpush1.msra.mxu0 %v736
    %1872 = vmatprep.subr.mxu0 %v750
    %1873 = vmatpush1.msra.mxu0 %v749
    %1874 = vmatprep.subr.mxu0 %v763
    %1875 = vmatpush1.msra.mxu0 %v762
    %1876 = vmatprep.subr.mxu0 %v776
    %1877 = vmatpush1.msra.mxu0 %v775
    %1878 = vmatprep.subr.mxu0 %v789
    %1879 = vmatpush1.msra.mxu0 %v788
    %1880 = vmatprep.subr.mxu0 %v802
    %1881 = vmatpush1.msra.mxu0 %v801
    %1882 = vmatprep.subr.mxu0 %v815
    %1883 = vmatpush1.msra.mxu0 %v814
    %1884 = vmatprep.subr.mxu0 %v828
    %1885 = vmatpush1.msra.mxu0 %v827
    %1886 = vmatprep.subr.mxu0 %v841
    %1887 = vmatpush1.msra.mxu0 %v840
    %1888 = vmatprep.subr.mxu0 %v854
    %1889 = vmatpush1.msra.mxu0 %v853
    %1890 = vmatprep.subr.mxu0 %v867
    %1891 = vmatpush1.msra.mxu0 %v866
    %1892 = vmatprep.subr.mxu0 %v880
    %1893 = vmatpush1.msra.mxu0 %v879
    %1894 = vmatprep.subr.mxu0 %v893
    %1895 = vmatpush1.msra.mxu0 %v892
    %1896 = vmatprep.mubr.f32.mxu0 %v60
    %1897 = vmatmul.mubr.f32.gmra.mrb[0].mxu0 %v59
    %v1898 = vpop.f32.mrb[0].mxu0
    %v1899 = vadd.f32 %v1822, %v1898
    %v1900 = vpop.f32.mrb[0].mxu0
    %v1901 = vadd.f32 %v1824, %v1900
    %1902 = vmatprep.mubr.f32.mxu0 %v67
    %1903 = vmatmul.mubr.f32.gmra.mrb[0].mxu0 %v66
    %v1904 = vpop.f32.mrb[0].mxu0
    %v1905 = vadd.f32 %v1828, %v1904
    %v1906 = vpop.f32.mrb[0].mxu0
    %v1907 = vadd.f32 %v1830, %v1906
    %1908 = vdwg.mxu0
    %1909 = vmatprep.subr.mxu0 %v906
    %1910 = vmatpush1.msra.mxu0 %v905
    %1911 = vmatprep.subr.mxu0 %v919
    %1912 = vmatpush1.msra.mxu0 %v918
    %1913 = vmatprep.subr.mxu0 %v932
    %1914 = vmatpush1.msra.mxu0 %v931
    %1915 = vmatprep.subr.mxu0 %v945
    %1916 = vmatpush1.msra.mxu0 %v944
    %1917 = vmatprep.subr.mxu0 %v958
    %1918 = vmatpush1.msra.mxu0 %v957
    %1919 = vmatprep.subr.mxu0 %v971
    %1920 = vmatpush1.msra.mxu0 %v970
    %1921 = vmatprep.subr.mxu0 %v984
    %1922 = vmatpush1.msra.mxu0 %v983
    %1923 = vmatprep.subr.mxu0 %v997
    %1924 = vmatpush1.msra.mxu0 %v996
    %1925 = vmatprep.subr.mxu0 %v1010
    %1926 = vmatpush1.msra.mxu0 %v1009
    %1927 = vmatprep.subr.mxu0 %v1023
    %1928 = vmatpush1.msra.mxu0 %v1022
    %1929 = vmatprep.subr.mxu0 %v1036
    %1930 = vmatpush1.msra.mxu0 %v1035
    %1931 = vmatprep.subr.mxu0 %v1049
    %1932 = vmatpush1.msra.mxu0 %v1048
    %1933 = vmatprep.subr.mxu0 %v1062
    %1934 = vmatpush1.msra.mxu0 %v1061
    %1935 = vmatprep.subr.mxu0 %v1075
    %1936 = vmatpush1.msra.mxu0 %v1074
    %1937 = vmatprep.subr.mxu0 %v1088
    %1938 = vmatpush1.msra.mxu0 %v1087
    %1939 = vmatprep.subr.mxu0 %v1101
    %1940 = vmatpush1.msra.mxu0 %v1100
    %1941 = vmatprep.subr.mxu0 %v1114
    %1942 = vmatpush1.msra.mxu0 %v1113
    %1943 = vmatprep.subr.mxu0 %v1127
    %1944 = vmatpush1.msra.mxu0 %v1126
    %1945 = vmatprep.subr.mxu0 %v1140
    %1946 = vmatpush1.msra.mxu0 %v1139
    %1947 = vmatprep.subr.mxu0 %v1153
    %1948 = vmatpush1.msra.mxu0 %v1152
    %1949 = vmatprep.subr.mxu0 %v1166
    %1950 = vmatpush1.msra.mxu0 %v1165
    %1951 = vmatprep.subr.mxu0 %v1179
    %1952 = vmatpush1.msra.mxu0 %v1178
    %1953 = vmatprep.subr.mxu0 %v1192
    %1954 = vmatpush1.msra.mxu0 %v1191
    %1955 = vmatprep.subr.mxu0 %v1205
    %1956 = vmatpush1.msra.mxu0 %v1204
    %1957 = vmatprep.subr.mxu0 %v1218
    %1958 = vmatpush1.msra.mxu0 %v1217
    %1959 = vmatprep.subr.mxu0 %v1231
    %1960 = vmatpush1.msra.mxu0 %v1230
    %1961 = vmatprep.subr.mxu0 %v1244
    %1962 = vmatpush1.msra.mxu0 %v1243
    %1963 = vmatprep.subr.mxu0 %v1257
    %1964 = vmatpush1.msra.mxu0 %v1256
    %1965 = vmatprep.subr.mxu0 %v1270
    %1966 = vmatpush1.msra.mxu0 %v1269
    %1967 = vmatprep.subr.mxu0 %v1283
    %1968 = vmatpush1.msra.mxu0 %v1282
    %1969 = vmatprep.subr.mxu0 %v1296
    %1970 = vmatpush1.msra.mxu0 %v1295
    %1971 = vmatprep.subr.mxu0 %v1309
    %1972 = vmatpush1.msra.mxu0 %v1308
    %1973 = vmatprep.mubr.f32.mxu0 %v62
    %1974 = vmatmul.mubr.f32.gmra.mrb[0].mxu0 %v61
    %v1975 = vpop.f32.mrb[0].mxu0
    %v1976 = vadd.f32 %v1899, %v1975
    %v1977 = vpop.f32.mrb[0].mxu0
    %v1978 = vadd.f32 %v1901, %v1977
    %1979 = vmatprep.mubr.f32.mxu0 %v69
    %1980 = vmatmul.mubr.f32.gmra.mrb[0].mxu0 %v68
    %v1981 = vpop.f32.mrb[0].mxu0
    %v1982 = vadd.f32 %v1905, %v1981
    %v1983 = vpop.f32.mrb[0].mxu0
    %v1984 = vadd.f32 %v1907, %v1983
    %1985 = vdwg.mxu0
    %1986 = vmatprep.subr.mxu0 %v1322
    %1987 = vmatpush1.msra.mxu0 %v1321
    %1988 = vmatprep.subr.mxu0 %v1335
    %1989 = vmatpush1.msra.mxu0 %v1334
    %1990 = vmatprep.subr.mxu0 %v1348
    %1991 = vmatpush1.msra.mxu0 %v1347
    %1992 = vmatprep.subr.mxu0 %v1361
    %1993 = vmatpush1.msra.mxu0 %v1360
    %1994 = vmatprep.subr.mxu0 0.0
    %1995 = vmatpush1.msra.mxu0 0.0
    %1996 = vmatprep.subr.mxu0 0.0
    %1997 = vmatpush1.msra.mxu0 0.0
    %1998 = vmatprep.subr.mxu0 0.0
    %1999 = vmatpush1.msra.mxu0 0.0
    %2000 = vmatprep.subr.mxu0 0.0
    %2001 = vmatpush1.msra.mxu0 0.0
    %2002 = vmatprep.subr.mxu0 0.0
    %2003 = vmatpush1.msra.mxu0 0.0
    %2004 = vmatprep.subr.mxu0 0.0
    %2005 = vmatpush1.msra.mxu0 0.0
    %2006 = vmatprep.subr.mxu0 0.0
    %2007 = vmatpush1.msra.mxu0 0.0
    %2008 = vmatprep.subr.mxu0 0.0
    %2009 = vmatpush1.msra.mxu0 0.0
    %2010 = vmatprep.subr.mxu0 0.0
    %2011 = vmatpush1.msra.mxu0 0.0
    %2012 = vmatprep.subr.mxu0 0.0
    %2013 = vmatpush1.msra.mxu0 0.0
    %2014 = vmatprep.subr.mxu0 0.0
    %2015 = vmatpush1.msra.mxu0 0.0
    %2016 = vmatprep.subr.mxu0 0.0
    %2017 = vmatpush1.msra.mxu0 0.0
    %2018 = vmatprep.subr.mxu0 0.0
    %2019 = vmatpush1.msra.mxu0 0.0
    %2020 = vmatprep.subr.mxu0 0.0
    %2021 = vmatpush1.msra.mxu0 0.0
    %2022 = vmatprep.subr.mxu0 0.0
    %2023 = vmatpush1.msra.mxu0 0.0
    %2024 = vmatprep.subr.mxu0 0.0
    %2025 = vmatpush1.msra.mxu0 0.0
    %2026 = vmatprep.subr.mxu0 0.0
    %2027 = vmatpush1.msra.mxu0 0.0
    %2028 = vmatprep.subr.mxu0 0.0
    %2029 = vmatpush1.msra.mxu0 0.0
    %2030 = vmatprep.subr.mxu0 0.0
    %2031 = vmatpush1.msra.mxu0 0.0
    %2032 = vmatprep.subr.mxu0 0.0
    %2033 = vmatpush1.msra.mxu0 0.0
    %2034 = vmatprep.subr.mxu0 0.0
    %2035 = vmatpush1.msra.mxu0 0.0
    %2036 = vmatprep.subr.mxu0 0.0
    %2037 = vmatpush1.msra.mxu0 0.0
    %2038 = vmatprep.subr.mxu0 0.0
    %2039 = vmatpush1.msra.mxu0 0.0
    %2040 = vmatprep.subr.mxu0 0.0
    %2041 = vmatpush1.msra.mxu0 0.0
    %2042 = vmatprep.subr.mxu0 0.0
    %2043 = vmatpush1.msra.mxu0 0.0
    %2044 = vmatprep.subr.mxu0 0.0
    %2045 = vmatpush1.msra.mxu0 0.0
    %2046 = vmatprep.subr.mxu0 0.0
    %2047 = vmatpush1.msra.mxu0 0.0
    %2048 = vmatprep.subr.mxu0 0.0
    %2049 = vmatpush1.msra.mxu0 0.0
    %2050 = vmatprep.mubr.f32.mxu0 0.0
    %2051 = vmatmul.mubr.f32.gmra.mrb[0].mxu0 %v1442
    %v2052 = vpop.f32.mrb[0].mxu0
    %v2053 = vadd.f32 %v1976, %v2052
    %v2054 = vpop.f32.mrb[0].mxu0
    %v2055 = vadd.f32 %v1978, %v2054
    %2056 = vmatprep.mubr.f32.mxu0 0.0
    %2057 = vmatmul.mubr.f32.gmra.mrb[0].mxu0 %v1445
    %v2058 = vpop.f32.mrb[0].mxu0
    %v2059 = vadd.f32 %v1982, %v2058
    %v2060 = vpop.f32.mrb[0].mxu0
    %v2061 = vadd.f32 %v1984, %v2060
    %2062 = vdwg.mxu0
    %2063 = vmatprep.subr.mxu0 %v76
    %2064 = vmatpush1.msra.mxu0 %v75
    %2065 = vmatprep.subr.mxu0 %v89
    %2066 = vmatpush1.msra.mxu0 %v88
    %2067 = vmatprep.subr.mxu0 %v102
    %2068 = vmatpush1.msra.mxu0 %v101
    %2069 = vmatprep.subr.mxu0 %v115
    %2070 = vmatpush1.msra.mxu0 %v114
    %2071 = vmatprep.subr.mxu0 %v128
    %2072 = vmatpush1.msra.mxu0 %v127
    %2073 = vmatprep.subr.mxu0 %v141
    %2074 = vmatpush1.msra.mxu0 %v140
    %2075 = vmatprep.subr.mxu0 %v154
    %2076 = vmatpush1.msra.mxu0 %v153
    %2077 = vmatprep.subr.mxu0 %v167
    %2078 = vmatpush1.msra.mxu0 %v166
    %2079 = vmatprep.subr.mxu0 %v180
    %2080 = vmatpush1.msra.mxu0 %v179
    %2081 = vmatprep.subr.mxu0 %v193
    %2082 = vmatpush1.msra.mxu0 %v192
    %2083 = vmatprep.subr.mxu0 %v206
    %2084 = vmatpush1.msra.mxu0 %v205
    %2085 = vmatprep.subr.mxu0 %v219
    %2086 = vmatpush1.msra.mxu0 %v218
    %2087 = vmatprep.subr.mxu0 %v232
    %2088 = vmatpush1.msra.mxu0 %v231
    %2089 = vmatprep.subr.mxu0 %v245
    %2090 = vmatpush1.msra.mxu0 %v244
    %2091 = vmatprep.subr.mxu0 %v258
    %2092 = vmatpush1.msra.mxu0 %v257
    %2093 = vmatprep.subr.mxu0 %v271
    %2094 = vmatpush1.msra.mxu0 %v270
    %2095 = vmatprep.subr.mxu0 %v284
    %2096 = vmatpush1.msra.mxu0 %v283
    %2097 = vmatprep.subr.mxu0 %v297
    %2098 = vmatpush1.msra.mxu0 %v296
    %2099 = vmatprep.subr.mxu0 %v310
    %2100 = vmatpush1.msra.mxu0 %v309
    %2101 = vmatprep.subr.mxu0 %v323
    %2102 = vmatpush1.msra.mxu0 %v322
    %2103 = vmatprep.subr.mxu0 %v336
    %2104 = vmatpush1.msra.mxu0 %v335
    %2105 = vmatprep.subr.mxu0 %v349
    %2106 = vmatpush1.msra.mxu0 %v348
    %2107 = vmatprep.subr.mxu0 %v362
    %2108 = vmatpush1.msra.mxu0 %v361
    %2109 = vmatprep.subr.mxu0 %v375
    %2110 = vmatpush1.msra.mxu0 %v374
    %2111 = vmatprep.subr.mxu0 %v388
    %2112 = vmatpush1.msra.mxu0 %v387
    %2113 = vmatprep.subr.mxu0 %v401
    %2114 = vmatpush1.msra.mxu0 %v400
    %2115 = vmatprep.subr.mxu0 %v414
    %2116 = vmatpush1.msra.mxu0 %v413
    %2117 = vmatprep.subr.mxu0 %v427
    %2118 = vmatpush1.msra.mxu0 %v426
    %2119 = vmatprep.subr.mxu0 %v440
    %2120 = vmatpush1.msra.mxu0 %v439
    %2121 = vmatprep.subr.mxu0 %v453
    %2122 = vmatpush1.msra.mxu0 %v452
    %2123 = vmatprep.subr.mxu0 %v466
    %2124 = vmatpush1.msra.mxu0 %v465
    %2125 = vmatprep.subr.mxu0 %v479
    %2126 = vmatpush1.msra.mxu0 %v478
    %2127 = vmatprep.mubr.f32.mxu0 %v58
    %2128 = vmatmul.mubr.f32.gmra.mrb[0].mxu0 %v57
    %v2129 = vpop.f32.mrb[0].mxu0
    %v2130 = vadd.f32 %v1394, %v2129
    %v2131 = vpop.f32.mrb[0].mxu0
    %v2132 = vadd.f32 %v1398, %v2131
    %2133 = vmatprep.mubr.f32.mxu0 %v65
    %2134 = vmatmul.mubr.f32.gmra.mrb[0].mxu0 %v64
    %v2135 = vpop.f32.mrb[0].mxu0
    %v2136 = vadd.f32 %v1394, %v2135
    %v2137 = vpop.f32.mrb[0].mxu0
    %v2138 = vadd.f32 %v1398, %v2137
    %2139 = vdwg.mxu0
    %2140 = vmatprep.subr.mxu0 %v492
    %2141 = vmatpush1.msra.mxu0 %v491
    %2142 = vmatprep.subr.mxu0 %v505
    %2143 = vmatpush1.msra.mxu0 %v504
    %2144 = vmatprep.subr.mxu0 %v518
    %2145 = vmatpush1.msra.mxu0 %v517
    %2146 = vmatprep.subr.mxu0 %v531
    %2147 = vmatpush1.msra.mxu0 %v530
    %2148 = vmatprep.subr.mxu0 %v544
    %2149 = vmatpush1.msra.mxu0 %v543
    %2150 = vmatprep.subr.mxu0 %v557
    %2151 = vmatpush1.msra.mxu0 %v556
    %2152 = vmatprep.subr.mxu0 %v570
    %2153 = vmatpush1.msra.mxu0 %v569
    %2154 = vmatprep.subr.mxu0 %v583
    %2155 = vmatpush1.msra.mxu0 %v582
    %2156 = vmatprep.subr.mxu0 %v596
    %2157 = vmatpush1.msra.mxu0 %v595
    %2158 = vmatprep.subr.mxu0 %v609
    %2159 = vmatpush1.msra.mxu0 %v608
    %2160 = vmatprep.subr.mxu0 %v622
    %2161 = vmatpush1.msra.mxu0 %v621
    %2162 = vmatprep.subr.mxu0 %v635
    %2163 = vmatpush1.msra.mxu0 %v634
    %2164 = vmatprep.subr.mxu0 %v648
    %2165 = vmatpush1.msra.mxu0 %v647
    %2166 = vmatprep.subr.mxu0 %v661
    %2167 = vmatpush1.msra.mxu0 %v660
    %2168 = vmatprep.subr.mxu0 %v674
    %2169 = vmatpush1.msra.mxu0 %v673
    %2170 = vmatprep.subr.mxu0 %v687
    %2171 = vmatpush1.msra.mxu0 %v686
    %2172 = vmatprep.subr.mxu0 %v700
    %2173 = vmatpush1.msra.mxu0 %v699
    %2174 = vmatprep.subr.mxu0 %v713
    %2175 = vmatpush1.msra.mxu0 %v712
    %2176 = vmatprep.subr.mxu0 %v726
    %2177 = vmatpush1.msra.mxu0 %v725
    %2178 = vmatprep.subr.mxu0 %v739
    %2179 = vmatpush1.msra.mxu0 %v738
    %2180 = vmatprep.subr.mxu0 %v752
    %2181 = vmatpush1.msra.mxu0 %v751
    %2182 = vmatprep.subr.mxu0 %v765
    %2183 = vmatpush1.msra.mxu0 %v764
    %2184 = vmatprep.subr.mxu0 %v778
    %2185 = vmatpush1.msra.mxu0 %v777
    %2186 = vmatprep.subr.mxu0 %v791
    %2187 = vmatpush1.msra.mxu0 %v790
    %2188 = vmatprep.subr.mxu0 %v804
    %2189 = vmatpush1.msra.mxu0 %v803
    %2190 = vmatprep.subr.mxu0 %v817
    %2191 = vmatpush1.msra.mxu0 %v816
    %2192 = vmatprep.subr.mxu0 %v830
    %2193 = vmatpush1.msra.mxu0 %v829
    %2194 = vmatprep.subr.mxu0 %v843
    %2195 = vmatpush1.msra.mxu0 %v842
    %2196 = vmatprep.subr.mxu0 %v856
    %2197 = vmatpush1.msra.mxu0 %v855
    %2198 = vmatprep.subr.mxu0 %v869
    %2199 = vmatpush1.msra.mxu0 %v868
    %2200 = vmatprep.subr.mxu0 %v882
    %2201 = vmatpush1.msra.mxu0 %v881
    %2202 = vmatprep.subr.mxu0 %v895
    %2203 = vmatpush1.msra.mxu0 %v894
    %2204 = vmatprep.mubr.f32.mxu0 %v60
    %2205 = vmatmul.mubr.f32.gmra.mrb[0].mxu0 %v59
    %v2206 = vpop.f32.mrb[0].mxu0
    %v2207 = vadd.f32 %v2130, %v2206
    %v2208 = vpop.f32.mrb[0].mxu0
    %v2209 = vadd.f32 %v2132, %v2208
    %2210 = vmatprep.mubr.f32.mxu0 %v67
    %2211 = vmatmul.mubr.f32.gmra.mrb[0].mxu0 %v66
    %v2212 = vpop.f32.mrb[0].mxu0
    %v2213 = vadd.f32 %v2136, %v2212
    %v2214 = vpop.f32.mrb[0].mxu0
    %v2215 = vadd.f32 %v2138, %v2214
    %2216 = vdwg.mxu0
    %2217 = vmatprep.subr.mxu0 %v908
    %2218 = vmatpush1.msra.mxu0 %v907
    %2219 = vmatprep.subr.mxu0 %v921
    %2220 = vmatpush1.msra.mxu0 %v920
    %2221 = vmatprep.subr.mxu0 %v934
    %2222 = vmatpush1.msra.mxu0 %v933
    %2223 = vmatprep.subr.mxu0 %v947
    %2224 = vmatpush1.msra.mxu0 %v946
    %2225 = vmatprep.subr.mxu0 %v960
    %2226 = vmatpush1.msra.mxu0 %v959
    %2227 = vmatprep.subr.mxu0 %v973
    %2228 = vmatpush1.msra.mxu0 %v972
    %2229 = vmatprep.subr.mxu0 %v986
    %2230 = vmatpush1.msra.mxu0 %v985
    %2231 = vmatprep.subr.mxu0 %v999
    %2232 = vmatpush1.msra.mxu0 %v998
    %2233 = vmatprep.subr.mxu0 %v1012
    %2234 = vmatpush1.msra.mxu0 %v1011
    %2235 = vmatprep.subr.mxu0 %v1025
    %2236 = vmatpush1.msra.mxu0 %v1024
    %2237 = vmatprep.subr.mxu0 %v1038
    %2238 = vmatpush1.msra.mxu0 %v1037
    %2239 = vmatprep.subr.mxu0 %v1051
    %2240 = vmatpush1.msra.mxu0 %v1050
    %2241 = vmatprep.subr.mxu0 %v1064
    %2242 = vmatpush1.msra.mxu0 %v1063
    %2243 = vmatprep.subr.mxu0 %v1077
    %2244 = vmatpush1.msra.mxu0 %v1076
    %2245 = vmatprep.subr.mxu0 %v1090
    %2246 = vmatpush1.msra.mxu0 %v1089
    %2247 = vmatprep.subr.mxu0 %v1103
    %2248 = vmatpush1.msra.mxu0 %v1102
    %2249 = vmatprep.subr.mxu0 %v1116
    %2250 = vmatpush1.msra.mxu0 %v1115
    %2251 = vmatprep.subr.mxu0 %v1129
    %2252 = vmatpush1.msra.mxu0 %v1128
    %2253 = vmatprep.subr.mxu0 %v1142
    %2254 = vmatpush1.msra.mxu0 %v1141
    %2255 = vmatprep.subr.mxu0 %v1155
    %2256 = vmatpush1.msra.mxu0 %v1154
    %2257 = vmatprep.subr.mxu0 %v1168
    %2258 = vmatpush1.msra.mxu0 %v1167
    %2259 = vmatprep.subr.mxu0 %v1181
    %2260 = vmatpush1.msra.mxu0 %v1180
    %2261 = vmatprep.subr.mxu0 %v1194
    %2262 = vmatpush1.msra.mxu0 %v1193
    %2263 = vmatprep.subr.mxu0 %v1207
    %2264 = vmatpush1.msra.mxu0 %v1206
    %2265 = vmatprep.subr.mxu0 %v1220
    %2266 = vmatpush1.msra.mxu0 %v1219
    %2267 = vmatprep.subr.mxu0 %v1233
    %2268 = vmatpush1.msra.mxu0 %v1232
    %2269 = vmatprep.subr.mxu0 %v1246
    %2270 = vmatpush1.msra.mxu0 %v1245
    %2271 = vmatprep.subr.mxu0 %v1259
    %2272 = vmatpush1.msra.mxu0 %v1258
    %2273 = vmatprep.subr.mxu0 %v1272
    %2274 = vmatpush1.msra.mxu0 %v1271
    %2275 = vmatprep.subr.mxu0 %v1285
    %2276 = vmatpush1.msra.mxu0 %v1284
    %2277 = vmatprep.subr.mxu0 %v1298
    %2278 = vmatpush1.msra.mxu0 %v1297
    %2279 = vmatprep.subr.mxu0 %v1311
    %2280 = vmatpush1.msra.mxu0 %v1310
    %2281 = vmatprep.mubr.f32.mxu0 %v62
    %2282 = vmatmul.mubr.f32.gmra.mrb[0].mxu0 %v61
    %v2283 = vpop.f32.mrb[0].mxu0
    %v2284 = vadd.f32 %v2207, %v2283
    %v2285 = vpop.f32.mrb[0].mxu0
    %v2286 = vadd.f32 %v2209, %v2285
    %2287 = vmatprep.mubr.f32.mxu0 %v69
    %2288 = vmatmul.mubr.f32.gmra.mrb[0].mxu0 %v68
    %v2289 = vpop.f32.mrb[0].mxu0
    %v2290 = vadd.f32 %v2213, %v2289
    %v2291 = vpop.f32.mrb[0].mxu0
    %v2292 = vadd.f32 %v2215, %v2291
    %2293 = vdwg.mxu0
    %2294 = vmatprep.subr.mxu0 %v1324
    %2295 = vmatpush1.msra.mxu0 %v1323
    %2296 = vmatprep.subr.mxu0 %v1337
    %2297 = vmatpush1.msra.mxu0 %v1336
    %2298 = vmatprep.subr.mxu0 %v1350
    %2299 = vmatpush1.msra.mxu0 %v1349
    %2300 = vmatprep.subr.mxu0 %v1363
    %2301 = vmatpush1.msra.mxu0 %v1362
    %2302 = vmatprep.subr.mxu0 0.0
    %2303 = vmatpush1.msra.mxu0 0.0
    %2304 = vmatprep.subr.mxu0 0.0
    %2305 = vmatpush1.msra.mxu0 0.0
    %2306 = vmatprep.subr.mxu0 0.0
    %2307 = vmatpush1.msra.mxu0 0.0
    %2308 = vmatprep.subr.mxu0 0.0
    %2309 = vmatpush1.msra.mxu0 0.0
    %2310 = vmatprep.subr.mxu0 0.0
    %2311 = vmatpush1.msra.mxu0 0.0
    %2312 = vmatprep.subr.mxu0 0.0
    %2313 = vmatpush1.msra.mxu0 0.0
    %2314 = vmatprep.subr.mxu0 0.0
    %2315 = vmatpush1.msra.mxu0 0.0
    %2316 = vmatprep.subr.mxu0 0.0
    %2317 = vmatpush1.msra.mxu0 0.0
    %2318 = vmatprep.subr.mxu0 0.0
    %2319 = vmatpush1.msra.mxu0 0.0
    %2320 = vmatprep.subr.mxu0 0.0
    %2321 = vmatpush1.msra.mxu0 0.0
    %2322 = vmatprep.subr.mxu0 0.0
    %2323 = vmatpush1.msra.mxu0 0.0
    %2324 = vmatprep.subr.mxu0 0.0
    %2325 = vmatpush1.msra.mxu0 0.0
    %2326 = vmatprep.subr.mxu0 0.0
    %2327 = vmatpush1.msra.mxu0 0.0
    %2328 = vmatprep.subr.mxu0 0.0
    %2329 = vmatpush1.msra.mxu0 0.0
    %2330 = vmatprep.subr.mxu0 0.0
    %2331 = vmatpush1.msra.mxu0 0.0
    %2332 = vmatprep.subr.mxu0 0.0
    %2333 = vmatpush1.msra.mxu0 0.0
    %2334 = vmatprep.subr.mxu0 0.0
    %2335 = vmatpush1.msra.mxu0 0.0
    %2336 = vmatprep.subr.mxu0 0.0
    %2337 = vmatpush1.msra.mxu0 0.0
    %2338 = vmatprep.subr.mxu0 0.0
    %2339 = vmatpush1.msra.mxu0 0.0
    %2340 = vmatprep.subr.mxu0 0.0
    %2341 = vmatpush1.msra.mxu0 0.0
    %2342 = vmatprep.subr.mxu0 0.0
    %2343 = vmatpush1.msra.mxu0 0.0
    %2344 = vmatprep.subr.mxu0 0.0
    %2345 = vmatpush1.msra.mxu0 0.0
    %2346 = vmatprep.subr.mxu0 0.0
    %2347 = vmatpush1.msra.mxu0 0.0
    %2348 = vmatprep.subr.mxu0 0.0
    %2349 = vmatpush1.msra.mxu0 0.0
    %2350 = vmatprep.subr.mxu0 0.0
    %2351 = vmatpush1.msra.mxu0 0.0
    %2352 = vmatprep.subr.mxu0 0.0
    %2353 = vmatpush1.msra.mxu0 0.0
    %2354 = vmatprep.subr.mxu0 0.0
    %2355 = vmatpush1.msra.mxu0 0.0
    %2356 = vmatprep.subr.mxu0 0.0
    %2357 = vmatpush1.msra.mxu0 0.0
    %2358 = vmatprep.mubr.f32.mxu0 0.0
    %2359 = vmatmul.mubr.f32.gmra.mrb[0].mxu0 %v1442
    %v2360 = vpop.f32.mrb[0].mxu0
    %v2361 = vadd.f32 %v2284, %v2360
    %v2362 = vpop.f32.mrb[0].mxu0
    %v2363 = vadd.f32 %v2286, %v2362
    %2364 = vmatprep.mubr.f32.mxu0 0.0
    %2365 = vmatmul.mubr.f32.gmra.mrb[0].mxu0 %v1445
    %v2366 = vpop.f32.mrb[0].mxu0
    %v2367 = vadd.f32 %v2290, %v2366
    %v2368 = vpop.f32.mrb[0].mxu0
    %v2369 = vadd.f32 %v2292, %v2368
    %2370 = vdwg.mxu0
    %2371 = vmatprep.subr.mxu0 %v78
    %2372 = vmatpush1.msra.mxu0 %v77
    %2373 = vmatprep.subr.mxu0 %v91
    %2374 = vmatpush1.msra.mxu0 %v90
    %2375 = vmatprep.subr.mxu0 %v104
    %2376 = vmatpush1.msra.mxu0 %v103
    %2377 = vmatprep.subr.mxu0 %v117
    %2378 = vmatpush1.msra.mxu0 %v116
    %2379 = vmatprep.subr.mxu0 %v130
    %2380 = vmatpush1.msra.mxu0 %v129
    %2381 = vmatprep.subr.mxu0 %v143
    %2382 = vmatpush1.msra.mxu0 %v142
    %2383 = vmatprep.subr.mxu0 %v156
    %2384 = vmatpush1.msra.mxu0 %v155
    %2385 = vmatprep.subr.mxu0 %v169
    %2386 = vmatpush1.msra.mxu0 %v168
    %2387 = vmatprep.subr.mxu0 %v182
    %2388 = vmatpush1.msra.mxu0 %v181
    %2389 = vmatprep.subr.mxu0 %v195
    %2390 = vmatpush1.msra.mxu0 %v194
    %2391 = vmatprep.subr.mxu0 %v208
    %2392 = vmatpush1.msra.mxu0 %v207
    %2393 = vmatprep.subr.mxu0 %v221
    %2394 = vmatpush1.msra.mxu0 %v220
    %2395 = vmatprep.subr.mxu0 %v234
    %2396 = vmatpush1.msra.mxu0 %v233
    %2397 = vmatprep.subr.mxu0 %v247
    %2398 = vmatpush1.msra.mxu0 %v246
    %2399 = vmatprep.subr.mxu0 %v260
    %2400 = vmatpush1.msra.mxu0 %v259
    %2401 = vmatprep.subr.mxu0 %v273
    %2402 = vmatpush1.msra.mxu0 %v272
    %2403 = vmatprep.subr.mxu0 %v286
    %2404 = vmatpush1.msra.mxu0 %v285
    %2405 = vmatprep.subr.mxu0 %v299
    %2406 = vmatpush1.msra.mxu0 %v298
    %2407 = vmatprep.subr.mxu0 %v312
    %2408 = vmatpush1.msra.mxu0 %v311
    %2409 = vmatprep.subr.mxu0 %v325
    %2410 = vmatpush1.msra.mxu0 %v324
    %2411 = vmatprep.subr.mxu0 %v338
    %2412 = vmatpush1.msra.mxu0 %v337
    %2413 = vmatprep.subr.mxu0 %v351
    %2414 = vmatpush1.msra.mxu0 %v350
    %2415 = vmatprep.subr.mxu0 %v364
    %2416 = vmatpush1.msra.mxu0 %v363
    %2417 = vmatprep.subr.mxu0 %v377
    %2418 = vmatpush1.msra.mxu0 %v376
    %2419 = vmatprep.subr.mxu0 %v390
    %2420 = vmatpush1.msra.mxu0 %v389
    %2421 = vmatprep.subr.mxu0 %v403
    %2422 = vmatpush1.msra.mxu0 %v402
    %2423 = vmatprep.subr.mxu0 %v416
    %2424 = vmatpush1.msra.mxu0 %v415
    %2425 = vmatprep.subr.mxu0 %v429
    %2426 = vmatpush1.msra.mxu0 %v428
    %2427 = vmatprep.subr.mxu0 %v442
    %2428 = vmatpush1.msra.mxu0 %v441
    %2429 = vmatprep.subr.mxu0 %v455
    %2430 = vmatpush1.msra.mxu0 %v454
    %2431 = vmatprep.subr.mxu0 %v468
    %2432 = vmatpush1.msra.mxu0 %v467
    %2433 = vmatprep.subr.mxu0 %v481
    %2434 = vmatpush1.msra.mxu0 %v480
    %2435 = vmatprep.mubr.f32.mxu0 %v58
    %2436 = vmatmul.mubr.f32.gmra.mrb[0].mxu0 %v57
    %v2437 = vpop.f32.mrb[0].mxu0
    %v2438 = vadd.f32 %v1402, %v2437
    %v2439 = vpop.f32.mrb[0].mxu0
    %v2440 = vadd.f32 %v1406, %v2439
    %2441 = vmatprep.mubr.f32.mxu0 %v65
    %2442 = vmatmul.mubr.f32.gmra.mrb[0].mxu0 %v64
    %v2443 = vpop.f32.mrb[0].mxu0
    %v2444 = vadd.f32 %v1402, %v2443
    %v2445 = vpop.f32.mrb[0].mxu0
    %v2446 = vadd.f32 %v1406, %v2445
    %2447 = vdwg.mxu0
    %2448 = vmatprep.subr.mxu0 %v494
    %2449 = vmatpush1.msra.mxu0 %v493
    %2450 = vmatprep.subr.mxu0 %v507
    %2451 = vmatpush1.msra.mxu0 %v506
    %2452 = vmatprep.subr.mxu0 %v520
    %2453 = vmatpush1.msra.mxu0 %v519
    %2454 = vmatprep.subr.mxu0 %v533
    %2455 = vmatpush1.msra.mxu0 %v532
    %2456 = vmatprep.subr.mxu0 %v546
    %2457 = vmatpush1.msra.mxu0 %v545
    %2458 = vmatprep.subr.mxu0 %v559
    %2459 = vmatpush1.msra.mxu0 %v558
    %2460 = vmatprep.subr.mxu0 %v572
    %2461 = vmatpush1.msra.mxu0 %v571
    %2462 = vmatprep.subr.mxu0 %v585
    %2463 = vmatpush1.msra.mxu0 %v584
    %2464 = vmatprep.subr.mxu0 %v598
    %2465 = vmatpush1.msra.mxu0 %v597
    %2466 = vmatprep.subr.mxu0 %v611
    %2467 = vmatpush1.msra.mxu0 %v610
    %2468 = vmatprep.subr.mxu0 %v624
    %2469 = vmatpush1.msra.mxu0 %v623
    %2470 = vmatprep.subr.mxu0 %v637
    %2471 = vmatpush1.msra.mxu0 %v636
    %2472 = vmatprep.subr.mxu0 %v650
    %2473 = vmatpush1.msra.mxu0 %v649
    %2474 = vmatprep.subr.mxu0 %v663
    %2475 = vmatpush1.msra.mxu0 %v662
    %2476 = vmatprep.subr.mxu0 %v676
    %2477 = vmatpush1.msra.mxu0 %v675
    %2478 = vmatprep.subr.mxu0 %v689
    %2479 = vmatpush1.msra.mxu0 %v688
    %2480 = vmatprep.subr.mxu0 %v702
    %2481 = vmatpush1.msra.mxu0 %v701
    %2482 = vmatprep.subr.mxu0 %v715
    %2483 = vmatpush1.msra.mxu0 %v714
    %2484 = vmatprep.subr.mxu0 %v728
    %2485 = vmatpush1.msra.mxu0 %v727
    %2486 = vmatprep.subr.mxu0 %v741
    %2487 = vmatpush1.msra.mxu0 %v740
    %2488 = vmatprep.subr.mxu0 %v754
    %2489 = vmatpush1.msra.mxu0 %v753
    %2490 = vmatprep.subr.mxu0 %v767
    %2491 = vmatpush1.msra.mxu0 %v766
    %2492 = vmatprep.subr.mxu0 %v780
    %2493 = vmatpush1.msra.mxu0 %v779
    %2494 = vmatprep.subr.mxu0 %v793
    %2495 = vmatpush1.msra.mxu0 %v792
    %2496 = vmatprep.subr.mxu0 %v806
    %2497 = vmatpush1.msra.mxu0 %v805
    %2498 = vmatprep.subr.mxu0 %v819
    %2499 = vmatpush1.msra.mxu0 %v818
    %2500 = vmatprep.subr.mxu0 %v832
    %2501 = vmatpush1.msra.mxu0 %v831
    %2502 = vmatprep.subr.mxu0 %v845
    %2503 = vmatpush1.msra.mxu0 %v844
    %2504 = vmatprep.subr.mxu0 %v858
    %2505 = vmatpush1.msra.mxu0 %v857
    %2506 = vmatprep.subr.mxu0 %v871
    %2507 = vmatpush1.msra.mxu0 %v870
    %2508 = vmatprep.subr.mxu0 %v884
    %2509 = vmatpush1.msra.mxu0 %v883
    %2510 = vmatprep.subr.mxu0 %v897
    %2511 = vmatpush1.msra.mxu0 %v896
    %2512 = vmatprep.mubr.f32.mxu0 %v60
    %2513 = vmatmul.mubr.f32.gmra.mrb[0].mxu0 %v59
    %v2514 = vpop.f32.mrb[0].mxu0
    %v2515 = vadd.f32 %v2438, %v2514
    %v2516 = vpop.f32.mrb[0].mxu0
    %v2517 = vadd.f32 %v2440, %v2516
    %2518 = vmatprep.mubr.f32.mxu0 %v67
    %2519 = vmatmul.mubr.f32.gmra.mrb[0].mxu0 %v66
    %v2520 = vpop.f32.mrb[0].mxu0
    %v2521 = vadd.f32 %v2444, %v2520
    %v2522 = vpop.f32.mrb[0].mxu0
    %v2523 = vadd.f32 %v2446, %v2522
    %2524 = vdwg.mxu0
    %2525 = vmatprep.subr.mxu0 %v910
    %2526 = vmatpush1.msra.mxu0 %v909
    %2527 = vmatprep.subr.mxu0 %v923
    %2528 = vmatpush1.msra.mxu0 %v922
    %2529 = vmatprep.subr.mxu0 %v936
    %2530 = vmatpush1.msra.mxu0 %v935
    %2531 = vmatprep.subr.mxu0 %v949
    %2532 = vmatpush1.msra.mxu0 %v948
    %2533 = vmatprep.subr.mxu0 %v962
    %2534 = vmatpush1.msra.mxu0 %v961
    %2535 = vmatprep.subr.mxu0 %v975
    %2536 = vmatpush1.msra.mxu0 %v974
    %2537 = vmatprep.subr.mxu0 %v988
    %2538 = vmatpush1.msra.mxu0 %v987
    %2539 = vmatprep.subr.mxu0 %v1001
    %2540 = vmatpush1.msra.mxu0 %v1000
    %2541 = vmatprep.subr.mxu0 %v1014
    %2542 = vmatpush1.msra.mxu0 %v1013
    %2543 = vmatprep.subr.mxu0 %v1027
    %2544 = vmatpush1.msra.mxu0 %v1026
    %2545 = vmatprep.subr.mxu0 %v1040
    %2546 = vmatpush1.msra.mxu0 %v1039
    %2547 = vmatprep.subr.mxu0 %v1053
    %2548 = vmatpush1.msra.mxu0 %v1052
    %2549 = vmatprep.subr.mxu0 %v1066
    %2550 = vmatpush1.msra.mxu0 %v1065
    %2551 = vmatprep.subr.mxu0 %v1079
    %2552 = vmatpush1.msra.mxu0 %v1078
    %2553 = vmatprep.subr.mxu0 %v1092
    %2554 = vmatpush1.msra.mxu0 %v1091
    %2555 = vmatprep.subr.mxu0 %v1105
    %2556 = vmatpush1.msra.mxu0 %v1104
    %2557 = vmatprep.subr.mxu0 %v1118
    %2558 = vmatpush1.msra.mxu0 %v1117
    %2559 = vmatprep.subr.mxu0 %v1131
    %2560 = vmatpush1.msra.mxu0 %v1130
    %2561 = vmatprep.subr.mxu0 %v1144
    %2562 = vmatpush1.msra.mxu0 %v1143
    %2563 = vmatprep.subr.mxu0 %v1157
    %2564 = vmatpush1.msra.mxu0 %v1156
    %2565 = vmatprep.subr.mxu0 %v1170
    %2566 = vmatpush1.msra.mxu0 %v1169
    %2567 = vmatprep.subr.mxu0 %v1183
    %2568 = vmatpush1.msra.mxu0 %v1182
    %2569 = vmatprep.subr.mxu0 %v1196
    %2570 = vmatpush1.msra.mxu0 %v1195
    %2571 = vmatprep.subr.mxu0 %v1209
    %2572 = vmatpush1.msra.mxu0 %v1208
    %2573 = vmatprep.subr.mxu0 %v1222
    %2574 = vmatpush1.msra.mxu0 %v1221
    %2575 = vmatprep.subr.mxu0 %v1235
    %2576 = vmatpush1.msra.mxu0 %v1234
    %2577 = vmatprep.subr.mxu0 %v1248
    %2578 = vmatpush1.msra.mxu0 %v1247
    %2579 = vmatprep.subr.mxu0 %v1261
    %2580 = vmatpush1.msra.mxu0 %v1260
    %2581 = vmatprep.subr.mxu0 %v1274
    %2582 = vmatpush1.msra.mxu0 %v1273
    %2583 = vmatprep.subr.mxu0 %v1287
    %2584 = vmatpush1.msra.mxu0 %v1286
    %2585 = vmatprep.subr.mxu0 %v1300
    %2586 = vmatpush1.msra.mxu0 %v1299
    %2587 = vmatprep.subr.mxu0 %v1313
    %2588 = vmatpush1.msra.mxu0 %v1312
    %2589 = vmatprep.mubr.f32.mxu0 %v62
    %2590 = vmatmul.mubr.f32.gmra.mrb[0].mxu0 %v61
    %v2591 = vpop.f32.mrb[0].mxu0
    %v2592 = vadd.f32 %v2515, %v2591
    %v2593 = vpop.f32.mrb[0].mxu0
    %v2594 = vadd.f32 %v2517, %v2593
    %2595 = vmatprep.mubr.f32.mxu0 %v69
    %2596 = vmatmul.mubr.f32.gmra.mrb[0].mxu0 %v68
    %v2597 = vpop.f32.mrb[0].mxu0
    %v2598 = vadd.f32 %v2521, %v2597
    %v2599 = vpop.f32.mrb[0].mxu0
    %v2600 = vadd.f32 %v2523, %v2599
    %2601 = vdwg.mxu0
    %2602 = vmatprep.subr.mxu0 %v1326
    %2603 = vmatpush1.msra.mxu0 %v1325
    %2604 = vmatprep.subr.mxu0 %v1339
    %2605 = vmatpush1.msra.mxu0 %v1338
    %2606 = vmatprep.subr.mxu0 %v1352
    %2607 = vmatpush1.msra.mxu0 %v1351
    %2608 = vmatprep.subr.mxu0 %v1365
    %2609 = vmatpush1.msra.mxu0 %v1364
    %2610 = vmatprep.subr.mxu0 0.0
    %2611 = vmatpush1.msra.mxu0 0.0
    %2612 = vmatprep.subr.mxu0 0.0
    %2613 = vmatpush1.msra.mxu0 0.0
    %2614 = vmatprep.subr.mxu0 0.0
    %2615 = vmatpush1.msra.mxu0 0.0
    %2616 = vmatprep.subr.mxu0 0.0
    %2617 = vmatpush1.msra.mxu0 0.0
    %2618 = vmatprep.subr.mxu0 0.0
    %2619 = vmatpush1.msra.mxu0 0.0
    %2620 = vmatprep.subr.mxu0 0.0
    %2621 = vmatpush1.msra.mxu0 0.0
    %2622 = vmatprep.subr.mxu0 0.0
    %2623 = vmatpush1.msra.mxu0 0.0
    %2624 = vmatprep.subr.mxu0 0.0
    %2625 = vmatpush1.msra.mxu0 0.0
    %2626 = vmatprep.subr.mxu0 0.0
    %2627 = vmatpush1.msra.mxu0 0.0
    %2628 = vmatprep.subr.mxu0 0.0
    %2629 = vmatpush1.msra.mxu0 0.0
    %2630 = vmatprep.subr.mxu0 0.0
    %2631 = vmatpush1.msra.mxu0 0.0
    %2632 = vmatprep.subr.mxu0 0.0
    %2633 = vmatpush1.msra.mxu0 0.0
    %2634 = vmatprep.subr.mxu0 0.0
    %2635 = vmatpush1.msra.mxu0 0.0
    %2636 = vmatprep.subr.mxu0 0.0
    %2637 = vmatpush1.msra.mxu0 0.0
    %2638 = vmatprep.subr.mxu0 0.0
    %2639 = vmatpush1.msra.mxu0 0.0
    %2640 = vmatprep.subr.mxu0 0.0
    %2641 = vmatpush1.msra.mxu0 0.0
    %2642 = vmatprep.subr.mxu0 0.0
    %2643 = vmatpush1.msra.mxu0 0.0
    %2644 = vmatprep.subr.mxu0 0.0
    %2645 = vmatpush1.msra.mxu0 0.0
    %2646 = vmatprep.subr.mxu0 0.0
    %2647 = vmatpush1.msra.mxu0 0.0
    %2648 = vmatprep.subr.mxu0 0.0
    %2649 = vmatpush1.msra.mxu0 0.0
    %2650 = vmatprep.subr.mxu0 0.0
    %2651 = vmatpush1.msra.mxu0 0.0
    %2652 = vmatprep.subr.mxu0 0.0
    %2653 = vmatpush1.msra.mxu0 0.0
    %2654 = vmatprep.subr.mxu0 0.0
    %2655 = vmatpush1.msra.mxu0 0.0
    %2656 = vmatprep.subr.mxu0 0.0
    %2657 = vmatpush1.msra.mxu0 0.0
    %2658 = vmatprep.subr.mxu0 0.0
    %2659 = vmatpush1.msra.mxu0 0.0
    %2660 = vmatprep.subr.mxu0 0.0
    %2661 = vmatpush1.msra.mxu0 0.0
    %2662 = vmatprep.subr.mxu0 0.0
    %2663 = vmatpush1.msra.mxu0 0.0
    %2664 = vmatprep.subr.mxu0 0.0
    %2665 = vmatpush1.msra.mxu0 0.0
    %2666 = vmatprep.mubr.f32.mxu0 0.0
    %2667 = vmatmul.mubr.f32.gmra.mrb[0].mxu0 %v1442
    %v2668 = vpop.f32.mrb[0].mxu0
    %v2669 = vadd.f32 %v2592, %v2668
    %v2670 = vpop.f32.mrb[0].mxu0
    %v2671 = vadd.f32 %v2594, %v2670
    %2672 = vmatprep.mubr.f32.mxu0 0.0
    %2673 = vmatmul.mubr.f32.gmra.mrb[0].mxu0 %v1445
    %v2674 = vpop.f32.mrb[0].mxu0
    %v2675 = vadd.f32 %v2598, %v2674
    %v2676 = vpop.f32.mrb[0].mxu0
    %v2677 = vadd.f32 %v2600, %v2676
    %2678 = vdwg.mxu0
    %2679 = vmatprep.subr.mxu0 %v80
    %2680 = vmatpush1.msra.mxu0 %v79
    %2681 = vmatprep.subr.mxu0 %v93
    %2682 = vmatpush1.msra.mxu0 %v92
    %2683 = vmatprep.subr.mxu0 %v106
    %2684 = vmatpush1.msra.mxu0 %v105
    %2685 = vmatprep.subr.mxu0 %v119
    %2686 = vmatpush1.msra.mxu0 %v118
    %2687 = vmatprep.subr.mxu0 %v132
    %2688 = vmatpush1.msra.mxu0 %v131
    %2689 = vmatprep.subr.mxu0 %v145
    %2690 = vmatpush1.msra.mxu0 %v144
    %2691 = vmatprep.subr.mxu0 %v158
    %2692 = vmatpush1.msra.mxu0 %v157
    %2693 = vmatprep.subr.mxu0 %v171
    %2694 = vmatpush1.msra.mxu0 %v170
    %2695 = vmatprep.subr.mxu0 %v184
    %2696 = vmatpush1.msra.mxu0 %v183
    %2697 = vmatprep.subr.mxu0 %v197
    %2698 = vmatpush1.msra.mxu0 %v196
    %2699 = vmatprep.subr.mxu0 %v210
    %2700 = vmatpush1.msra.mxu0 %v209
    %2701 = vmatprep.subr.mxu0 %v223
    %2702 = vmatpush1.msra.mxu0 %v222
    %2703 = vmatprep.subr.mxu0 %v236
    %2704 = vmatpush1.msra.mxu0 %v235
    %2705 = vmatprep.subr.mxu0 %v249
    %2706 = vmatpush1.msra.mxu0 %v248
    %2707 = vmatprep.subr.mxu0 %v262
    %2708 = vmatpush1.msra.mxu0 %v261
    %2709 = vmatprep.subr.mxu0 %v275
    %2710 = vmatpush1.msra.mxu0 %v274
    %2711 = vmatprep.subr.mxu0 %v288
    %2712 = vmatpush1.msra.mxu0 %v287
    %2713 = vmatprep.subr.mxu0 %v301
    %2714 = vmatpush1.msra.mxu0 %v300
    %2715 = vmatprep.subr.mxu0 %v314
    %2716 = vmatpush1.msra.mxu0 %v313
    %2717 = vmatprep.subr.mxu0 %v327
    %2718 = vmatpush1.msra.mxu0 %v326
    %2719 = vmatprep.subr.mxu0 %v340
    %2720 = vmatpush1.msra.mxu0 %v339
    %2721 = vmatprep.subr.mxu0 %v353
    %2722 = vmatpush1.msra.mxu0 %v352
    %2723 = vmatprep.subr.mxu0 %v366
    %2724 = vmatpush1.msra.mxu0 %v365
    %2725 = vmatprep.subr.mxu0 %v379
    %2726 = vmatpush1.msra.mxu0 %v378
    %2727 = vmatprep.subr.mxu0 %v392
    %2728 = vmatpush1.msra.mxu0 %v391
    %2729 = vmatprep.subr.mxu0 %v405
    %2730 = vmatpush1.msra.mxu0 %v404
    %2731 = vmatprep.subr.mxu0 %v418
    %2732 = vmatpush1.msra.mxu0 %v417
    %2733 = vmatprep.subr.mxu0 %v431
    %2734 = vmatpush1.msra.mxu0 %v430
    %2735 = vmatprep.subr.mxu0 %v444
    %2736 = vmatpush1.msra.mxu0 %v443
    %2737 = vmatprep.subr.mxu0 %v457
    %2738 = vmatpush1.msra.mxu0 %v456
    %2739 = vmatprep.subr.mxu0 %v470
    %2740 = vmatpush1.msra.mxu0 %v469
    %2741 = vmatprep.subr.mxu0 %v483
    %2742 = vmatpush1.msra.mxu0 %v482
    %2743 = vmatprep.mubr.f32.mxu0 %v58
    %2744 = vmatmul.mubr.f32.gmra.mrb[0].mxu0 %v57
    %v2745 = vpop.f32.mrb[0].mxu0
    %v2746 = vadd.f32 %v1410, %v2745
    %v2747 = vpop.f32.mrb[0].mxu0
    %v2748 = vadd.f32 %v1414, %v2747
    %2749 = vmatprep.mubr.f32.mxu0 %v65
    %2750 = vmatmul.mubr.f32.gmra.mrb[0].mxu0 %v64
    %v2751 = vpop.f32.mrb[0].mxu0
    %v2752 = vadd.f32 %v1410, %v2751
    %v2753 = vpop.f32.mrb[0].mxu0
    %v2754 = vadd.f32 %v1414, %v2753
    %2755 = vdwg.mxu0
    %2756 = vmatprep.subr.mxu0 %v496
    %2757 = vmatpush1.msra.mxu0 %v495
    %2758 = vmatprep.subr.mxu0 %v509
    %2759 = vmatpush1.msra.mxu0 %v508
    %2760 = vmatprep.subr.mxu0 %v522
    %2761 = vmatpush1.msra.mxu0 %v521
    %2762 = vmatprep.subr.mxu0 %v535
    %2763 = vmatpush1.msra.mxu0 %v534
    %2764 = vmatprep.subr.mxu0 %v548
    %2765 = vmatpush1.msra.mxu0 %v547
    %2766 = vmatprep.subr.mxu0 %v561
    %2767 = vmatpush1.msra.mxu0 %v560
    %2768 = vmatprep.subr.mxu0 %v574
    %2769 = vmatpush1.msra.mxu0 %v573
    %2770 = vmatprep.subr.mxu0 %v587
    %2771 = vmatpush1.msra.mxu0 %v586
    %2772 = vmatprep.subr.mxu0 %v600
    %2773 = vmatpush1.msra.mxu0 %v599
    %2774 = vmatprep.subr.mxu0 %v613
    %2775 = vmatpush1.msra.mxu0 %v612
    %2776 = vmatprep.subr.mxu0 %v626
    %2777 = vmatpush1.msra.mxu0 %v625
    %2778 = vmatprep.subr.mxu0 %v639
    %2779 = vmatpush1.msra.mxu0 %v638
    %2780 = vmatprep.subr.mxu0 %v652
    %2781 = vmatpush1.msra.mxu0 %v651
    %2782 = vmatprep.subr.mxu0 %v665
    %2783 = vmatpush1.msra.mxu0 %v664
    %2784 = vmatprep.subr.mxu0 %v678
    %2785 = vmatpush1.msra.mxu0 %v677
    %2786 = vmatprep.subr.mxu0 %v691
    %2787 = vmatpush1.msra.mxu0 %v690
    %2788 = vmatprep.subr.mxu0 %v704
    %2789 = vmatpush1.msra.mxu0 %v703
    %2790 = vmatprep.subr.mxu0 %v717
    %2791 = vmatpush1.msra.mxu0 %v716
    %2792 = vmatprep.subr.mxu0 %v730
    %2793 = vmatpush1.msra.mxu0 %v729
    %2794 = vmatprep.subr.mxu0 %v743
    %2795 = vmatpush1.msra.mxu0 %v742
    %2796 = vmatprep.subr.mxu0 %v756
    %2797 = vmatpush1.msra.mxu0 %v755
    %2798 = vmatprep.subr.mxu0 %v769
    %2799 = vmatpush1.msra.mxu0 %v768
    %2800 = vmatprep.subr.mxu0 %v782
    %2801 = vmatpush1.msra.mxu0 %v781
    %2802 = vmatprep.subr.mxu0 %v795
    %2803 = vmatpush1.msra.mxu0 %v794
    %2804 = vmatprep.subr.mxu0 %v808
    %2805 = vmatpush1.msra.mxu0 %v807
    %2806 = vmatprep.subr.mxu0 %v821
    %2807 = vmatpush1.msra.mxu0 %v820
    %2808 = vmatprep.subr.mxu0 %v834
    %2809 = vmatpush1.msra.mxu0 %v833
    %2810 = vmatprep.subr.mxu0 %v847
    %2811 = vmatpush1.msra.mxu0 %v846
    %2812 = vmatprep.subr.mxu0 %v860
    %2813 = vmatpush1.msra.mxu0 %v859
    %2814 = vmatprep.subr.mxu0 %v873
    %2815 = vmatpush1.msra.mxu0 %v872
    %2816 = vmatprep.subr.mxu0 %v886
    %2817 = vmatpush1.msra.mxu0 %v885
    %2818 = vmatprep.subr.mxu0 %v899
    %2819 = vmatpush1.msra.mxu0 %v898
    %2820 = vmatprep.mubr.f32.mxu0 %v60
    %2821 = vmatmul.mubr.f32.gmra.mrb[0].mxu0 %v59
    %v2822 = vpop.f32.mrb[0].mxu0
    %v2823 = vadd.f32 %v2746, %v2822
    %v2824 = vpop.f32.mrb[0].mxu0
    %v2825 = vadd.f32 %v2748, %v2824
    %2826 = vmatprep.mubr.f32.mxu0 %v67
    %2827 = vmatmul.mubr.f32.gmra.mrb[0].mxu0 %v66
    %v2828 = vpop.f32.mrb[0].mxu0
    %v2829 = vadd.f32 %v2752, %v2828
    %v2830 = vpop.f32.mrb[0].mxu0
    %v2831 = vadd.f32 %v2754, %v2830
    %2832 = vdwg.mxu0
    %2833 = vmatprep.subr.mxu0 %v912
    %2834 = vmatpush1.msra.mxu0 %v911
    %2835 = vmatprep.subr.mxu0 %v925
    %2836 = vmatpush1.msra.mxu0 %v924
    %2837 = vmatprep.subr.mxu0 %v938
    %2838 = vmatpush1.msra.mxu0 %v937
    %2839 = vmatprep.subr.mxu0 %v951
    %2840 = vmatpush1.msra.mxu0 %v950
    %2841 = vmatprep.subr.mxu0 %v964
    %2842 = vmatpush1.msra.mxu0 %v963
    %2843 = vmatprep.subr.mxu0 %v977
    %2844 = vmatpush1.msra.mxu0 %v976
    %2845 = vmatprep.subr.mxu0 %v990
    %2846 = vmatpush1.msra.mxu0 %v989
    %2847 = vmatprep.subr.mxu0 %v1003
    %2848 = vmatpush1.msra.mxu0 %v1002
    %2849 = vmatprep.subr.mxu0 %v1016
    %2850 = vmatpush1.msra.mxu0 %v1015
    %2851 = vmatprep.subr.mxu0 %v1029
    %2852 = vmatpush1.msra.mxu0 %v1028
    %2853 = vmatprep.subr.mxu0 %v1042
    %2854 = vmatpush1.msra.mxu0 %v1041
    %2855 = vmatprep.subr.mxu0 %v1055
    %2856 = vmatpush1.msra.mxu0 %v1054
    %2857 = vmatprep.subr.mxu0 %v1068
    %2858 = vmatpush1.msra.mxu0 %v1067
    %2859 = vmatprep.subr.mxu0 %v1081
    %2860 = vmatpush1.msra.mxu0 %v1080
    %2861 = vmatprep.subr.mxu0 %v1094
    %2862 = vmatpush1.msra.mxu0 %v1093
    %2863 = vmatprep.subr.mxu0 %v1107
    %2864 = vmatpush1.msra.mxu0 %v1106
    %2865 = vmatprep.subr.mxu0 %v1120
    %2866 = vmatpush1.msra.mxu0 %v1119
    %2867 = vmatprep.subr.mxu0 %v1133
    %2868 = vmatpush1.msra.mxu0 %v1132
    %2869 = vmatprep.subr.mxu0 %v1146
    %2870 = vmatpush1.msra.mxu0 %v1145
    %2871 = vmatprep.subr.mxu0 %v1159
    %2872 = vmatpush1.msra.mxu0 %v1158
    %2873 = vmatprep.subr.mxu0 %v1172
    %2874 = vmatpush1.msra.mxu0 %v1171
    %2875 = vmatprep.subr.mxu0 %v1185
    %2876 = vmatpush1.msra.mxu0 %v1184
    %2877 = vmatprep.subr.mxu0 %v1198
    %2878 = vmatpush1.msra.mxu0 %v1197
    %2879 = vmatprep.subr.mxu0 %v1211
    %2880 = vmatpush1.msra.mxu0 %v1210
    %2881 = vmatprep.subr.mxu0 %v1224
    %2882 = vmatpush1.msra.mxu0 %v1223
    %2883 = vmatprep.subr.mxu0 %v1237
    %2884 = vmatpush1.msra.mxu0 %v1236
    %2885 = vmatprep.subr.mxu0 %v1250
    %2886 = vmatpush1.msra.mxu0 %v1249
    %2887 = vmatprep.subr.mxu0 %v1263
    %2888 = vmatpush1.msra.mxu0 %v1262
    %2889 = vmatprep.subr.mxu0 %v1276
    %2890 = vmatpush1.msra.mxu0 %v1275
    %2891 = vmatprep.subr.mxu0 %v1289
    %2892 = vmatpush1.msra.mxu0 %v1288
    %2893 = vmatprep.subr.mxu0 %v1302
    %2894 = vmatpush1.msra.mxu0 %v1301
    %2895 = vmatprep.subr.mxu0 %v1315
    %2896 = vmatpush1.msra.mxu0 %v1314
    %2897 = vmatprep.mubr.f32.mxu0 %v62
    %2898 = vmatmul.mubr.f32.gmra.mrb[0].mxu0 %v61
    %v2899 = vpop.f32.mrb[0].mxu0
    %v2900 = vadd.f32 %v2823, %v2899
    %v2901 = vpop.f32.mrb[0].mxu0
    %v2902 = vadd.f32 %v2825, %v2901
    %2903 = vmatprep.mubr.f32.mxu0 %v69
    %2904 = vmatmul.mubr.f32.gmra.mrb[0].mxu0 %v68
    %v2905 = vpop.f32.mrb[0].mxu0
    %v2906 = vadd.f32 %v2829, %v2905
    %v2907 = vpop.f32.mrb[0].mxu0
    %v2908 = vadd.f32 %v2831, %v2907
    %2909 = vdwg.mxu0
    %2910 = vmatprep.subr.mxu0 %v1328
    %2911 = vmatpush1.msra.mxu0 %v1327
    %2912 = vmatprep.subr.mxu0 %v1341
    %2913 = vmatpush1.msra.mxu0 %v1340
    %2914 = vmatprep.subr.mxu0 %v1354
    %2915 = vmatpush1.msra.mxu0 %v1353
    %2916 = vmatprep.subr.mxu0 %v1367
    %2917 = vmatpush1.msra.mxu0 %v1366
    %2918 = vmatprep.subr.mxu0 0.0
    %2919 = vmatpush1.msra.mxu0 0.0
    %2920 = vmatprep.subr.mxu0 0.0
    %2921 = vmatpush1.msra.mxu0 0.0
    %2922 = vmatprep.subr.mxu0 0.0
    %2923 = vmatpush1.msra.mxu0 0.0
    %2924 = vmatprep.subr.mxu0 0.0
    %2925 = vmatpush1.msra.mxu0 0.0
    %2926 = vmatprep.subr.mxu0 0.0
    %2927 = vmatpush1.msra.mxu0 0.0
    %2928 = vmatprep.subr.mxu0 0.0
    %2929 = vmatpush1.msra.mxu0 0.0
    %2930 = vmatprep.subr.mxu0 0.0
    %2931 = vmatpush1.msra.mxu0 0.0
    %2932 = vmatprep.subr.mxu0 0.0
    %2933 = vmatpush1.msra.mxu0 0.0
    %2934 = vmatprep.subr.mxu0 0.0
    %2935 = vmatpush1.msra.mxu0 0.0
    %2936 = vmatprep.subr.mxu0 0.0
    %2937 = vmatpush1.msra.mxu0 0.0
    %2938 = vmatprep.subr.mxu0 0.0
    %2939 = vmatpush1.msra.mxu0 0.0
    %2940 = vmatprep.subr.mxu0 0.0
    %2941 = vmatpush1.msra.mxu0 0.0
    %2942 = vmatprep.subr.mxu0 0.0
    %2943 = vmatpush1.msra.mxu0 0.0
    %2944 = vmatprep.subr.mxu0 0.0
    %2945 = vmatpush1.msra.mxu0 0.0
    %2946 = vmatprep.subr.mxu0 0.0
    %2947 = vmatpush1.msra.mxu0 0.0
    %2948 = vmatprep.subr.mxu0 0.0
    %2949 = vmatpush1.msra.mxu0 0.0
    %2950 = vmatprep.subr.mxu0 0.0
    %2951 = vmatpush1.msra.mxu0 0.0
    %2952 = vmatprep.subr.mxu0 0.0
    %2953 = vmatpush1.msra.mxu0 0.0
    %2954 = vmatprep.subr.mxu0 0.0
    %2955 = vmatpush1.msra.mxu0 0.0
    %2956 = vmatprep.subr.mxu0 0.0
    %2957 = vmatpush1.msra.mxu0 0.0
    %2958 = vmatprep.subr.mxu0 0.0
    %2959 = vmatpush1.msra.mxu0 0.0
    %2960 = vmatprep.subr.mxu0 0.0
    %2961 = vmatpush1.msra.mxu0 0.0
    %2962 = vmatprep.subr.mxu0 0.0
    %2963 = vmatpush1.msra.mxu0 0.0
    %2964 = vmatprep.subr.mxu0 0.0
    %2965 = vmatpush1.msra.mxu0 0.0
    %2966 = vmatprep.subr.mxu0 0.0
    %2967 = vmatpush1.msra.mxu0 0.0
    %2968 = vmatprep.subr.mxu0 0.0
    %2969 = vmatpush1.msra.mxu0 0.0
    %2970 = vmatprep.subr.mxu0 0.0
    %2971 = vmatpush1.msra.mxu0 0.0
    %2972 = vmatprep.subr.mxu0 0.0
    %2973 = vmatpush1.msra.mxu0 0.0
    %2974 = vmatprep.mubr.f32.mxu0 0.0
    %2975 = vmatmul.mubr.f32.gmra.mrb[0].mxu0 %v1442
    %v2976 = vpop.f32.mrb[0].mxu0
    %v2977 = vadd.f32 %v2900, %v2976
    %v2978 = vpop.f32.mrb[0].mxu0
    %v2979 = vadd.f32 %v2902, %v2978
    %2980 = vmatprep.mubr.f32.mxu0 0.0
    %2981 = vmatmul.mubr.f32.gmra.mrb[0].mxu0 %v1445
    %v2982 = vpop.f32.mrb[0].mxu0
    %v2983 = vadd.f32 %v2906, %v2982
    %v2984 = vpop.f32.mrb[0].mxu0
    %v2985 = vadd.f32 %v2908, %v2984
    %2986 = vdwg.mxu0
    %2987 = vmatprep.subr.mxu0 %v82
    %2988 = vmatpush1.msra.mxu0 %v81
    %2989 = vmatprep.subr.mxu0 %v95
    %2990 = vmatpush1.msra.mxu0 %v94
    %2991 = vmatprep.subr.mxu0 %v108
    %2992 = vmatpush1.msra.mxu0 %v107
    %2993 = vmatprep.subr.mxu0 %v121
    %2994 = vmatpush1.msra.mxu0 %v120
    %2995 = vmatprep.subr.mxu0 %v134
    %2996 = vmatpush1.msra.mxu0 %v133
    %2997 = vmatprep.subr.mxu0 %v147
    %2998 = vmatpush1.msra.mxu0 %v146
    %2999 = vmatprep.subr.mxu0 %v160
    %3000 = vmatpush1.msra.mxu0 %v159
    %3001 = vmatprep.subr.mxu0 %v173
    %3002 = vmatpush1.msra.mxu0 %v172
    %3003 = vmatprep.subr.mxu0 %v186
    %3004 = vmatpush1.msra.mxu0 %v185
    %3005 = vmatprep.subr.mxu0 %v199
    %3006 = vmatpush1.msra.mxu0 %v198
    %3007 = vmatprep.subr.mxu0 %v212
    %3008 = vmatpush1.msra.mxu0 %v211
    %3009 = vmatprep.subr.mxu0 %v225
    %3010 = vmatpush1.msra.mxu0 %v224
    %3011 = vmatprep.subr.mxu0 %v238
    %3012 = vmatpush1.msra.mxu0 %v237
    %3013 = vmatprep.subr.mxu0 %v251
    %3014 = vmatpush1.msra.mxu0 %v250
    %3015 = vmatprep.subr.mxu0 %v264
    %3016 = vmatpush1.msra.mxu0 %v263
    %3017 = vmatprep.subr.mxu0 %v277
    %3018 = vmatpush1.msra.mxu0 %v276
    %3019 = vmatprep.subr.mxu0 %v290
    %3020 = vmatpush1.msra.mxu0 %v289
    %3021 = vmatprep.subr.mxu0 %v303
    %3022 = vmatpush1.msra.mxu0 %v302
    %3023 = vmatprep.subr.mxu0 %v316
    %3024 = vmatpush1.msra.mxu0 %v315
    %3025 = vmatprep.subr.mxu0 %v329
    %3026 = vmatpush1.msra.mxu0 %v328
    %3027 = vmatprep.subr.mxu0 %v342
    %3028 = vmatpush1.msra.mxu0 %v341
    %3029 = vmatprep.subr.mxu0 %v355
    %3030 = vmatpush1.msra.mxu0 %v354
    %3031 = vmatprep.subr.mxu0 %v368
    %3032 = vmatpush1.msra.mxu0 %v367
    %3033 = vmatprep.subr.mxu0 %v381
    %3034 = vmatpush1.msra.mxu0 %v380
    %3035 = vmatprep.subr.mxu0 %v394
    %3036 = vmatpush1.msra.mxu0 %v393
    %3037 = vmatprep.subr.mxu0 %v407
    %3038 = vmatpush1.msra.mxu0 %v406
    %3039 = vmatprep.subr.mxu0 %v420
    %3040 = vmatpush1.msra.mxu0 %v419
    %3041 = vmatprep.subr.mxu0 %v433
    %3042 = vmatpush1.msra.mxu0 %v432
    %3043 = vmatprep.subr.mxu0 %v446
    %3044 = vmatpush1.msra.mxu0 %v445
    %3045 = vmatprep.subr.mxu0 %v459
    %3046 = vmatpush1.msra.mxu0 %v458
    %3047 = vmatprep.subr.mxu0 %v472
    %3048 = vmatpush1.msra.mxu0 %v471
    %3049 = vmatprep.subr.mxu0 %v485
    %3050 = vmatpush1.msra.mxu0 %v484
    %3051 = vmatprep.mubr.f32.mxu0 %v58
    %3052 = vmatmul.mubr.f32.gmra.mrb[0].mxu0 %v57
    %v3053 = vpop.f32.mrb[0].mxu0
    %v3054 = vadd.f32 %v1418, %v3053
    %v3055 = vpop.f32.mrb[0].mxu0
    %v3056 = vadd.f32 %v1422, %v3055
    %3057 = vmatprep.mubr.f32.mxu0 %v65
    %3058 = vmatmul.mubr.f32.gmra.mrb[0].mxu0 %v64
    %v3059 = vpop.f32.mrb[0].mxu0
    %v3060 = vadd.f32 %v1418, %v3059
    %v3061 = vpop.f32.mrb[0].mxu0
    %v3062 = vadd.f32 %v1422, %v3061
    %3063 = vdwg.mxu0
    %3064 = vmatprep.subr.mxu0 %v498
    %3065 = vmatpush1.msra.mxu0 %v497
    %3066 = vmatprep.subr.mxu0 %v511
    %3067 = vmatpush1.msra.mxu0 %v510
    %3068 = vmatprep.subr.mxu0 %v524
    %3069 = vmatpush1.msra.mxu0 %v523
    %3070 = vmatprep.subr.mxu0 %v537
    %3071 = vmatpush1.msra.mxu0 %v536
    %3072 = vmatprep.subr.mxu0 %v550
    %3073 = vmatpush1.msra.mxu0 %v549
    %3074 = vmatprep.subr.mxu0 %v563
    %3075 = vmatpush1.msra.mxu0 %v562
    %3076 = vmatprep.subr.mxu0 %v576
    %3077 = vmatpush1.msra.mxu0 %v575
    %3078 = vmatprep.subr.mxu0 %v589
    %3079 = vmatpush1.msra.mxu0 %v588
    %3080 = vmatprep.subr.mxu0 %v602
    %3081 = vmatpush1.msra.mxu0 %v601
    %3082 = vmatprep.subr.mxu0 %v615
    %3083 = vmatpush1.msra.mxu0 %v614
    %3084 = vmatprep.subr.mxu0 %v628
    %3085 = vmatpush1.msra.mxu0 %v627
    %3086 = vmatprep.subr.mxu0 %v641
    %3087 = vmatpush1.msra.mxu0 %v640
    %3088 = vmatprep.subr.mxu0 %v654
    %3089 = vmatpush1.msra.mxu0 %v653
    %3090 = vmatprep.subr.mxu0 %v667
    %3091 = vmatpush1.msra.mxu0 %v666
    %3092 = vmatprep.subr.mxu0 %v680
    %3093 = vmatpush1.msra.mxu0 %v679
    %3094 = vmatprep.subr.mxu0 %v693
    %3095 = vmatpush1.msra.mxu0 %v692
    %3096 = vmatprep.subr.mxu0 %v706
    %3097 = vmatpush1.msra.mxu0 %v705
    %3098 = vmatprep.subr.mxu0 %v719
    %3099 = vmatpush1.msra.mxu0 %v718
    %3100 = vmatprep.subr.mxu0 %v732
    %3101 = vmatpush1.msra.mxu0 %v731
    %3102 = vmatprep.subr.mxu0 %v745
    %3103 = vmatpush1.msra.mxu0 %v744
    %3104 = vmatprep.subr.mxu0 %v758
    %3105 = vmatpush1.msra.mxu0 %v757
    %3106 = vmatprep.subr.mxu0 %v771
    %3107 = vmatpush1.msra.mxu0 %v770
    %3108 = vmatprep.subr.mxu0 %v784
    %3109 = vmatpush1.msra.mxu0 %v783
    %3110 = vmatprep.subr.mxu0 %v797
    %3111 = vmatpush1.msra.mxu0 %v796
    %3112 = vmatprep.subr.mxu0 %v810
    %3113 = vmatpush1.msra.mxu0 %v809
    %3114 = vmatprep.subr.mxu0 %v823
    %3115 = vmatpush1.msra.mxu0 %v822
    %3116 = vmatprep.subr.mxu0 %v836
    %3117 = vmatpush1.msra.mxu0 %v835
    %3118 = vmatprep.subr.mxu0 %v849
    %3119 = vmatpush1.msra.mxu0 %v848
    %3120 = vmatprep.subr.mxu0 %v862
    %3121 = vmatpush1.msra.mxu0 %v861
    %3122 = vmatprep.subr.mxu0 %v875
    %3123 = vmatpush1.msra.mxu0 %v874
    %3124 = vmatprep.subr.mxu0 %v888
    %3125 = vmatpush1.msra.mxu0 %v887
    %3126 = vmatprep.subr.mxu0 %v901
    %3127 = vmatpush1.msra.mxu0 %v900
    %3128 = vmatprep.mubr.f32.mxu0 %v60
    %3129 = vmatmul.mubr.f32.gmra.mrb[0].mxu0 %v59
    %v3130 = vpop.f32.mrb[0].mxu0
    %v3131 = vadd.f32 %v3054, %v3130
    %v3132 = vpop.f32.mrb[0].mxu0
    %v3133 = vadd.f32 %v3056, %v3132
    %3134 = vmatprep.mubr.f32.mxu0 %v67
    %3135 = vmatmul.mubr.f32.gmra.mrb[0].mxu0 %v66
    %v3136 = vpop.f32.mrb[0].mxu0
    %v3137 = vadd.f32 %v3060, %v3136
    %v3138 = vpop.f32.mrb[0].mxu0
    %v3139 = vadd.f32 %v3062, %v3138
    %3140 = vdwg.mxu0
    %3141 = vmatprep.subr.mxu0 %v914
    %3142 = vmatpush1.msra.mxu0 %v913
    %3143 = vmatprep.subr.mxu0 %v927
    %3144 = vmatpush1.msra.mxu0 %v926
    %3145 = vmatprep.subr.mxu0 %v940
    %3146 = vmatpush1.msra.mxu0 %v939
    %3147 = vmatprep.subr.mxu0 %v953
    %3148 = vmatpush1.msra.mxu0 %v952
    %3149 = vmatprep.subr.mxu0 %v966
    %3150 = vmatpush1.msra.mxu0 %v965
    %3151 = vmatprep.subr.mxu0 %v979
    %3152 = vmatpush1.msra.mxu0 %v978
    %3153 = vmatprep.subr.mxu0 %v992
    %3154 = vmatpush1.msra.mxu0 %v991
    %3155 = vmatprep.subr.mxu0 %v1005
    %3156 = vmatpush1.msra.mxu0 %v1004
    %3157 = vmatprep.subr.mxu0 %v1018
    %3158 = vmatpush1.msra.mxu0 %v1017
    %3159 = vmatprep.subr.mxu0 %v1031
    %3160 = vmatpush1.msra.mxu0 %v1030
    %3161 = vmatprep.subr.mxu0 %v1044
    %3162 = vmatpush1.msra.mxu0 %v1043
    %3163 = vmatprep.subr.mxu0 %v1057
    %3164 = vmatpush1.msra.mxu0 %v1056
    %3165 = vmatprep.subr.mxu0 %v1070
    %3166 = vmatpush1.msra.mxu0 %v1069
    %3167 = vmatprep.subr.mxu0 %v1083
    %3168 = vmatpush1.msra.mxu0 %v1082
    %3169 = vmatprep.subr.mxu0 %v1096
    %3170 = vmatpush1.msra.mxu0 %v1095
    %3171 = vmatprep.subr.mxu0 %v1109
    %3172 = vmatpush1.msra.mxu0 %v1108
    %3173 = vmatprep.subr.mxu0 %v1122
    %3174 = vmatpush1.msra.mxu0 %v1121
    %3175 = vmatprep.subr.mxu0 %v1135
    %3176 = vmatpush1.msra.mxu0 %v1134
    %3177 = vmatprep.subr.mxu0 %v1148
    %3178 = vmatpush1.msra.mxu0 %v1147
    %3179 = vmatprep.subr.mxu0 %v1161
    %3180 = vmatpush1.msra.mxu0 %v1160
    %3181 = vmatprep.subr.mxu0 %v1174
    %3182 = vmatpush1.msra.mxu0 %v1173
    %3183 = vmatprep.subr.mxu0 %v1187
    %3184 = vmatpush1.msra.mxu0 %v1186
    %3185 = vmatprep.subr.mxu0 %v1200
    %3186 = vmatpush1.msra.mxu0 %v1199
    %3187 = vmatprep.subr.mxu0 %v1213
    %3188 = vmatpush1.msra.mxu0 %v1212
    %3189 = vmatprep.subr.mxu0 %v1226
    %3190 = vmatpush1.msra.mxu0 %v1225
    %3191 = vmatprep.subr.mxu0 %v1239
    %3192 = vmatpush1.msra.mxu0 %v1238
    %3193 = vmatprep.subr.mxu0 %v1252
    %3194 = vmatpush1.msra.mxu0 %v1251
    %3195 = vmatprep.subr.mxu0 %v1265
    %3196 = vmatpush1.msra.mxu0 %v1264
    %3197 = vmatprep.subr.mxu0 %v1278
    %3198 = vmatpush1.msra.mxu0 %v1277
    %3199 = vmatprep.subr.mxu0 %v1291
    %3200 = vmatpush1.msra.mxu0 %v1290
    %3201 = vmatprep.subr.mxu0 %v1304
    %3202 = vmatpush1.msra.mxu0 %v1303
    %3203 = vmatprep.subr.mxu0 %v1317
    %3204 = vmatpush1.msra.mxu0 %v1316
    %3205 = vmatprep.mubr.f32.mxu0 %v62
    %3206 = vmatmul.mubr.f32.gmra.mrb[0].mxu0 %v61
    %v3207 = vpop.f32.mrb[0].mxu0
    %v3208 = vadd.f32 %v3131, %v3207
    %v3209 = vpop.f32.mrb[0].mxu0
    %v3210 = vadd.f32 %v3133, %v3209
    %3211 = vmatprep.mubr.f32.mxu0 %v69
    %3212 = vmatmul.mubr.f32.gmra.mrb[0].mxu0 %v68
    %v3213 = vpop.f32.mrb[0].mxu0
    %v3214 = vadd.f32 %v3137, %v3213
    %v3215 = vpop.f32.mrb[0].mxu0
    %v3216 = vadd.f32 %v3139, %v3215
    %3217 = vdwg.mxu0
    %3218 = vmatprep.subr.mxu0 %v1330
    %3219 = vmatpush1.msra.mxu0 %v1329
    %3220 = vmatprep.subr.mxu0 %v1343
    %3221 = vmatpush1.msra.mxu0 %v1342
    %3222 = vmatprep.subr.mxu0 %v1356
    %3223 = vmatpush1.msra.mxu0 %v1355
    %3224 = vmatprep.subr.mxu0 %v1369
    %3225 = vmatpush1.msra.mxu0 %v1368
    %3226 = vmatprep.subr.mxu0 0.0
    %3227 = vmatpush1.msra.mxu0 0.0
    %3228 = vmatprep.subr.mxu0 0.0
    %3229 = vmatpush1.msra.mxu0 0.0
    %3230 = vmatprep.subr.mxu0 0.0
    %3231 = vmatpush1.msra.mxu0 0.0
    %3232 = vmatprep.subr.mxu0 0.0
    %3233 = vmatpush1.msra.mxu0 0.0
    %3234 = vmatprep.subr.mxu0 0.0
    %3235 = vmatpush1.msra.mxu0 0.0
    %3236 = vmatprep.subr.mxu0 0.0
    %3237 = vmatpush1.msra.mxu0 0.0
    %3238 = vmatprep.subr.mxu0 0.0
    %3239 = vmatpush1.msra.mxu0 0.0
    %3240 = vmatprep.subr.mxu0 0.0
    %3241 = vmatpush1.msra.mxu0 0.0
    %3242 = vmatprep.subr.mxu0 0.0
    %3243 = vmatpush1.msra.mxu0 0.0
    %3244 = vmatprep.subr.mxu0 0.0
    %3245 = vmatpush1.msra.mxu0 0.0
    %3246 = vmatprep.subr.mxu0 0.0
    %3247 = vmatpush1.msra.mxu0 0.0
    %3248 = vmatprep.subr.mxu0 0.0
    %3249 = vmatpush1.msra.mxu0 0.0
    %3250 = vmatprep.subr.mxu0 0.0
    %3251 = vmatpush1.msra.mxu0 0.0
    %3252 = vmatprep.subr.mxu0 0.0
    %3253 = vmatpush1.msra.mxu0 0.0
    %3254 = vmatprep.subr.mxu0 0.0
    %3255 = vmatpush1.msra.mxu0 0.0
    %3256 = vmatprep.subr.mxu0 0.0
    %3257 = vmatpush1.msra.mxu0 0.0
    %3258 = vmatprep.subr.mxu0 0.0
    %3259 = vmatpush1.msra.mxu0 0.0
    %3260 = vmatprep.subr.mxu0 0.0
    %3261 = vmatpush1.msra.mxu0 0.0
    %3262 = vmatprep.subr.mxu0 0.0
    %3263 = vmatpush1.msra.mxu0 0.0
    %3264 = vmatprep.subr.mxu0 0.0
    %3265 = vmatpush1.msra.mxu0 0.0
    %3266 = vmatprep.subr.mxu0 0.0
    %3267 = vmatpush1.msra.mxu0 0.0
    %3268 = vmatprep.subr.mxu0 0.0
    %3269 = vmatpush1.msra.mxu0 0.0
    %3270 = vmatprep.subr.mxu0 0.0
    %3271 = vmatpush1.msra.mxu0 0.0
    %3272 = vmatprep.subr.mxu0 0.0
    %3273 = vmatpush1.msra.mxu0 0.0
    %3274 = vmatprep.subr.mxu0 0.0
    %3275 = vmatpush1.msra.mxu0 0.0
    %3276 = vmatprep.subr.mxu0 0.0
    %3277 = vmatpush1.msra.mxu0 0.0
    %3278 = vmatprep.subr.mxu0 0.0
    %3279 = vmatpush1.msra.mxu0 0.0
    %3280 = vmatprep.subr.mxu0 0.0
    %3281 = vmatpush1.msra.mxu0 0.0
    %3282 = vmatprep.mubr.f32.mxu0 0.0
    %3283 = vmatmul.mubr.f32.gmra.mrb[0].mxu0 %v1442
    %v3284 = vpop.f32.mrb[0].mxu0
    %v3285 = vadd.f32 %v3208, %v3284
    %v3286 = vpop.f32.mrb[0].mxu0
    %v3287 = vadd.f32 %v3210, %v3286
    %3288 = vmatprep.mubr.f32.mxu0 0.0
    %3289 = vmatmul.mubr.f32.gmra.mrb[0].mxu0 %v1445
    %v3290 = vpop.f32.mrb[0].mxu0
    %v3291 = vadd.f32 %v3214, %v3290
    %v3292 = vpop.f32.mrb[0].mxu0
    %v3293 = vadd.f32 %v3216, %v3292
    %3294 = vdwg.mxu0
    %3295 = vmatprep.subr.mxu0 0.0
    %3296 = vmatpush1.msra.mxu0 %v83
    %3297 = vmatprep.subr.mxu0 0.0
    %3298 = vmatpush1.msra.mxu0 %v96
    %3299 = vmatprep.subr.mxu0 0.0
    %3300 = vmatpush1.msra.mxu0 %v109
    %3301 = vmatprep.subr.mxu0 0.0
    %3302 = vmatpush1.msra.mxu0 %v122
    %3303 = vmatprep.subr.mxu0 0.0
    %3304 = vmatpush1.msra.mxu0 %v135
    %3305 = vmatprep.subr.mxu0 0.0
    %3306 = vmatpush1.msra.mxu0 %v148
    %3307 = vmatprep.subr.mxu0 0.0
    %3308 = vmatpush1.msra.mxu0 %v161
    %3309 = vmatprep.subr.mxu0 0.0
    %3310 = vmatpush1.msra.mxu0 %v174
    %3311 = vmatprep.subr.mxu0 0.0
    %3312 = vmatpush1.msra.mxu0 %v187
    %3313 = vmatprep.subr.mxu0 0.0
    %3314 = vmatpush1.msra.mxu0 %v200
    %3315 = vmatprep.subr.mxu0 0.0
    %3316 = vmatpush1.msra.mxu0 %v213
    %3317 = vmatprep.subr.mxu0 0.0
    %3318 = vmatpush1.msra.mxu0 %v226
    %3319 = vmatprep.subr.mxu0 0.0
    %3320 = vmatpush1.msra.mxu0 %v239
    %3321 = vmatprep.subr.mxu0 0.0
    %3322 = vmatpush1.msra.mxu0 %v252
    %3323 = vmatprep.subr.mxu0 0.0
    %3324 = vmatpush1.msra.mxu0 %v265
    %3325 = vmatprep.subr.mxu0 0.0
    %3326 = vmatpush1.msra.mxu0 %v278
    %3327 = vmatprep.subr.mxu0 0.0
    %3328 = vmatpush1.msra.mxu0 %v291
    %3329 = vmatprep.subr.mxu0 0.0
    %3330 = vmatpush1.msra.mxu0 %v304
    %3331 = vmatprep.subr.mxu0 0.0
    %3332 = vmatpush1.msra.mxu0 %v317
    %3333 = vmatprep.subr.mxu0 0.0
    %3334 = vmatpush1.msra.mxu0 %v330
    %3335 = vmatprep.subr.mxu0 0.0
    %3336 = vmatpush1.msra.mxu0 %v343
    %3337 = vmatprep.subr.mxu0 0.0
    %3338 = vmatpush1.msra.mxu0 %v356
    %3339 = vmatprep.subr.mxu0 0.0
    %3340 = vmatpush1.msra.mxu0 %v369
    %3341 = vmatprep.subr.mxu0 0.0
    %3342 = vmatpush1.msra.mxu0 %v382
    %3343 = vmatprep.subr.mxu0 0.0
    %3344 = vmatpush1.msra.mxu0 %v395
    %3345 = vmatprep.subr.mxu0 0.0
    %3346 = vmatpush1.msra.mxu0 %v408
    %3347 = vmatprep.subr.mxu0 0.0
    %3348 = vmatpush1.msra.mxu0 %v421
    %3349 = vmatprep.subr.mxu0 0.0
    %3350 = vmatpush1.msra.mxu0 %v434
    %3351 = vmatprep.subr.mxu0 0.0
    %3352 = vmatpush1.msra.mxu0 %v447
    %3353 = vmatprep.subr.mxu0 0.0
    %3354 = vmatpush1.msra.mxu0 %v460
    %3355 = vmatprep.subr.mxu0 0.0
    %3356 = vmatpush1.msra.mxu0 %v473
    %3357 = vmatprep.subr.mxu0 0.0
    %3358 = vmatpush1.msra.mxu0 %v486
    %3359 = vmatprep.mubr.f32.mxu0 %v58
    %3360 = vmatmul.mubr.f32.gmra.mrb[0].mxu0 %v57
    %v3361 = vpop.f32.mrb[0].mxu0
    %v3362 = vadd.f32 %v1426, %v3361
    %v3363 = vpop.f32.mrb[0].mxu0
    %3364 = vmatprep.mubr.f32.mxu0 %v65
    %3365 = vmatmul.mubr.f32.gmra.mrb[0].mxu0 %v64
    %v3366 = vpop.f32.mrb[0].mxu0
    %v3367 = vadd.f32 %v1426, %v3366
    %v3368 = vpop.f32.mrb[0].mxu0
    %3369 = vdwg.mxu0
    %3370 = vmatprep.subr.mxu0 0.0
    %3371 = vmatpush1.msra.mxu0 %v499
    %3372 = vmatprep.subr.mxu0 0.0
    %3373 = vmatpush1.msra.mxu0 %v512
    %3374 = vmatprep.subr.mxu0 0.0
    %3375 = vmatpush1.msra.mxu0 %v525
    %3376 = vmatprep.subr.mxu0 0.0
    %3377 = vmatpush1.msra.mxu0 %v538
    %3378 = vmatprep.subr.mxu0 0.0
    %3379 = vmatpush1.msra.mxu0 %v551
    %3380 = vmatprep.subr.mxu0 0.0
    %3381 = vmatpush1.msra.mxu0 %v564
    %3382 = vmatprep.subr.mxu0 0.0
    %3383 = vmatpush1.msra.mxu0 %v577
    %3384 = vmatprep.subr.mxu0 0.0
    %3385 = vmatpush1.msra.mxu0 %v590
    %3386 = vmatprep.subr.mxu0 0.0
    %3387 = vmatpush1.msra.mxu0 %v603
    %3388 = vmatprep.subr.mxu0 0.0
    %3389 = vmatpush1.msra.mxu0 %v616
    %3390 = vmatprep.subr.mxu0 0.0
    %3391 = vmatpush1.msra.mxu0 %v629
    %3392 = vmatprep.subr.mxu0 0.0
    %3393 = vmatpush1.msra.mxu0 %v642
    %3394 = vmatprep.subr.mxu0 0.0
    %3395 = vmatpush1.msra.mxu0 %v655
    %3396 = vmatprep.subr.mxu0 0.0
    %3397 = vmatpush1.msra.mxu0 %v668
    %3398 = vmatprep.subr.mxu0 0.0
    %3399 = vmatpush1.msra.mxu0 %v681
    %3400 = vmatprep.subr.mxu0 0.0
    %3401 = vmatpush1.msra.mxu0 %v694
    %3402 = vmatprep.subr.mxu0 0.0
    %3403 = vmatpush1.msra.mxu0 %v707
    %3404 = vmatprep.subr.mxu0 0.0
    %3405 = vmatpush1.msra.mxu0 %v720
    %3406 = vmatprep.subr.mxu0 0.0
    %3407 = vmatpush1.msra.mxu0 %v733
    %3408 = vmatprep.subr.mxu0 0.0
    %3409 = vmatpush1.msra.mxu0 %v746
    %3410 = vmatprep.subr.mxu0 0.0
    %3411 = vmatpush1.msra.mxu0 %v759
    %3412 = vmatprep.subr.mxu0 0.0
    %3413 = vmatpush1.msra.mxu0 %v772
    %3414 = vmatprep.subr.mxu0 0.0
    %3415 = vmatpush1.msra.mxu0 %v785
    %3416 = vmatprep.subr.mxu0 0.0
    %3417 = vmatpush1.msra.mxu0 %v798
    %3418 = vmatprep.subr.mxu0 0.0
    %3419 = vmatpush1.msra.mxu0 %v811
    %3420 = vmatprep.subr.mxu0 0.0
    %3421 = vmatpush1.msra.mxu0 %v824
    %3422 = vmatprep.subr.mxu0 0.0
    %3423 = vmatpush1.msra.mxu0 %v837
    %3424 = vmatprep.subr.mxu0 0.0
    %3425 = vmatpush1.msra.mxu0 %v850
    %3426 = vmatprep.subr.mxu0 0.0
    %3427 = vmatpush1.msra.mxu0 %v863
    %3428 = vmatprep.subr.mxu0 0.0
    %3429 = vmatpush1.msra.mxu0 %v876
    %3430 = vmatprep.subr.mxu0 0.0
    %3431 = vmatpush1.msra.mxu0 %v889
    %3432 = vmatprep.subr.mxu0 0.0
    %3433 = vmatpush1.msra.mxu0 %v902
    %3434 = vmatprep.mubr.f32.mxu0 %v60
    %3435 = vmatmul.mubr.f32.gmra.mrb[0].mxu0 %v59
    %v3436 = vpop.f32.mrb[0].mxu0
    %v3437 = vadd.f32 %v3362, %v3436
    %v3438 = vpop.f32.mrb[0].mxu0
    %3439 = vmatprep.mubr.f32.mxu0 %v67
    %3440 = vmatmul.mubr.f32.gmra.mrb[0].mxu0 %v66
    %v3441 = vpop.f32.mrb[0].mxu0
    %v3442 = vadd.f32 %v3367, %v3441
    %v3443 = vpop.f32.mrb[0].mxu0
    %3444 = vdwg.mxu0
    %3445 = vmatprep.subr.mxu0 0.0
    %3446 = vmatpush1.msra.mxu0 %v915
    %3447 = vmatprep.subr.mxu0 0.0
    %3448 = vmatpush1.msra.mxu0 %v928
    %3449 = vmatprep.subr.mxu0 0.0
    %3450 = vmatpush1.msra.mxu0 %v941
    %3451 = vmatprep.subr.mxu0 0.0
    %3452 = vmatpush1.msra.mxu0 %v954
    %3453 = vmatprep.subr.mxu0 0.0
    %3454 = vmatpush1.msra.mxu0 %v967
    %3455 = vmatprep.subr.mxu0 0.0
    %3456 = vmatpush1.msra.mxu0 %v980
    %3457 = vmatprep.subr.mxu0 0.0
    %3458 = vmatpush1.msra.mxu0 %v993
    %3459 = vmatprep.subr.mxu0 0.0
    %3460 = vmatpush1.msra.mxu0 %v1006
    %3461 = vmatprep.subr.mxu0 0.0
    %3462 = vmatpush1.msra.mxu0 %v1019
    %3463 = vmatprep.subr.mxu0 0.0
    %3464 = vmatpush1.msra.mxu0 %v1032
    %3465 = vmatprep.subr.mxu0 0.0
    %3466 = vmatpush1.msra.mxu0 %v1045
    %3467 = vmatprep.subr.mxu0 0.0
    %3468 = vmatpush1.msra.mxu0 %v1058
    %3469 = vmatprep.subr.mxu0 0.0
    %3470 = vmatpush1.msra.mxu0 %v1071
    %3471 = vmatprep.subr.mxu0 0.0
    %3472 = vmatpush1.msra.mxu0 %v1084
    %3473 = vmatprep.subr.mxu0 0.0
    %3474 = vmatpush1.msra.mxu0 %v1097
    %3475 = vmatprep.subr.mxu0 0.0
    %3476 = vmatpush1.msra.mxu0 %v1110
    %3477 = vmatprep.subr.mxu0 0.0
    %3478 = vmatpush1.msra.mxu0 %v1123
    %3479 = vmatprep.subr.mxu0 0.0
    %3480 = vmatpush1.msra.mxu0 %v1136
    %3481 = vmatprep.subr.mxu0 0.0
    %3482 = vmatpush1.msra.mxu0 %v1149
    %3483 = vmatprep.subr.mxu0 0.0
    %3484 = vmatpush1.msra.mxu0 %v1162
    %3485 = vmatprep.subr.mxu0 0.0
    %3486 = vmatpush1.msra.mxu0 %v1175
    %3487 = vmatprep.subr.mxu0 0.0
    %3488 = vmatpush1.msra.mxu0 %v1188
    %3489 = vmatprep.subr.mxu0 0.0
    %3490 = vmatpush1.msra.mxu0 %v1201
    %3491 = vmatprep.subr.mxu0 0.0
    %3492 = vmatpush1.msra.mxu0 %v1214
    %3493 = vmatprep.subr.mxu0 0.0
    %3494 = vmatpush1.msra.mxu0 %v1227
    %3495 = vmatprep.subr.mxu0 0.0
    %3496 = vmatpush1.msra.mxu0 %v1240
    %3497 = vmatprep.subr.mxu0 0.0
    %3498 = vmatpush1.msra.mxu0 %v1253
    %3499 = vmatprep.subr.mxu0 0.0
    %3500 = vmatpush1.msra.mxu0 %v1266
    %3501 = vmatprep.subr.mxu0 0.0
    %3502 = vmatpush1.msra.mxu0 %v1279
    %3503 = vmatprep.subr.mxu0 0.0
    %3504 = vmatpush1.msra.mxu0 %v1292
    %3505 = vmatprep.subr.mxu0 0.0
    %3506 = vmatpush1.msra.mxu0 %v1305
    %3507 = vmatprep.subr.mxu0 0.0
    %3508 = vmatpush1.msra.mxu0 %v1318
    %3509 = vmatprep.mubr.f32.mxu0 %v62
    %3510 = vmatmul.mubr.f32.gmra.mrb[0].mxu0 %v61
    %v3511 = vpop.f32.mrb[0].mxu0
    %v3512 = vadd.f32 %v3437, %v3511
    %v3513 = vpop.f32.mrb[0].mxu0
    %3514 = vmatprep.mubr.f32.mxu0 %v69
    %3515 = vmatmul.mubr.f32.gmra.mrb[0].mxu0 %v68
    %v3516 = vpop.f32.mrb[0].mxu0
    %v3517 = vadd.f32 %v3442, %v3516
    %v3518 = vpop.f32.mrb[0].mxu0
    %3519 = vdwg.mxu0
    %3520 = vmatprep.subr.mxu0 0.0
    %3521 = vmatpush1.msra.mxu0 %v1331
    %3522 = vmatprep.subr.mxu0 0.0
    %3523 = vmatpush1.msra.mxu0 %v1344
    %3524 = vmatprep.subr.mxu0 0.0
    %3525 = vmatpush1.msra.mxu0 %v1357
    %3526 = vmatprep.subr.mxu0 0.0
    %3527 = vmatpush1.msra.mxu0 %v1370
    %3528 = vmatprep.subr.mxu0 0.0
    %3529 = vmatpush1.msra.mxu0 0.0
    %3530 = vmatprep.subr.mxu0 0.0
    %3531 = vmatpush1.msra.mxu0 0.0
    %3532 = vmatprep.subr.mxu0 0.0
    %3533 = vmatpush1.msra.mxu0 0.0
    %3534 = vmatprep.subr.mxu0 0.0
    %3535 = vmatpush1.msra.mxu0 0.0
    %3536 = vmatprep.subr.mxu0 0.0
    %3537 = vmatpush1.msra.mxu0 0.0
    %3538 = vmatprep.subr.mxu0 0.0
    %3539 = vmatpush1.msra.mxu0 0.0
    %3540 = vmatprep.subr.mxu0 0.0
    %3541 = vmatpush1.msra.mxu0 0.0
    %3542 = vmatprep.subr.mxu0 0.0
    %3543 = vmatpush1.msra.mxu0 0.0
    %3544 = vmatprep.subr.mxu0 0.0
    %3545 = vmatpush1.msra.mxu0 0.0
    %3546 = vmatprep.subr.mxu0 0.0
    %3547 = vmatpush1.msra.mxu0 0.0
    %3548 = vmatprep.subr.mxu0 0.0
    %3549 = vmatpush1.msra.mxu0 0.0
    %3550 = vmatprep.subr.mxu0 0.0
    %3551 = vmatpush1.msra.mxu0 0.0
    %3552 = vmatprep.subr.mxu0 0.0
    %3553 = vmatpush1.msra.mxu0 0.0
    %3554 = vmatprep.subr.mxu0 0.0
    %3555 = vmatpush1.msra.mxu0 0.0
    %3556 = vmatprep.subr.mxu0 0.0
    %3557 = vmatpush1.msra.mxu0 0.0
    %3558 = vmatprep.subr.mxu0 0.0
    %3559 = vmatpush1.msra.mxu0 0.0
    %3560 = vmatprep.subr.mxu0 0.0
    %3561 = vmatpush1.msra.mxu0 0.0
    %3562 = vmatprep.subr.mxu0 0.0
    %3563 = vmatpush1.msra.mxu0 0.0
    %3564 = vmatprep.subr.mxu0 0.0
    %3565 = vmatpush1.msra.mxu0 0.0
    %3566 = vmatprep.subr.mxu0 0.0
    %3567 = vmatpush1.msra.mxu0 0.0
    %3568 = vmatprep.subr.mxu0 0.0
    %3569 = vmatpush1.msra.mxu0 0.0
    %3570 = vmatprep.subr.mxu0 0.0
    %3571 = vmatpush1.msra.mxu0 0.0
    %3572 = vmatprep.subr.mxu0 0.0
    %3573 = vmatpush1.msra.mxu0 0.0
    %3574 = vmatprep.subr.mxu0 0.0
    %3575 = vmatpush1.msra.mxu0 0.0
    %3576 = vmatprep.subr.mxu0 0.0
    %3577 = vmatpush1.msra.mxu0 0.0
    %3578 = vmatprep.subr.mxu0 0.0
    %3579 = vmatpush1.msra.mxu0 0.0
    %3580 = vmatprep.subr.mxu0 0.0
    %3581 = vmatpush1.msra.mxu0 0.0
    %3582 = vmatprep.subr.mxu0 0.0
    %3583 = vmatpush1.msra.mxu0 0.0
    %3584 = vmatprep.mubr.f32.mxu0 0.0
    %3585 = vmatmul.mubr.f32.gmra.mrb[0].mxu0 %v1442
    %v3586 = vpop.f32.mrb[0].mxu0
    %v3587 = vadd.f32 %v3512, %v3586
    %v3588 = vpop.f32.mrb[0].mxu0
    %3589 = vmatprep.mubr.f32.mxu0 0.0
    %3590 = vmatmul.mubr.f32.gmra.mrb[0].mxu0 %v1445
    %v3591 = vpop.f32.mrb[0].mxu0
    %v3592 = vadd.f32 %v3517, %v3591
    %v3593 = vpop.f32.mrb[0].mxu0
    %3594 = vdwg.mxu0
    %v3595 = vmax.f32 %v1745, 0.0
    %v3596 = vmax.f32 %v1747, 0.0
    %v3597 = vmax.f32 %v2053, 0.0
    %v3598 = vmax.f32 %v2055, 0.0
    %v3599 = vmax.f32 %v2361, 0.0
    %v3600 = vmax.f32 %v2363, 0.0
    %v3601 = vmax.f32 %v2669, 0.0
    %v3602 = vmax.f32 %v2671, 0.0
    %v3603 = vmax.f32 %v2977, 0.0
    %v3604 = vmax.f32 %v2979, 0.0
    %v3605 = vmax.f32 %v3285, 0.0
    %v3606 = vmax.f32 %v3287, 0.0
    %v3607 = vmax.f32 %v3587, 0.0
    %v3608 = vmax.f32 %v1751, 0.0
    %v3609 = vmax.f32 %v1753, 0.0
    %v3610 = vmax.f32 %v2059, 0.0
    %v3611 = vmax.f32 %v2061, 0.0
    %v3612 = vmax.f32 %v2367, 0.0
    %v3613 = vmax.f32 %v2369, 0.0
    %v3614 = vmax.f32 %v2675, 0.0
    %v3615 = vmax.f32 %v2677, 0.0
    %v3616 = vmax.f32 %v2983, 0.0
    %v3617 = vmax.f32 %v2985, 0.0
    %v3618 = vmax.f32 %v3291, 0.0
    %v3619 = vmax.f32 %v3293, 0.0
    %v3620 = vmax.f32 %v3592, 0.0
    %v3621 = vld [vmem:[%s3] sm:$0xff]
    %v3622 = vld [vmem:[%s3 + $0x8] sm:$0xff]
    %v3623 = vld [vmem:[%s3 + $0x10] sm:$0xff]
    %v3624 = vld [vmem:[%s3 + $0x18] sm:$0xff]
    %v3625 = vld [vmem:[%s3 + $0x20] sm:$0xff]
    %v3626 = vld [vmem:[%s3 + $0x28] sm:$0xff]
    %v3627 = vld [vmem:[%s3 + $0x30] sm:$0xff]
    %v3628 = vld [vmem:[%s3 + $0x38] sm:$0xff]
    %v3629 = vld [vmem:[%s3 + $0x40] sm:$0xff]
    %v3630 = vld [vmem:[%s3 + $0x48] sm:$0xff]
    %v3631 = vld [vmem:[%s3 + $0x50] sm:$0xff]
    %v3632 = vld [vmem:[%s3 + $0x58] sm:$0xff]
    %v3633 = vld [vmem:[%s3 + $0x60] sm:$0xff]
    %v3634 = vld [vmem:[%s3 + $0x68] sm:$0xff]
    %v3635 = vld [vmem:[%s3 + $0x70] sm:$0xff]
    %v3636 = vld [vmem:[%s3 + $0x78] sm:$0xff]
    %v3637 = vld [vmem:[%s3 + $0x80] sm:$0xff]
    %v3638 = vld [vmem:[%s3 + $0x88] sm:$0xff]
    %v3639 = vld [vmem:[%s3 + $0x90] sm:$0xff]
    %v3640 = vld [vmem:[%s3 + $0x98] sm:$0xff]
    %v3641 = vld [vmem:[%s3 + $0xa0] sm:$0xff]
    %v3642 = vld [vmem:[%s3 + $0xa8] sm:$0xff]
    %v3643 = vld [vmem:[%s3 + $0xb0] sm:$0xff]
    %v3644 = vld [vmem:[%s3 + $0xb8] sm:$0xff]
    %v3645 = vld [vmem:[%s3 + $0xc0] sm:$0xff]
    %v3646 = vld [vmem:[%s3 + $0xc8] sm:$0xff]
    %v3647 = vld [vmem:[%s3 + $0xd0] sm:$0xff]
    %v3648 = vld [vmem:[%s3 + $0xd8] sm:$0xff]
    %v3649 = vld [vmem:[%s3 + $0xe0] sm:$0xff]
    %v3650 = vld [vmem:[%s3 + $0xe8] sm:$0xff]
    %v3651 = vld [vmem:[%s3 + $0xf0] sm:$0xff]
    %v3652 = vld [vmem:[%s3 + $0xf8] sm:$0xff]
    %v3653 = vld [vmem:[%s3 + $0x100] sm:$0xff]
    %v3654 = vld [vmem:[%s3 + $0x108] sm:$0xff]
    %v3655 = vld [vmem:[%s3 + $0x110] sm:$0xff]
    %v3656 = vld [vmem:[%s3 + $0x118] sm:$0xff]
    %v3657 = vld [vmem:[%s3 + $0x120] sm:$0xff]
    %v3658 = vld [vmem:[%s3 + $0x128] sm:$0xff]
    %v3659 = vld [vmem:[%s3 + $0x130] sm:$0xff]
    %v3660 = vld [vmem:[%s3 + $0x138] sm:$0xff]
    %v3661 = vld [vmem:[%s3 + $0x140] sm:$0xff]
    %v3662 = vld [vmem:[%s3 + $0x148] sm:$0xff]
    %v3663 = vld [vmem:[%s3 + $0x150] sm:$0xff]
    %v3664 = vld [vmem:[%s3 + $0x158] sm:$0xff]
    %v3665 = vld [vmem:[%s3 + $0x160] sm:$0xff]
    %v3666 = vld [vmem:[%s3 + $0x168] sm:$0xff]
    %v3667 = vld [vmem:[%s3 + $0x170] sm:$0xff]
    %v3668 = vld [vmem:[%s3 + $0x178] sm:$0xff]
    %v3669 = vld [vmem:[%s3 + $0x180] sm:$0xff]
    %v3670 = vld [vmem:[%s3 + $0x188] sm:$0xff]
    %v3671 = vld [vmem:[%s3 + $0x190] sm:$0xff]
    %v3672 = vld [vmem:[%s3 + $0x198] sm:$0xff]
    %v3673 = vld [vmem:[%s3 + $0x1a0] sm:$0xff]
    %v3674 = vld [vmem:[%s3 + $0x1a8] sm:$0xff]
    %v3675 = vld [vmem:[%s3 + $0x1b0] sm:$0xff]
    %v3676 = vld [vmem:[%s3 + $0x1b8] sm:$0xff]
    %v3677 = vld [vmem:[%s3 + $0x1c0] sm:$0xff]
    %v3678 = vld [vmem:[%s3 + $0x1c8] sm:$0xff]
    %v3679 = vld [vmem:[%s3 + $0x1d0] sm:$0xff]
    %v3680 = vld [vmem:[%s3 + $0x1d8] sm:$0xff]
    %v3681 = vld [vmem:[%s3 + $0x1e0] sm:$0xff]
    %v3682 = vld [vmem:[%s3 + $0x1e8] sm:$0xff]
    %v3683 = vld [vmem:[%s3 + $0x1f0] sm:$0xff]
    %v3684 = vld [vmem:[%s3 + $0x1f8] sm:$0xff]
    %v3685 = vld [vmem:[%s3 + $0x200] sm:$0xff]
    %v3686 = vld [vmem:[%s3 + $0x208] sm:$0xff]
    %v3687 = vld [vmem:[%s3 + $0x210] sm:$0xff]
    %v3688 = vld [vmem:[%s3 + $0x218] sm:$0xff]
    %v3689 = vld [vmem:[%s3 + $0x220] sm:$0xff]
    %v3690 = vld [vmem:[%s3 + $0x228] sm:$0xff]
    %v3691 = vld [vmem:[%s3 + $0x230] sm:$0xff]
    %v3692 = vld [vmem:[%s3 + $0x238] sm:$0xff]
    %v3693 = vld [vmem:[%s3 + $0x240] sm:$0xff]
    %v3694 = vld [vmem:[%s3 + $0x248] sm:$0xff]
    %v3695 = vld [vmem:[%s3 + $0x250] sm:$0xff]
    %v3696 = vld [vmem:[%s3 + $0x258] sm:$0xff]
    %v3697 = vld [vmem:[%s3 + $0x260] sm:$0xff]
    %v3698 = vld [vmem:[%s3 + $0x268] sm:$0xff]
    %v3699 = vld [vmem:[%s3 + $0x270] sm:$0xff]
    %v3700 = vld [vmem:[%s3 + $0x278] sm:$0xff]
    %v3701 = vld [vmem:[%s3 + $0x280] sm:$0xff]
    %v3702 = vld [vmem:[%s3 + $0x288] sm:$0xff]
    %v3703 = vld [vmem:[%s3 + $0x290] sm:$0xff]
    %v3704 = vld [vmem:[%s3 + $0x298] sm:$0xff]
    %v3705 = vld [vmem:[%s3 + $0x2a0] sm:$0xff]
    %v3706 = vld [vmem:[%s3 + $0x2a8] sm:$0xff]
    %v3707 = vld [vmem:[%s3 + $0x2b0] sm:$0xff]
    %v3708 = vld [vmem:[%s3 + $0x2b8] sm:$0xff]
    %v3709 = vld [vmem:[%s3 + $0x2c0] sm:$0xff]
    %v3710 = vld [vmem:[%s3 + $0x2c8] sm:$0xff]
    %v3711 = vld [vmem:[%s3 + $0x2d0] sm:$0xff]
    %v3712 = vld [vmem:[%s3 + $0x2d8] sm:$0xff]
    %v3713 = vld [vmem:[%s3 + $0x2e0] sm:$0xff]
    %v3714 = vld [vmem:[%s3 + $0x2e8] sm:$0xff]
    %v3715 = vld [vmem:[%s3 + $0x2f0] sm:$0xff]
    %v3716 = vld [vmem:[%s3 + $0x2f8] sm:$0xff]
    %v3717 = vld [vmem:[%s3 + $0x300] sm:$0xff]
    %v3718 = vld [vmem:[%s3 + $0x308] sm:$0xff]
    %v3719 = vld [vmem:[%s3 + $0x310] sm:$0xff]
    %v3720 = vld [vmem:[%s3 + $0x318] sm:$0xff]
    %v3721 = vld [vmem:[%s3 + $0x320] sm:$0xff]
    %v3722 = vld [vmem:[%s3 + $0x328] sm:$0xff]
    %v3723 = vld [vmem:[%s3 + $0x330] sm:$0xff]
    %v3724 = vld [vmem:[%s3 + $0x338] sm:$0xff]
    %v3725 = vld [vmem:[%s3 + $0x340] sm:$0xff]
    %v3726 = vld [vmem:[%s3 + $0x348] sm:$0xff]
    %v3727 = vld [vmem:[%s3 + $0x350] sm:$0xff]
    %v3728 = vld [vmem:[%s3 + $0x358] sm:$0xff]
    %v3729 = vld [vmem:[%s3 + $0x360] sm:$0xff]
    %v3730 = vld [vmem:[%s3 + $0x368] sm:$0xff]
    %v3731 = vld [vmem:[%s3 + $0x370] sm:$0xff]
    %v3732 = vld [vmem:[%s3 + $0x378] sm:$0xff]
    %v3733 = vld [vmem:[%s3 + $0x380] sm:$0xff]
    %v3734 = vld [vmem:[%s3 + $0x388] sm:$0xff]
    %v3735 = vld [vmem:[%s3 + $0x390] sm:$0xff]
    %v3736 = vld [vmem:[%s3 + $0x398] sm:$0xff]
    %v3737 = vld [vmem:[%s3 + $0x3a0] sm:$0xff]
    %v3738 = vld [vmem:[%s3 + $0x3a8] sm:$0xff]
    %v3739 = vld [vmem:[%s3 + $0x3b0] sm:$0xff]
    %v3740 = vld [vmem:[%s3 + $0x3b8] sm:$0xff]
    %v3741 = vld [vmem:[%s3 + $0x3c0] sm:$0xff]
    %v3742 = vld [vmem:[%s3 + $0x3c8] sm:$0xff]
    %v3743 = vld [vmem:[%s3 + $0x3d0] sm:$0xff]
    %v3744 = vld [vmem:[%s3 + $0x3d8] sm:$0xff]
    %v3745 = vld [vmem:[%s3 + $0x3e0] sm:$0xff]
    %v3746 = vld [vmem:[%s3 + $0x3e8] sm:$0xff]
    %v3747 = vld [vmem:[%s3 + $0x3f0] sm:$0xff]
    %v3748 = vld [vmem:[%s3 + $0x3f8] sm:$0xff]
    %v3749 = vld [vmem:[%s3 + $0x400] sm:$0xff]
    %v3750 = vld [vmem:[%s3 + $0x408] sm:$0xff]
    %v3751 = vld [vmem:[%s3 + $0x410] sm:$0xff]
    %v3752 = vld [vmem:[%s3 + $0x418] sm:$0xff]
    %v3753 = vld [vmem:[%s3 + $0x420] sm:$0xff]
    %v3754 = vld [vmem:[%s3 + $0x428] sm:$0xff]
    %v3755 = vld [vmem:[%s3 + $0x430] sm:$0xff]
    %v3756 = vld [vmem:[%s3 + $0x438] sm:$0xff]
    %v3757 = vld [vmem:[%s3 + $0x440] sm:$0xff]
    %v3758 = vld [vmem:[%s3 + $0x448] sm:$0xff]
    %v3759 = vld [vmem:[%s3 + $0x450] sm:$0xff]
    %v3760 = vld [vmem:[%s3 + $0x458] sm:$0xff]
    %v3761 = vld [vmem:[%s3 + $0x460] sm:$0xff]
    %v3762 = vld [vmem:[%s3 + $0x468] sm:$0xff]
    %v3763 = vld [vmem:[%s3 + $0x470] sm:$0xff]
    %v3764 = vld [vmem:[%s3 + $0x478] sm:$0xff]
    %v3765 = vld [vmem:[%s3 + $0x480] sm:$0xff]
    %v3766 = vld [vmem:[%s3 + $0x488] sm:$0xff]
    %v3767 = vld [vmem:[%s3 + $0x490] sm:$0xff]
    %v3768 = vld [vmem:[%s3 + $0x498] sm:$0xff]
    %v3769 = vld [vmem:[%s3 + $0x4a0] sm:$0xff]
    %v3770 = vld [vmem:[%s3 + $0x4a8] sm:$0xff]
    %v3771 = vld [vmem:[%s3 + $0x4b0] sm:$0xff]
    %v3772 = vld [vmem:[%s3 + $0x4b8] sm:$0xff]
    %v3773 = vld [vmem:[%s3 + $0x4c0] sm:$0xff]
    %v3774 = vld [vmem:[%s3 + $0x4c8] sm:$0xff]
    %v3775 = vld [vmem:[%s3 + $0x4d0] sm:$0xff]
    %v3776 = vld [vmem:[%s3 + $0x4d8] sm:$0xff]
    %v3777 = vld [vmem:[%s3 + $0x4e0] sm:$0xff]
    %v3778 = vld [vmem:[%s3 + $0x4e8] sm:$0xff]
    %v3779 = vld [vmem:[%s3 + $0x4f0] sm:$0xff]
    %v3780 = vld [vmem:[%s3 + $0x4f8] sm:$0xff]
    %v3781 = vld [vmem:[%s3 + $0x500] sm:$0xff]
    %v3782 = vld [vmem:[%s3 + $0x508] sm:$0xff]
    %v3783 = vld [vmem:[%s3 + $0x510] sm:$0xff]
    %v3784 = vld [vmem:[%s3 + $0x518] sm:$0xff]
    %v3785 = vld [vmem:[%s3 + $0x520] sm:$0xff]
    %v3786 = vld [vmem:[%s3 + $0x528] sm:$0xff]
    %v3787 = vld [vmem:[%s3 + $0x530] sm:$0xff]
    %v3788 = vld [vmem:[%s3 + $0x538] sm:$0xff]
    %v3789 = vld [vmem:[%s3 + $0x540] sm:$0xff]
    %v3790 = vld [vmem:[%s3 + $0x548] sm:$0xff]
    %v3791 = vld [vmem:[%s3 + $0x550] sm:$0xff]
    %v3792 = vld [vmem:[%s3 + $0x558] sm:$0xff]
    %v3793 = vld [vmem:[%s3 + $0x560] sm:$0xff]
    %v3794 = vld [vmem:[%s3 + $0x568] sm:$0xff]
    %v3795 = vld [vmem:[%s3 + $0x570] sm:$0xff]
    %v3796 = vld [vmem:[%s3 + $0x578] sm:$0xff]
    %v3797 = vld [vmem:[%s3 + $0x580] sm:$0xff]
    %v3798 = vld [vmem:[%s3 + $0x588] sm:$0xff]
    %v3799 = vld [vmem:[%s3 + $0x590] sm:$0xff]
    %v3800 = vld [vmem:[%s3 + $0x598] sm:$0xff]
    %v3801 = vld [vmem:[%s3 + $0x5a0] sm:$0xff]
    %v3802 = vld [vmem:[%s3 + $0x5a8] sm:$0xff]
    %v3803 = vld [vmem:[%s3 + $0x5b0] sm:$0xff]
    %v3804 = vld [vmem:[%s3 + $0x5b8] sm:$0xff]
    %v3805 = vld [vmem:[%s3 + $0x5c0] sm:$0xff]
    %v3806 = vld [vmem:[%s3 + $0x5c8] sm:$0xff]
    %v3807 = vld [vmem:[%s3 + $0x5d0] sm:$0xff]
    %v3808 = vld [vmem:[%s3 + $0x5d8] sm:$0xff]
    %v3809 = vld [vmem:[%s3 + $0x5e0] sm:$0xff]
    %v3810 = vld [vmem:[%s3 + $0x5e8] sm:$0xff]
    %v3811 = vld [vmem:[%s3 + $0x5f0] sm:$0xff]
    %v3812 = vld [vmem:[%s3 + $0x5f8] sm:$0xff]
    %v3813 = vld [vmem:[%s3 + $0x600] sm:$0xff]
    %v3814 = vld [vmem:[%s3 + $0x608] sm:$0xff]
    %v3815 = vld [vmem:[%s3 + $0x610] sm:$0xff]
    %v3816 = vld [vmem:[%s3 + $0x618] sm:$0xff]
    %v3817 = vld [vmem:[%s3 + $0x620] sm:$0xff]
    %v3818 = vld [vmem:[%s3 + $0x628] sm:$0xff]
    %v3819 = vld [vmem:[%s3 + $0x630] sm:$0xff]
    %v3820 = vld [vmem:[%s3 + $0x638] sm:$0xff]
    %v3821 = vld [vmem:[#allocation6] sm:$0x1]
    %v3823 = vlaneseq
    %v3824 = vshrl.u32 %v3823, 7
    %v3825 = vsub.s32 0, %v3824
    %v3826 = vrot.slane %v3821, %v3825
    %vm3828 = vcmask 523264
    %v3830 = vsel %vm3828, %v3607, 0
    %v3833 = vsel %vm3828, %v3620, 0
    %3835 = vmatprep.subr.mxu0 0.0
    %3836 = vmatpush1.msra.mxu0 %v3621
    %3837 = vmatprep.subr.mxu0 0.0
    %3838 = vmatpush1.msra.mxu0 %v3622
    %3839 = vmatprep.subr.mxu0 0.0
    %3840 = vmatpush1.msra.mxu0 %v3623
    %3841 = vmatprep.subr.mxu0 0.0
    %3842 = vmatpush1.msra.mxu0 %v3624
    %3843 = vmatprep.subr.mxu0 0.0
    %3844 = vmatpush1.msra.mxu0 %v3625
    %3845 = vmatprep.subr.mxu0 0.0
    %3846 = vmatpush1.msra.mxu0 %v3626
    %3847 = vmatprep.subr.mxu0 0.0
    %3848 = vmatpush1.msra.mxu0 %v3627
    %3849 = vmatprep.subr.mxu0 0.0
    %3850 = vmatpush1.msra.mxu0 %v3628
    %3851 = vmatprep.subr.mxu0 0.0
    %3852 = vmatpush1.msra.mxu0 %v3629
    %3853 = vmatprep.subr.mxu0 0.0
    %3854 = vmatpush1.msra.mxu0 %v3630
    %3855 = vmatprep.subr.mxu0 0.0
    %3856 = vmatpush1.msra.mxu0 %v3631
    %3857 = vmatprep.subr.mxu0 0.0
    %3858 = vmatpush1.msra.mxu0 %v3632
    %3859 = vmatprep.subr.mxu0 0.0
    %3860 = vmatpush1.msra.mxu0 %v3633
    %3861 = vmatprep.subr.mxu0 0.0
    %3862 = vmatpush1.msra.mxu0 %v3634
    %3863 = vmatprep.subr.mxu0 0.0
    %3864 = vmatpush1.msra.mxu0 %v3635
    %3865 = vmatprep.subr.mxu0 0.0
    %3866 = vmatpush1.msra.mxu0 %v3636
    %3867 = vmatprep.subr.mxu0 0.0
    %3868 = vmatpush1.msra.mxu0 %v3637
    %3869 = vmatprep.subr.mxu0 0.0
    %3870 = vmatpush1.msra.mxu0 %v3638
    %3871 = vmatprep.subr.mxu0 0.0
    %3872 = vmatpush1.msra.mxu0 %v3639
    %3873 = vmatprep.subr.mxu0 0.0
    %3874 = vmatpush1.msra.mxu0 %v3640
    %3875 = vmatprep.subr.mxu0 0.0
    %3876 = vmatpush1.msra.mxu0 %v3641
    %3877 = vmatprep.subr.mxu0 0.0
    %3878 = vmatpush1.msra.mxu0 %v3642
    %3879 = vmatprep.subr.mxu0 0.0
    %3880 = vmatpush1.msra.mxu0 %v3643
    %3881 = vmatprep.subr.mxu0 0.0
    %3882 = vmatpush1.msra.mxu0 %v3644
    %3883 = vmatprep.subr.mxu0 0.0
    %3884 = vmatpush1.msra.mxu0 %v3645
    %3885 = vmatprep.subr.mxu0 0.0
    %3886 = vmatpush1.msra.mxu0 %v3646
    %3887 = vmatprep.subr.mxu0 0.0
    %3888 = vmatpush1.msra.mxu0 %v3647
    %3889 = vmatprep.subr.mxu0 0.0
    %3890 = vmatpush1.msra.mxu0 %v3648
    %3891 = vmatprep.subr.mxu0 0.0
    %3892 = vmatpush1.msra.mxu0 %v3649
    %3893 = vmatprep.subr.mxu0 0.0
    %3894 = vmatpush1.msra.mxu0 %v3650
    %3895 = vmatprep.subr.mxu0 0.0
    %3896 = vmatpush1.msra.mxu0 %v3651
    %3897 = vmatprep.subr.mxu0 0.0
    %3898 = vmatpush1.msra.mxu0 %v3652
    %3899 = vmatprep.mubr.f32.mxu0 %v3596
    %3900 = vmatmul.mubr.f32.gmra.mrb[0].mxu0 %v3595
    %v3901 = vpop.f32.mrb[0].mxu0
    %v3902 = vadd.f32 %v3826, %v3901
    %v3903 = vpop.f32.mrb[0].mxu0
    %3904 = vmatprep.mubr.f32.mxu0 %v3609
    %3905 = vmatmul.mubr.f32.gmra.mrb[0].mxu0 %v3608
    %v3906 = vpop.f32.mrb[0].mxu0
    %v3907 = vadd.f32 %v3826, %v3906
    %v3908 = vpop.f32.mrb[0].mxu0
    %3909 = vdwg.mxu0
    %3910 = vmatprep.subr.mxu0 0.0
    %3911 = vmatpush1.msra.mxu0 %v3653
    %3912 = vmatprep.subr.mxu0 0.0
    %3913 = vmatpush1.msra.mxu0 %v3654
    %3914 = vmatprep.subr.mxu0 0.0
    %3915 = vmatpush1.msra.mxu0 %v3655
    %3916 = vmatprep.subr.mxu0 0.0
    %3917 = vmatpush1.msra.mxu0 %v3656
    %3918 = vmatprep.subr.mxu0 0.0
    %3919 = vmatpush1.msra.mxu0 %v3657
    %3920 = vmatprep.subr.mxu0 0.0
    %3921 = vmatpush1.msra.mxu0 %v3658
    %3922 = vmatprep.subr.mxu0 0.0
    %3923 = vmatpush1.msra.mxu0 %v3659
    %3924 = vmatprep.subr.mxu0 0.0
    %3925 = vmatpush1.msra.mxu0 %v3660
    %3926 = vmatprep.subr.mxu0 0.0
    %3927 = vmatpush1.msra.mxu0 %v3661
    %3928 = vmatprep.subr.mxu0 0.0
    %3929 = vmatpush1.msra.mxu0 %v3662
    %3930 = vmatprep.subr.mxu0 0.0
    %3931 = vmatpush1.msra.mxu0 %v3663
    %3932 = vmatprep.subr.mxu0 0.0
    %3933 = vmatpush1.msra.mxu0 %v3664
    %3934 = vmatprep.subr.mxu0 0.0
    %3935 = vmatpush1.msra.mxu0 %v3665
    %3936 = vmatprep.subr.mxu0 0.0
    %3937 = vmatpush1.msra.mxu0 %v3666
    %3938 = vmatprep.subr.mxu0 0.0
    %3939 = vmatpush1.msra.mxu0 %v3667
    %3940 = vmatprep.subr.mxu0 0.0
    %3941 = vmatpush1.msra.mxu0 %v3668
    %3942 = vmatprep.subr.mxu0 0.0
    %3943 = vmatpush1.msra.mxu0 %v3669
    %3944 = vmatprep.subr.mxu0 0.0
    %3945 = vmatpush1.msra.mxu0 %v3670
    %3946 = vmatprep.subr.mxu0 0.0
    %3947 = vmatpush1.msra.mxu0 %v3671
    %3948 = vmatprep.subr.mxu0 0.0
    %3949 = vmatpush1.msra.mxu0 %v3672
    %3950 = vmatprep.subr.mxu0 0.0
    %3951 = vmatpush1.msra.mxu0 %v3673
    %3952 = vmatprep.subr.mxu0 0.0
    %3953 = vmatpush1.msra.mxu0 %v3674
    %3954 = vmatprep.subr.mxu0 0.0
    %3955 = vmatpush1.msra.mxu0 %v3675
    %3956 = vmatprep.subr.mxu0 0.0
    %3957 = vmatpush1.msra.mxu0 %v3676
    %3958 = vmatprep.subr.mxu0 0.0
    %3959 = vmatpush1.msra.mxu0 %v3677
    %3960 = vmatprep.subr.mxu0 0.0
    %3961 = vmatpush1.msra.mxu0 %v3678
    %3962 = vmatprep.subr.mxu0 0.0
    %3963 = vmatpush1.msra.mxu0 %v3679
    %3964 = vmatprep.subr.mxu0 0.0
    %3965 = vmatpush1.msra.mxu0 %v3680
    %3966 = vmatprep.subr.mxu0 0.0
    %3967 = vmatpush1.msra.mxu0 %v3681
    %3968 = vmatprep.subr.mxu0 0.0
    %3969 = vmatpush1.msra.mxu0 %v3682
    %3970 = vmatprep.subr.mxu0 0.0
    %3971 = vmatpush1.msra.mxu0 %v3683
    %3972 = vmatprep.subr.mxu0 0.0
    %3973 = vmatpush1.msra.mxu0 %v3684
    %3974 = vmatprep.mubr.f32.mxu0 %v3598
    %3975 = vmatmul.mubr.f32.gmra.mrb[0].mxu0 %v3597
    %v3976 = vpop.f32.mrb[0].mxu0
    %v3977 = vadd.f32 %v3902, %v3976
    %v3978 = vpop.f32.mrb[0].mxu0
    %3979 = vmatprep.mubr.f32.mxu0 %v3611
    %3980 = vmatmul.mubr.f32.gmra.mrb[0].mxu0 %v3610
    %v3981 = vpop.f32.mrb[0].mxu0
    %v3982 = vadd.f32 %v3907, %v3981
    %v3983 = vpop.f32.mrb[0].mxu0
    %3984 = vdwg.mxu0
    %3985 = vmatprep.subr.mxu0 0.0
    %3986 = vmatpush1.msra.mxu0 %v3685
    %3987 = vmatprep.subr.mxu0 0.0
    %3988 = vmatpush1.msra.mxu0 %v3686
    %3989 = vmatprep.subr.mxu0 0.0
    %3990 = vmatpush1.msra.mxu0 %v3687
    %3991 = vmatprep.subr.mxu0 0.0
    %3992 = vmatpush1.msra.mxu0 %v3688
    %3993 = vmatprep.subr.mxu0 0.0
    %3994 = vmatpush1.msra.mxu0 %v3689
    %3995 = vmatprep.subr.mxu0 0.0
    %3996 = vmatpush1.msra.mxu0 %v3690
    %3997 = vmatprep.subr.mxu0 0.0
    %3998 = vmatpush1.msra.mxu0 %v3691
    %3999 = vmatprep.subr.mxu0 0.0
    %4000 = vmatpush1.msra.mxu0 %v3692
    %4001 = vmatprep.subr.mxu0 0.0
    %4002 = vmatpush1.msra.mxu0 %v3693
    %4003 = vmatprep.subr.mxu0 0.0
    %4004 = vmatpush1.msra.mxu0 %v3694
    %4005 = vmatprep.subr.mxu0 0.0
    %4006 = vmatpush1.msra.mxu0 %v3695
    %4007 = vmatprep.subr.mxu0 0.0
    %4008 = vmatpush1.msra.mxu0 %v3696
    %4009 = vmatprep.subr.mxu0 0.0
    %4010 = vmatpush1.msra.mxu0 %v3697
    %4011 = vmatprep.subr.mxu0 0.0
    %4012 = vmatpush1.msra.mxu0 %v3698
    %4013 = vmatprep.subr.mxu0 0.0
    %4014 = vmatpush1.msra.mxu0 %v3699
    %4015 = vmatprep.subr.mxu0 0.0
    %4016 = vmatpush1.msra.mxu0 %v3700
    %4017 = vmatprep.subr.mxu0 0.0
    %4018 = vmatpush1.msra.mxu0 %v3701
    %4019 = vmatprep.subr.mxu0 0.0
    %4020 = vmatpush1.msra.mxu0 %v3702
    %4021 = vmatprep.subr.mxu0 0.0
    %4022 = vmatpush1.msra.mxu0 %v3703
    %4023 = vmatprep.subr.mxu0 0.0
    %4024 = vmatpush1.msra.mxu0 %v3704
    %4025 = vmatprep.subr.mxu0 0.0
    %4026 = vmatpush1.msra.mxu0 %v3705
    %4027 = vmatprep.subr.mxu0 0.0
    %4028 = vmatpush1.msra.mxu0 %v3706
    %4029 = vmatprep.subr.mxu0 0.0
    %4030 = vmatpush1.msra.mxu0 %v3707
    %4031 = vmatprep.subr.mxu0 0.0
    %4032 = vmatpush1.msra.mxu0 %v3708
    %4033 = vmatprep.subr.mxu0 0.0
    %4034 = vmatpush1.msra.mxu0 %v3709
    %4035 = vmatprep.subr.mxu0 0.0
    %4036 = vmatpush1.msra.mxu0 %v3710
    %4037 = vmatprep.subr.mxu0 0.0
    %4038 = vmatpush1.msra.mxu0 %v3711
    %4039 = vmatprep.subr.mxu0 0.0
    %4040 = vmatpush1.msra.mxu0 %v3712
    %4041 = vmatprep.subr.mxu0 0.0
    %4042 = vmatpush1.msra.mxu0 %v3713
    %4043 = vmatprep.subr.mxu0 0.0
    %4044 = vmatpush1.msra.mxu0 %v3714
    %4045 = vmatprep.subr.mxu0 0.0
    %4046 = vmatpush1.msra.mxu0 %v3715
    %4047 = vmatprep.subr.mxu0 0.0
    %4048 = vmatpush1.msra.mxu0 %v3716
    %4049 = vmatprep.mubr.f32.mxu0 %v3600
    %4050 = vmatmul.mubr.f32.gmra.mrb[0].mxu0 %v3599
    %v4051 = vpop.f32.mrb[0].mxu0
    %v4052 = vadd.f32 %v3977, %v4051
    %v4053 = vpop.f32.mrb[0].mxu0
    %4054 = vmatprep.mubr.f32.mxu0 %v3613
    %4055 = vmatmul.mubr.f32.gmra.mrb[0].mxu0 %v3612
    %v4056 = vpop.f32.mrb[0].mxu0
    %v4057 = vadd.f32 %v3982, %v4056
    %v4058 = vpop.f32.mrb[0].mxu0
    %4059 = vdwg.mxu0
    %4060 = vmatprep.subr.mxu0 0.0
    %4061 = vmatpush1.msra.mxu0 %v3717
    %4062 = vmatprep.subr.mxu0 0.0
    %4063 = vmatpush1.msra.mxu0 %v3718
    %4064 = vmatprep.subr.mxu0 0.0
    %4065 = vmatpush1.msra.mxu0 %v3719
    %4066 = vmatprep.subr.mxu0 0.0
    %4067 = vmatpush1.msra.mxu0 %v3720
    %4068 = vmatprep.subr.mxu0 0.0
    %4069 = vmatpush1.msra.mxu0 %v3721
    %4070 = vmatprep.subr.mxu0 0.0
    %4071 = vmatpush1.msra.mxu0 %v3722
    %4072 = vmatprep.subr.mxu0 0.0
    %4073 = vmatpush1.msra.mxu0 %v3723
    %4074 = vmatprep.subr.mxu0 0.0
    %4075 = vmatpush1.msra.mxu0 %v3724
    %4076 = vmatprep.subr.mxu0 0.0
    %4077 = vmatpush1.msra.mxu0 %v3725
    %4078 = vmatprep.subr.mxu0 0.0
    %4079 = vmatpush1.msra.mxu0 %v3726
    %4080 = vmatprep.subr.mxu0 0.0
    %4081 = vmatpush1.msra.mxu0 %v3727
    %4082 = vmatprep.subr.mxu0 0.0
    %4083 = vmatpush1.msra.mxu0 %v3728
    %4084 = vmatprep.subr.mxu0 0.0
    %4085 = vmatpush1.msra.mxu0 %v3729
    %4086 = vmatprep.subr.mxu0 0.0
    %4087 = vmatpush1.msra.mxu0 %v3730
    %4088 = vmatprep.subr.mxu0 0.0
    %4089 = vmatpush1.msra.mxu0 %v3731
    %4090 = vmatprep.subr.mxu0 0.0
    %4091 = vmatpush1.msra.mxu0 %v3732
    %4092 = vmatprep.subr.mxu0 0.0
    %4093 = vmatpush1.msra.mxu0 %v3733
    %4094 = vmatprep.subr.mxu0 0.0
    %4095 = vmatpush1.msra.mxu0 %v3734
    %4096 = vmatprep.subr.mxu0 0.0
    %4097 = vmatpush1.msra.mxu0 %v3735
    %4098 = vmatprep.subr.mxu0 0.0
    %4099 = vmatpush1.msra.mxu0 %v3736
    %4100 = vmatprep.subr.mxu0 0.0
    %4101 = vmatpush1.msra.mxu0 %v3737
    %4102 = vmatprep.subr.mxu0 0.0
    %4103 = vmatpush1.msra.mxu0 %v3738
    %4104 = vmatprep.subr.mxu0 0.0
    %4105 = vmatpush1.msra.mxu0 %v3739
    %4106 = vmatprep.subr.mxu0 0.0
    %4107 = vmatpush1.msra.mxu0 %v3740
    %4108 = vmatprep.subr.mxu0 0.0
    %4109 = vmatpush1.msra.mxu0 %v3741
    %4110 = vmatprep.subr.mxu0 0.0
    %4111 = vmatpush1.msra.mxu0 %v3742
    %4112 = vmatprep.subr.mxu0 0.0
    %4113 = vmatpush1.msra.mxu0 %v3743
    %4114 = vmatprep.subr.mxu0 0.0
    %4115 = vmatpush1.msra.mxu0 %v3744
    %4116 = vmatprep.subr.mxu0 0.0
    %4117 = vmatpush1.msra.mxu0 %v3745
    %4118 = vmatprep.subr.mxu0 0.0
    %4119 = vmatpush1.msra.mxu0 %v3746
    %4120 = vmatprep.subr.mxu0 0.0
    %4121 = vmatpush1.msra.mxu0 %v3747
    %4122 = vmatprep.subr.mxu0 0.0
    %4123 = vmatpush1.msra.mxu0 %v3748
    %4124 = vmatprep.mubr.f32.mxu0 %v3602
    %4125 = vmatmul.mubr.f32.gmra.mrb[0].mxu0 %v3601
    %v4126 = vpop.f32.mrb[0].mxu0
    %v4127 = vadd.f32 %v4052, %v4126
    %v4128 = vpop.f32.mrb[0].mxu0
    %4129 = vmatprep.mubr.f32.mxu0 %v3615
    %4130 = vmatmul.mubr.f32.gmra.mrb[0].mxu0 %v3614
    %v4131 = vpop.f32.mrb[0].mxu0
    %v4132 = vadd.f32 %v4057, %v4131
    %v4133 = vpop.f32.mrb[0].mxu0
    %4134 = vdwg.mxu0
    %4135 = vmatprep.subr.mxu0 0.0
    %4136 = vmatpush1.msra.mxu0 %v3749
    %4137 = vmatprep.subr.mxu0 0.0
    %4138 = vmatpush1.msra.mxu0 %v3750
    %4139 = vmatprep.subr.mxu0 0.0
    %4140 = vmatpush1.msra.mxu0 %v3751
    %4141 = vmatprep.subr.mxu0 0.0
    %4142 = vmatpush1.msra.mxu0 %v3752
    %4143 = vmatprep.subr.mxu0 0.0
    %4144 = vmatpush1.msra.mxu0 %v3753
    %4145 = vmatprep.subr.mxu0 0.0
    %4146 = vmatpush1.msra.mxu0 %v3754
    %4147 = vmatprep.subr.mxu0 0.0
    %4148 = vmatpush1.msra.mxu0 %v3755
    %4149 = vmatprep.subr.mxu0 0.0
    %4150 = vmatpush1.msra.mxu0 %v3756
    %4151 = vmatprep.subr.mxu0 0.0
    %4152 = vmatpush1.msra.mxu0 %v3757
    %4153 = vmatprep.subr.mxu0 0.0
    %4154 = vmatpush1.msra.mxu0 %v3758
    %4155 = vmatprep.subr.mxu0 0.0
    %4156 = vmatpush1.msra.mxu0 %v3759
    %4157 = vmatprep.subr.mxu0 0.0
    %4158 = vmatpush1.msra.mxu0 %v3760
    %4159 = vmatprep.subr.mxu0 0.0
    %4160 = vmatpush1.msra.mxu0 %v3761
    %4161 = vmatprep.subr.mxu0 0.0
    %4162 = vmatpush1.msra.mxu0 %v3762
    %4163 = vmatprep.subr.mxu0 0.0
    %4164 = vmatpush1.msra.mxu0 %v3763
    %4165 = vmatprep.subr.mxu0 0.0
    %4166 = vmatpush1.msra.mxu0 %v3764
    %4167 = vmatprep.subr.mxu0 0.0
    %4168 = vmatpush1.msra.mxu0 %v3765
    %4169 = vmatprep.subr.mxu0 0.0
    %4170 = vmatpush1.msra.mxu0 %v3766
    %4171 = vmatprep.subr.mxu0 0.0
    %4172 = vmatpush1.msra.mxu0 %v3767
    %4173 = vmatprep.subr.mxu0 0.0
    %4174 = vmatpush1.msra.mxu0 %v3768
    %4175 = vmatprep.subr.mxu0 0.0
    %4176 = vmatpush1.msra.mxu0 %v3769
    %4177 = vmatprep.subr.mxu0 0.0
    %4178 = vmatpush1.msra.mxu0 %v3770
    %4179 = vmatprep.subr.mxu0 0.0
    %4180 = vmatpush1.msra.mxu0 %v3771
    %4181 = vmatprep.subr.mxu0 0.0
    %4182 = vmatpush1.msra.mxu0 %v3772
    %4183 = vmatprep.subr.mxu0 0.0
    %4184 = vmatpush1.msra.mxu0 %v3773
    %4185 = vmatprep.subr.mxu0 0.0
    %4186 = vmatpush1.msra.mxu0 %v3774
    %4187 = vmatprep.subr.mxu0 0.0
    %4188 = vmatpush1.msra.mxu0 %v3775
    %4189 = vmatprep.subr.mxu0 0.0
    %4190 = vmatpush1.msra.mxu0 %v3776
    %4191 = vmatprep.subr.mxu0 0.0
    %4192 = vmatpush1.msra.mxu0 %v3777
    %4193 = vmatprep.subr.mxu0 0.0
    %4194 = vmatpush1.msra.mxu0 %v3778
    %4195 = vmatprep.subr.mxu0 0.0
    %4196 = vmatpush1.msra.mxu0 %v3779
    %4197 = vmatprep.subr.mxu0 0.0
    %4198 = vmatpush1.msra.mxu0 %v3780
    %4199 = vmatprep.mubr.f32.mxu0 %v3604
    %4200 = vmatmul.mubr.f32.gmra.mrb[0].mxu0 %v3603
    %v4201 = vpop.f32.mrb[0].mxu0
    %v4202 = vadd.f32 %v4127, %v4201
    %v4203 = vpop.f32.mrb[0].mxu0
    %4204 = vmatprep.mubr.f32.mxu0 %v3617
    %4205 = vmatmul.mubr.f32.gmra.mrb[0].mxu0 %v3616
    %v4206 = vpop.f32.mrb[0].mxu0
    %v4207 = vadd.f32 %v4132, %v4206
    %v4208 = vpop.f32.mrb[0].mxu0
    %4209 = vdwg.mxu0
    %4210 = vmatprep.subr.mxu0 0.0
    %4211 = vmatpush1.msra.mxu0 %v3781
    %4212 = vmatprep.subr.mxu0 0.0
    %4213 = vmatpush1.msra.mxu0 %v3782
    %4214 = vmatprep.subr.mxu0 0.0
    %4215 = vmatpush1.msra.mxu0 %v3783
    %4216 = vmatprep.subr.mxu0 0.0
    %4217 = vmatpush1.msra.mxu0 %v3784
    %4218 = vmatprep.subr.mxu0 0.0
    %4219 = vmatpush1.msra.mxu0 %v3785
    %4220 = vmatprep.subr.mxu0 0.0
    %4221 = vmatpush1.msra.mxu0 %v3786
    %4222 = vmatprep.subr.mxu0 0.0
    %4223 = vmatpush1.msra.mxu0 %v3787
    %4224 = vmatprep.subr.mxu0 0.0
    %4225 = vmatpush1.msra.mxu0 %v3788
    %4226 = vmatprep.subr.mxu0 0.0
    %4227 = vmatpush1.msra.mxu0 %v3789
    %4228 = vmatprep.subr.mxu0 0.0
    %4229 = vmatpush1.msra.mxu0 %v3790
    %4230 = vmatprep.subr.mxu0 0.0
    %4231 = vmatpush1.msra.mxu0 %v3791
    %4232 = vmatprep.subr.mxu0 0.0
    %4233 = vmatpush1.msra.mxu0 %v3792
    %4234 = vmatprep.subr.mxu0 0.0
    %4235 = vmatpush1.msra.mxu0 %v3793
    %4236 = vmatprep.subr.mxu0 0.0
    %4237 = vmatpush1.msra.mxu0 %v3794
    %4238 = vmatprep.subr.mxu0 0.0
    %4239 = vmatpush1.msra.mxu0 %v3795
    %4240 = vmatprep.subr.mxu0 0.0
    %4241 = vmatpush1.msra.mxu0 %v3796
    %4242 = vmatprep.subr.mxu0 0.0
    %4243 = vmatpush1.msra.mxu0 %v3797
    %4244 = vmatprep.subr.mxu0 0.0
    %4245 = vmatpush1.msra.mxu0 %v3798
    %4246 = vmatprep.subr.mxu0 0.0
    %4247 = vmatpush1.msra.mxu0 %v3799
    %4248 = vmatprep.subr.mxu0 0.0
    %4249 = vmatpush1.msra.mxu0 %v3800
    %4250 = vmatprep.subr.mxu0 0.0
    %4251 = vmatpush1.msra.mxu0 %v3801
    %4252 = vmatprep.subr.mxu0 0.0
    %4253 = vmatpush1.msra.mxu0 %v3802
    %4254 = vmatprep.subr.mxu0 0.0
    %4255 = vmatpush1.msra.mxu0 %v3803
    %4256 = vmatprep.subr.mxu0 0.0
    %4257 = vmatpush1.msra.mxu0 %v3804
    %4258 = vmatprep.subr.mxu0 0.0
    %4259 = vmatpush1.msra.mxu0 %v3805
    %4260 = vmatprep.subr.mxu0 0.0
    %4261 = vmatpush1.msra.mxu0 %v3806
    %4262 = vmatprep.subr.mxu0 0.0
    %4263 = vmatpush1.msra.mxu0 %v3807
    %4264 = vmatprep.subr.mxu0 0.0
    %4265 = vmatpush1.msra.mxu0 %v3808
    %4266 = vmatprep.subr.mxu0 0.0
    %4267 = vmatpush1.msra.mxu0 %v3809
    %4268 = vmatprep.subr.mxu0 0.0
    %4269 = vmatpush1.msra.mxu0 %v3810
    %4270 = vmatprep.subr.mxu0 0.0
    %4271 = vmatpush1.msra.mxu0 %v3811
    %4272 = vmatprep.subr.mxu0 0.0
    %4273 = vmatpush1.msra.mxu0 %v3812
    %4274 = vmatprep.mubr.f32.mxu0 %v3606
    %4275 = vmatmul.mubr.f32.gmra.mrb[0].mxu0 %v3605
    %v4276 = vpop.f32.mrb[0].mxu0
    %v4277 = vadd.f32 %v4202, %v4276
    %v4278 = vpop.f32.mrb[0].mxu0
    %4279 = vmatprep.mubr.f32.mxu0 %v3619
    %4280 = vmatmul.mubr.f32.gmra.mrb[0].mxu0 %v3618
    %v4281 = vpop.f32.mrb[0].mxu0
    %v4282 = vadd.f32 %v4207, %v4281
    %v4283 = vpop.f32.mrb[0].mxu0
    %4284 = vdwg.mxu0
    %4285 = vmatprep.subr.mxu0 0.0
    %4286 = vmatpush1.msra.mxu0 %v3813
    %4287 = vmatprep.subr.mxu0 0.0
    %4288 = vmatpush1.msra.mxu0 %v3814
    %4289 = vmatprep.subr.mxu0 0.0
    %4290 = vmatpush1.msra.mxu0 %v3815
    %4291 = vmatprep.subr.mxu0 0.0
    %4292 = vmatpush1.msra.mxu0 %v3816
    %4293 = vmatprep.subr.mxu0 0.0
    %4294 = vmatpush1.msra.mxu0 %v3817
    %4295 = vmatprep.subr.mxu0 0.0
    %4296 = vmatpush1.msra.mxu0 %v3818
    %4297 = vmatprep.subr.mxu0 0.0
    %4298 = vmatpush1.msra.mxu0 %v3819
    %4299 = vmatprep.subr.mxu0 0.0
    %4300 = vmatpush1.msra.mxu0 %v3820
    %4301 = vmatprep.subr.mxu0 0.0
    %4302 = vmatpush1.msra.mxu0 0.0
    %4303 = vmatprep.subr.mxu0 0.0
    %4304 = vmatpush1.msra.mxu0 0.0
    %4305 = vmatprep.subr.mxu0 0.0
    %4306 = vmatpush1.msra.mxu0 0.0
    %4307 = vmatprep.subr.mxu0 0.0
    %4308 = vmatpush1.msra.mxu0 0.0
    %4309 = vmatprep.subr.mxu0 0.0
    %4310 = vmatpush1.msra.mxu0 0.0
    %4311 = vmatprep.subr.mxu0 0.0
    %4312 = vmatpush1.msra.mxu0 0.0
    %4313 = vmatprep.subr.mxu0 0.0
    %4314 = vmatpush1.msra.mxu0 0.0
    %4315 = vmatprep.subr.mxu0 0.0
    %4316 = vmatpush1.msra.mxu0 0.0
    %4317 = vmatprep.subr.mxu0 0.0
    %4318 = vmatpush1.msra.mxu0 0.0
    %4319 = vmatprep.subr.mxu0 0.0
    %4320 = vmatpush1.msra.mxu0 0.0
    %4321 = vmatprep.subr.mxu0 0.0
    %4322 = vmatpush1.msra.mxu0 0.0
    %4323 = vmatprep.subr.mxu0 0.0
    %4324 = vmatpush1.msra.mxu0 0.0
    %4325 = vmatprep.subr.mxu0 0.0
    %4326 = vmatpush1.msra.mxu0 0.0
    %4327 = vmatprep.subr.mxu0 0.0
    %4328 = vmatpush1.msra.mxu0 0.0
    %4329 = vmatprep.subr.mxu0 0.0
    %4330 = vmatpush1.msra.mxu0 0.0
    %4331 = vmatprep.subr.mxu0 0.0
    %4332 = vmatpush1.msra.mxu0 0.0
    %4333 = vmatprep.subr.mxu0 0.0
    %4334 = vmatpush1.msra.mxu0 0.0
    %4335 = vmatprep.subr.mxu0 0.0
    %4336 = vmatpush1.msra.mxu0 0.0
    %4337 = vmatprep.subr.mxu0 0.0
    %4338 = vmatpush1.msra.mxu0 0.0
    %4339 = vmatprep.subr.mxu0 0.0
    %4340 = vmatpush1.msra.mxu0 0.0
    %4341 = vmatprep.subr.mxu0 0.0
    %4342 = vmatpush1.msra.mxu0 0.0
    %4343 = vmatprep.subr.mxu0 0.0
    %4344 = vmatpush1.msra.mxu0 0.0
    %4345 = vmatprep.subr.mxu0 0.0
    %4346 = vmatpush1.msra.mxu0 0.0
    %4347 = vmatprep.subr.mxu0 0.0
    %4348 = vmatpush1.msra.mxu0 0.0
    %4349 = vmatprep.mubr.f32.mxu0 0.0
    %4350 = vmatmul.mubr.f32.gmra.mrb[0].mxu0 %v3830
    %v4351 = vpop.f32.mrb[0].mxu0
    %v4352 = vadd.f32 %v4277, %v4351
    %v4353 = vpop.f32.mrb[0].mxu0
    %4354 = vmatprep.mubr.f32.mxu0 0.0
    %4355 = vmatmul.mubr.f32.gmra.mrb[0].mxu0 %v3833
    %v4356 = vpop.f32.mrb[0].mxu0
    %v4357 = vadd.f32 %v4282, %v4356
    %v4358 = vpop.f32.mrb[0].mxu0
    %4359 = vdwg.mxu0
    %v4360 = vmax.f32 %v4352, 0.0
    %v4361 = vmax.f32 %v4357, 0.0
    %4362 = vst.msk [vmem:[%s5] sm:$0xff] %vm1440, %v4360
    %4363 = vst.msk [vmem:[%s5 + $0x8] sm:$0xff] %vm1440, %v4361
    // Predicated region
    $region34: #{r2ncnn_forward.1} parent=1 // pred_check
      _
    $region35: #{r2ncnn_forward.1} parent=1 // pred_check_branch
      %4365 = sbr.rel (0) target = $region37
    $region36: #{r2ncnn_forward.1} parent=1 // pred_region
      _
    $region37: #{r2ncnn_forward.1} parent=1 // pred_fallthru
      _
    // Predicated region
    $region38: #{r2ncnn_forward.1} parent=1 // pred_check
      _
    $region39: #{r2ncnn_forward.1} parent=1 // pred_check_branch
      %4367 = sbr.rel (0) target = $region41
    $region40: #{r2ncnn_forward.1} parent=1 // pred_region
      _
    $region41: #{r2ncnn_forward.1} parent=1 // pred_fallthru
      _
    %4368 = vsyncpa [#allocation3], 1
    %4369 = vsyncpa [#allocation5], 1

</llo_original>
